<compile_context>
chip_gen: v7x
topology: tpu7x:2x2x1
jax: 0.10.0
libtpu: 0.0.40
codegen_flags: <defaults>
</compile_context>

<pallas_src>
import jax
import jax.numpy as jnp
from jax.experimental import pallas as pl
from jax.experimental.pallas import tpu as pltpu

HIDDEN = 32        # DCRNN(node_features, 32, 5)
K_DIFFUSION = 5


def _rgcn_kernel(x_ref, t_ref, wg_ref, bg_ref, wl_ref, bl_ref, out_ref):
    # x_ref : (Gb, nn, F)       f32   per-graph node features
    # t_ref : (2, Gb, nn, nn)   bf16  [0]=forward diffusion op, [1]=reverse
    # wg_ref: (2K-1, F, 2H)     bf16  per-term gate weights ([..., :H]=Z, [..., H:]=H~)
    # bg_ref: (1, 2H)           f32
    # wl_ref: (H, c_pad)        bf16  lane-padded classifier weight
    # bl_ref: (1, c_pad)        f32
    # out   : (Gb, c_pad)       f32
    gb, nn_, f = x_ref.shape
    m = gb * nn_

    X = x_ref[...]                                    # (Gb, nn, F) f32
    X_bf = X.astype(jnp.bfloat16)                     # hoisted: cast once
    T = t_ref[...].reshape(2 * gb, nn_, nn_)          # (2Gb, nn, nn) bf16, direction-major
    X2 = jnp.concatenate([X, X], axis=0)              # (2Gb, nn, F) f32 two-back Cheb term

    # k = 0: with H0 == 0 the DConv input reduces to X and Tx_0 is shared by both
    # directions; both k=0 weights were pre-summed into wg_ref[0] by the glue.
    gates = jnp.dot(X_bf.reshape(m, f), wg_ref[0],
                    preferred_element_type=jnp.float32)          # (M, 2H) f32

    # Shared Chebyshev hop recursion; forward/reverse fused into one batched
    # matmul per hop, state kept in bf16 (single cast per hop after f32 combine).
    S = jnp.concatenate([X_bf, X_bf], axis=0)         # (2Gb, nn, F) bf16 == Tx_0
    for k in range(1, K_DIFFUSION):
        TS = jnp.einsum('bij,bjf->bif', T, S,
                        preferred_element_type=jnp.float32)
        if k == 1:
            S = TS.astype(jnp.bfloat16)               # Tx_1 = T @ X
        else:
            # torch_geometric_temporal DConv quirk: the "two-back" Chebyshev term
            # stays pinned to the input X (Tx_0/Tx_1 are never rebound upstream).
            S = (2.0 * TS - X2).astype(jnp.bfloat16)
        # Per-term gate contributions accumulate straight into the f32 gates tile
        # (no lane-axis concatenation / XLU shuffles).
        gates = (gates
                 + jnp.dot(S[:gb].reshape(m, f), wg_ref[2 * k - 1],
                           preferred_element_type=jnp.float32)
                 + jnp.dot(S[gb:].reshape(m, f), wg_ref[2 * k],
                           preferred_element_type=jnp.float32))

    gates = gates + bg_ref[...]
    Z = jax.nn.sigmoid(gates[:, :HIDDEN])             # update gate
    H_tilde = jnp.tanh(gates[:, HIDDEN:])             # candidate state
    # H0 == 0  =>  H_new = Z*H0 + (1-Z)*H_tilde = (1-Z)*H_tilde; the reset gate
    # only appears through H0*R == 0 and is dropped entirely.  Then F.relu.
    h = jnp.maximum((1.0 - Z) * H_tilde, 0.0)         # (M, H)

    # global_mean_pool then Linear (affine map commutes with the row mean);
    # pooled + Linear are batched over the Gb graphs of this grid step and the
    # result is stored as a lane- and sublane-dense (Gb, c_pad) slab.
    pooled = jnp.mean(h.reshape(gb, nn_, HIDDEN), axis=1)        # (Gb, H)
    out_ref[...] = (jnp.dot(pooled.astype(jnp.bfloat16), wl_ref[...],
                            preferred_element_type=jnp.float32) + bl_ref[...])


def _choose_graphs_per_step(num_graphs, nn_, f):
    # Dominant per-graph VMEM cost: double-buffered bf16 operators + f32 features.
    per_graph = 2 * (2 * nn_ * nn_ * 2 + nn_ * f * 4)
    cap = max(1, (24 << 20) // max(per_graph, 1))      # conservative for v7x 64 MiB VMEM
    divisors = [d for d in range(1, num_graphs + 1)
                if num_graphs % d == 0 and d <= cap]

    def enough_steps(d):   # keep >= 2 grid steps so v7x's two TensorCores both get work
        return num_graphs // d >= 2 or num_graphs < 2

    for pred in (lambda d: d % 8 == 0 and enough_steps(d),   # sublane-full output block
                 lambda d: d % 8 == 0,
                 enough_steps,
                 lambda d: True):
        sel = [d for d in divisors if pred(d)]
        if sel:
            return max(sel)
    return 1


def recurrent_gcn_classification(x, edge_index, edge_weight, batch, params, num_graphs):
    # TODO(synk): assumes the module's documented batch layout — equal-sized,
    # contiguous graphs (batch == repeat(arange(G), num_nodes)) with a
    # block-diagonal edge_index; `batch` is therefore not consulted directly.
    x = x.astype(jnp.float32)
    n, f = x.shape
    nn_ = n // num_graphs
    num_classes = params["w_lin"].shape[1]
    c_pad = ((num_classes + 127) // 128) * 128               # lane-dense output slab

    # ---- glue: per-graph dense diffusion operators, O(G*nn^2) not O(N^2) ----
    src, dst = edge_index[0], edge_index[1]
    gid = src // nn_
    A = jnp.zeros((num_graphs, nn_, nn_), jnp.float32).at[
        gid, src % nn_, dst % nn_].add(edge_weight.astype(jnp.float32))
    deg_out = A.sum(axis=2)                                  # weighted out-degree
    deg_in = A.sum(axis=1)                                   # weighted in-degree
    inv_out = jnp.where(deg_out > 0, 1.0 / deg_out, 0.0)     # guard isolated nodes
    inv_in = jnp.where(deg_in > 0, 1.0 / deg_in, 0.0)
    mask = (A != 0).astype(jnp.float32)
    # Messages are degree-normalized (edge weights enter only through degrees).
    # TODO(synk): the upstream reverse-direction norm gather reuses the *forward*
    # edge ordering (a dense_to_sparse indexing quirk); we use the intended
    # per-source in-degree normalization instead.
    T_o = jnp.swapaxes(mask, 1, 2) * inv_out[:, None, :]
    T_i = mask * inv_in[:, None, :]
    T = jnp.stack([T_o, T_i], axis=0).astype(jnp.bfloat16)   # (2, G, nn, nn)

    # ---- glue: pack DConv gate weights term-major (only the first F rows matter:
    # H0 == 0), so the kernel accumulates per-term matmuls without any lane concat.
    def pack_terms(w):
        Kd = K_DIFFUSION
        terms = [w[0, :f] + w[Kd, :f]]                 # X carries both k=0 weights
        for k in range(1, Kd):
            terms += [w[k, :f], w[Kd + k, :f]]         # forward / reverse hop-k weights
        return jnp.stack(terms, axis=0)                # (2K-1, F, HIDDEN)

    w_gate = jnp.concatenate([pack_terms(params["w_z"]), pack_terms(params["w_h"])],
                             axis=2).astype(jnp.bfloat16)            # (2K-1, F, 2H)
    b_gate = jnp.concatenate([params["b_z"], params["b_h"]], axis=1).astype(jnp.float32)
    w_lin = jnp.zeros((HIDDEN, c_pad), jnp.float32).at[:, :num_classes].set(
        params["w_lin"].astype(jnp.float32)).astype(jnp.bfloat16)
    b_lin = jnp.zeros((1, c_pad), jnp.float32).at[:, :num_classes].set(
        params["b_lin"].astype(jnp.float32))

    x_g = x.reshape(num_graphs, nn_, f)
    n_terms = 2 * K_DIFFUSION - 1

    gb = _choose_graphs_per_step(num_graphs, nn_, f)
    grid = num_graphs // gb

    # VMEM budget: double-buffered blocks + in-kernel intermediates, clamped below
    # the physical VMEM of the current generation (v5e/v6e 128 MiB, v7x 64 MiB).
    blk = (gb * nn_ * f * 4 + 2 * gb * nn_ * nn_ * 2
           + n_terms * f * 2 * HIDDEN * 2 + 2 * HIDDEN * 4
           + HIDDEN * c_pad * 2 + c_pad * 4 + gb * c_pad * 4)
    scratch = (2 * gb * nn_ * nn_ * 2
               + 2 * gb * nn_ * f * 12
               + gb * nn_ * (2 * HIDDEN + HIDDEN) * 4
               + gb * (HIDDEN + c_pad) * 4)
    try:
        phys = int(pltpu.get_tpu_info().vmem_capacity_bytes)
    except Exception:
        phys = 64 * 1024 * 1024
    vmem_limit = int(min(max(2 * blk + scratch + (8 << 20), 32 << 20), int(phys * 0.7)))

    out = pl.pallas_call(
        _rgcn_kernel,
        out_shape=jax.ShapeDtypeStruct((num_graphs, c_pad), jnp.float32),
        grid=(grid,),
        in_specs=[
            pl.BlockSpec((gb, nn_, f), lambda s: (s, 0, 0)),              # x (Gb graphs)
            pl.BlockSpec((2, gb, nn_, nn_), lambda s: (0, s, 0, 0)),      # diffusion ops
            pl.BlockSpec((n_terms, f, 2 * HIDDEN), lambda s: (0, 0, 0)),  # gate W (bf16)
            pl.BlockSpec((1, 2 * HIDDEN), lambda s: (0, 0)),              # gate b
            pl.BlockSpec((HIDDEN, c_pad), lambda s: (0, 0)),              # linear W (bf16)
            pl.BlockSpec((1, c_pad), lambda s: (0, 0)),                   # linear b
        ],
        out_specs=pl.BlockSpec((gb, c_pad), lambda s: (s, 0)),
        compiler_params=pltpu.CompilerParams(
            dimension_semantics=("parallel",),
            vmem_limit_bytes=vmem_limit),
    )(x_g, T, w_gate, b_gate, w_lin, b_lin)
    return out[:, :num_classes]


def init_params(key, node_features, num_classes):
    fin = node_features + HIDDEN
    keys = jax.random.split(key, 5)

    def glorot(k, shape):
        fan_in, fan_out = shape[-2], shape[-1]
        lim = (6.0 / (fan_in + fan_out)) ** 0.5
        return jax.random.uniform(k, shape, jnp.float32, -lim, lim)

    return {
        # DConv weights have torch shape (2, K, fin, 32); stored here as (2K, fin, 32).
        "w_z": glorot(keys[0], (2 * K_DIFFUSION, fin, HIDDEN)),
        "w_r": glorot(keys[1], (2 * K_DIFFUSION, fin, HIDDEN)),   # dead when H0 is None
        "w_h": glorot(keys[2], (2 * K_DIFFUSION, fin, HIDDEN)),
        "b_z": jnp.zeros((1, HIDDEN), jnp.float32),
        "b_r": jnp.zeros((1, HIDDEN), jnp.float32),
        "b_h": jnp.zeros((1, HIDDEN), jnp.float32),
        "w_lin": glorot(keys[3], (HIDDEN, num_classes)),
        "b_lin": jax.random.uniform(keys[4], (1, num_classes), jnp.float32, -0.1, 0.1),
    }


if __name__ == "__main__":
    key = jax.random.PRNGKey(0)
    batch_size, num_nodes = 16, 8          # 16 graphs -> Gb=8 per step, 2 grid steps
    node_features, num_classes = 8, 4
    n_total = batch_size * num_nodes

    k_x, k_w, k_p = jax.random.split(key, 3)
    x = jax.random.normal(k_x, (n_total, node_features), jnp.float32)

    # Bidirectional ring inside each graph -> every node has nonzero in/out degree.
    src, dst = [], []
    for g in range(batch_size):
        off = g * num_nodes
        for i in range(num_nodes):
            j = (i + 1) % num_nodes
            src += [off + i, off + j]
            dst += [off + j, off + i]
    edge_index = jnp.array([src, dst], jnp.int32)          # (2, E)
    edge_weight = jax.random.uniform(k_w, (edge_index.shape[1],), jnp.float32, 0.5, 1.5)
    batch = jnp.repeat(jnp.arange(batch_size, dtype=jnp.int32), num_nodes)

    params = init_params(k_p, node_features, num_classes)
    out = recurrent_gcn_classification(x, edge_index, edge_weight, batch, params,
                                       num_graphs=batch_size)
    jax.block_until_ready(out)
    assert out.shape == (batch_size, num_classes)
    assert bool(jnp.all(jnp.isfinite(out)))
    print("KERNEL_OK")
</pallas_src>

<mosaic_0001>
module attributes {stable_mosaic.version = 11 : i64} {
  func.func @_rgcn_kernel(%arg0: i32, %arg1: memref<8x8x8xf32, #tpu.memory_space<vmem>>, %arg2: memref<2x8x8x8xbf16, #tpu.memory_space<vmem>>, %arg3: memref<9x8x64xbf16, #tpu.memory_space<vmem>>, %arg4: memref<1x64xf32, #tpu.memory_space<vmem>>, %arg5: memref<32x128xbf16, #tpu.memory_space<vmem>>, %arg6: memref<1x128xf32, #tpu.memory_space<vmem>>, %arg7: memref<8x128xf32, #tpu.memory_space<vmem>>) attributes {dimension_semantics = [#tpu.dimension_semantics<parallel>], iteration_bounds = array<i64: 2>, scalar_prefetch = 0 : i64, scratch_operands = 0 : i64, tpu.core_type = #tpu.core_type<tc>, window_params = [{transform_indices = @transform_0, window_bounds = array<i64: 8, 8, 8>}, {transform_indices = @transform_1, window_bounds = array<i64: 2, 8, 8, 8>}, {pipeline_mode = #tpu.pipeline_mode<synchronous>, transform_indices = @transform_2, window_bounds = array<i64: 9, 8, 64>}, {pipeline_mode = #tpu.pipeline_mode<synchronous>, transform_indices = @transform_3, window_bounds = array<i64: 1, 64>}, {pipeline_mode = #tpu.pipeline_mode<synchronous>, transform_indices = @transform_4, window_bounds = array<i64: 32, 128>}, {pipeline_mode = #tpu.pipeline_mode<synchronous>, transform_indices = @transform_5, window_bounds = array<i64: 1, 128>}, {transform_indices = @transform_6, window_bounds = array<i64: 8, 128>}]} {
    %c0 = arith.constant 0 : index
    %c0_0 = arith.constant 0 : index
    %c0_1 = arith.constant 0 : index
    %0 = vector.load %arg1[%c0, %c0_0, %c0_1] : memref<8x8x8xf32, #tpu.memory_space<vmem>>, vector<8x8x8xf32>
    %1 = arith.truncf %0 : vector<8x8x8xf32> to vector<8x8x8xbf16>
    %c0_2 = arith.constant 0 : index
    %c0_3 = arith.constant 0 : index
    %c0_4 = arith.constant 0 : index
    %c0_5 = arith.constant 0 : index
    %2 = vector.load %arg2[%c0_2, %c0_3, %c0_4, %c0_5] : memref<2x8x8x8xbf16, #tpu.memory_space<vmem>>, vector<2x8x8x8xbf16>
    %3 = vector.shape_cast %2 : vector<2x8x8x8xbf16> to vector<16x8x8xbf16>
    %4 = tpu.concatenate %0, %0 in 0 : vector<8x8x8xf32>, vector<8x8x8xf32> -> vector<16x8x8xf32>
    %5 = vector.shape_cast %1 : vector<8x8x8xbf16> to vector<64x8xbf16>
    %c0_6 = arith.constant 0 : index
    %c0_7 = arith.constant 0 : index
    %c0_8 = arith.constant 0 : index
    %6 = vector.load %arg3[%c0_6, %c0_7, %c0_8] : memref<9x8x64xbf16, #tpu.memory_space<vmem>>, vector<1x8x64xbf16>
    %7 = vector.shape_cast %6 : vector<1x8x64xbf16> to vector<8x64xbf16>
    %cst = arith.constant dense<0.000000e+00> : vector<64x64xf32>
    %8 = tpu.matmul %5, %7, %cst {dimension_numbers = #tpu.dot_dimension_numbers<[1], [0], [0], [1], [0, 0, 1, 1], [], []>} : vector<64x8xbf16>, vector<8x64xbf16>, vector<64x64xf32> -> vector<64x64xf32>
    %9 = tpu.concatenate %1, %1 in 0 : vector<8x8x8xbf16>, vector<8x8x8xbf16> -> vector<16x8x8xbf16>
    "tpu.trace_start"() <{level = 10 : i32, message = "bij,bjf->bif"}> : () -> ()
    %cst_9 = arith.constant dense<0.000000e+00> : vector<16x8x8xf32>
    %10 = tpu.matmul %3, %9, %cst_9 {dimension_numbers = #tpu.dot_dimension_numbers<[2], [1], [1], [2], [0, 0, 0, 1, 1, 2], [0], [0]>} : vector<16x8x8xbf16>, vector<16x8x8xbf16>, vector<16x8x8xf32> -> vector<16x8x8xf32>
    "tpu.trace_stop"() : () -> ()
    %11 = arith.truncf %10 : vector<16x8x8xf32> to vector<16x8x8xbf16>
    %12 = vector.extract_strided_slice %11 {offsets = [0, 0, 0], sizes = [8, 8, 8], strides = [1, 1, 1]} : vector<16x8x8xbf16> to vector<8x8x8xbf16>
    %13 = vector.shape_cast %12 : vector<8x8x8xbf16> to vector<64x8xbf16>
    %c1 = arith.constant 1 : index
    %c0_10 = arith.constant 0 : index
    %c0_11 = arith.constant 0 : index
    %14 = vector.load %arg3[%c1, %c0_10, %c0_11] : memref<9x8x64xbf16, #tpu.memory_space<vmem>>, vector<1x8x64xbf16>
    %15 = vector.shape_cast %14 : vector<1x8x64xbf16> to vector<8x64xbf16>
    %cst_12 = arith.constant dense<0.000000e+00> : vector<64x64xf32>
    %16 = tpu.matmul %13, %15, %cst_12 {dimension_numbers = #tpu.dot_dimension_numbers<[1], [0], [0], [1], [0, 0, 1, 1], [], []>} : vector<64x8xbf16>, vector<8x64xbf16>, vector<64x64xf32> -> vector<64x64xf32>
    %17 = arith.addf %8, %16 : vector<64x64xf32>
    %18 = vector.extract_strided_slice %11 {offsets = [8, 0, 0], sizes = [8, 8, 8], strides = [1, 1, 1]} : vector<16x8x8xbf16> to vector<8x8x8xbf16>
    %19 = vector.shape_cast %18 : vector<8x8x8xbf16> to vector<64x8xbf16>
    %c2 = arith.constant 2 : index
    %c0_13 = arith.constant 0 : index
    %c0_14 = arith.constant 0 : index
    %20 = vector.load %arg3[%c2, %c0_13, %c0_14] : memref<9x8x64xbf16, #tpu.memory_space<vmem>>, vector<1x8x64xbf16>
    %21 = vector.shape_cast %20 : vector<1x8x64xbf16> to vector<8x64xbf16>
    %cst_15 = arith.constant dense<0.000000e+00> : vector<64x64xf32>
    %22 = tpu.matmul %19, %21, %cst_15 {dimension_numbers = #tpu.dot_dimension_numbers<[1], [0], [0], [1], [0, 0, 1, 1], [], []>} : vector<64x8xbf16>, vector<8x64xbf16>, vector<64x64xf32> -> vector<64x64xf32>
    %23 = arith.addf %17, %22 : vector<64x64xf32>
    "tpu.trace_start"() <{level = 10 : i32, message = "bij,bjf->bif"}> : () -> ()
    %cst_16 = arith.constant dense<0.000000e+00> : vector<16x8x8xf32>
    %24 = tpu.matmul %3, %11, %cst_16 {dimension_numbers = #tpu.dot_dimension_numbers<[2], [1], [1], [2], [0, 0, 0, 1, 1, 2], [0], [0]>} : vector<16x8x8xbf16>, vector<16x8x8xbf16>, vector<16x8x8xf32> -> vector<16x8x8xf32>
    "tpu.trace_stop"() : () -> ()
    %cst_17 = arith.constant 2.000000e+00 : f32
    %25 = vector.broadcast %cst_17 : f32 to vector<16x8x8xf32>
    %26 = arith.mulf %25, %24 : vector<16x8x8xf32>
    %27 = arith.subf %26, %4 : vector<16x8x8xf32>
    %28 = arith.truncf %27 : vector<16x8x8xf32> to vector<16x8x8xbf16>
    %29 = vector.extract_strided_slice %28 {offsets = [0, 0, 0], sizes = [8, 8, 8], strides = [1, 1, 1]} : vector<16x8x8xbf16> to vector<8x8x8xbf16>
    %30 = vector.shape_cast %29 : vector<8x8x8xbf16> to vector<64x8xbf16>
    %c3 = arith.constant 3 : index
    %c0_18 = arith.constant 0 : index
    %c0_19 = arith.constant 0 : index
    %31 = vector.load %arg3[%c3, %c0_18, %c0_19] : memref<9x8x64xbf16, #tpu.memory_space<vmem>>, vector<1x8x64xbf16>
    %32 = vector.shape_cast %31 : vector<1x8x64xbf16> to vector<8x64xbf16>
    %cst_20 = arith.constant dense<0.000000e+00> : vector<64x64xf32>
    %33 = tpu.matmul %30, %32, %cst_20 {dimension_numbers = #tpu.dot_dimension_numbers<[1], [0], [0], [1], [0, 0, 1, 1], [], []>} : vector<64x8xbf16>, vector<8x64xbf16>, vector<64x64xf32> -> vector<64x64xf32>
    %34 = arith.addf %23, %33 : vector<64x64xf32>
    %35 = vector.extract_strided_slice %28 {offsets = [8, 0, 0], sizes = [8, 8, 8], strides = [1, 1, 1]} : vector<16x8x8xbf16> to vector<8x8x8xbf16>
    %36 = vector.shape_cast %35 : vector<8x8x8xbf16> to vector<64x8xbf16>
    %c4 = arith.constant 4 : index
    %c0_21 = arith.constant 0 : index
    %c0_22 = arith.constant 0 : index
    %37 = vector.load %arg3[%c4, %c0_21, %c0_22] : memref<9x8x64xbf16, #tpu.memory_space<vmem>>, vector<1x8x64xbf16>
    %38 = vector.shape_cast %37 : vector<1x8x64xbf16> to vector<8x64xbf16>
    %cst_23 = arith.constant dense<0.000000e+00> : vector<64x64xf32>
    %39 = tpu.matmul %36, %38, %cst_23 {dimension_numbers = #tpu.dot_dimension_numbers<[1], [0], [0], [1], [0, 0, 1, 1], [], []>} : vector<64x8xbf16>, vector<8x64xbf16>, vector<64x64xf32> -> vector<64x64xf32>
    %40 = arith.addf %34, %39 : vector<64x64xf32>
    "tpu.trace_start"() <{level = 10 : i32, message = "bij,bjf->bif"}> : () -> ()
    %cst_24 = arith.constant dense<0.000000e+00> : vector<16x8x8xf32>
    %41 = tpu.matmul %3, %28, %cst_24 {dimension_numbers = #tpu.dot_dimension_numbers<[2], [1], [1], [2], [0, 0, 0, 1, 1, 2], [0], [0]>} : vector<16x8x8xbf16>, vector<16x8x8xbf16>, vector<16x8x8xf32> -> vector<16x8x8xf32>
    "tpu.trace_stop"() : () -> ()
    %cst_25 = arith.constant 2.000000e+00 : f32
    %42 = vector.broadcast %cst_25 : f32 to vector<16x8x8xf32>
    %43 = arith.mulf %42, %41 : vector<16x8x8xf32>
    %44 = arith.subf %43, %4 : vector<16x8x8xf32>
    %45 = arith.truncf %44 : vector<16x8x8xf32> to vector<16x8x8xbf16>
    %46 = vector.extract_strided_slice %45 {offsets = [0, 0, 0], sizes = [8, 8, 8], strides = [1, 1, 1]} : vector<16x8x8xbf16> to vector<8x8x8xbf16>
    %47 = vector.shape_cast %46 : vector<8x8x8xbf16> to vector<64x8xbf16>
    %c5 = arith.constant 5 : index
    %c0_26 = arith.constant 0 : index
    %c0_27 = arith.constant 0 : index
    %48 = vector.load %arg3[%c5, %c0_26, %c0_27] : memref<9x8x64xbf16, #tpu.memory_space<vmem>>, vector<1x8x64xbf16>
    %49 = vector.shape_cast %48 : vector<1x8x64xbf16> to vector<8x64xbf16>
    %cst_28 = arith.constant dense<0.000000e+00> : vector<64x64xf32>
    %50 = tpu.matmul %47, %49, %cst_28 {dimension_numbers = #tpu.dot_dimension_numbers<[1], [0], [0], [1], [0, 0, 1, 1], [], []>} : vector<64x8xbf16>, vector<8x64xbf16>, vector<64x64xf32> -> vector<64x64xf32>
    %51 = arith.addf %40, %50 : vector<64x64xf32>
    %52 = vector.extract_strided_slice %45 {offsets = [8, 0, 0], sizes = [8, 8, 8], strides = [1, 1, 1]} : vector<16x8x8xbf16> to vector<8x8x8xbf16>
    %53 = vector.shape_cast %52 : vector<8x8x8xbf16> to vector<64x8xbf16>
    %c6 = arith.constant 6 : index
    %c0_29 = arith.constant 0 : index
    %c0_30 = arith.constant 0 : index
    %54 = vector.load %arg3[%c6, %c0_29, %c0_30] : memref<9x8x64xbf16, #tpu.memory_space<vmem>>, vector<1x8x64xbf16>
    %55 = vector.shape_cast %54 : vector<1x8x64xbf16> to vector<8x64xbf16>
    %cst_31 = arith.constant dense<0.000000e+00> : vector<64x64xf32>
    %56 = tpu.matmul %53, %55, %cst_31 {dimension_numbers = #tpu.dot_dimension_numbers<[1], [0], [0], [1], [0, 0, 1, 1], [], []>} : vector<64x8xbf16>, vector<8x64xbf16>, vector<64x64xf32> -> vector<64x64xf32>
    %57 = arith.addf %51, %56 : vector<64x64xf32>
    "tpu.trace_start"() <{level = 10 : i32, message = "bij,bjf->bif"}> : () -> ()
    %cst_32 = arith.constant dense<0.000000e+00> : vector<16x8x8xf32>
    %58 = tpu.matmul %3, %45, %cst_32 {dimension_numbers = #tpu.dot_dimension_numbers<[2], [1], [1], [2], [0, 0, 0, 1, 1, 2], [0], [0]>} : vector<16x8x8xbf16>, vector<16x8x8xbf16>, vector<16x8x8xf32> -> vector<16x8x8xf32>
    "tpu.trace_stop"() : () -> ()
    %cst_33 = arith.constant 2.000000e+00 : f32
    %59 = vector.broadcast %cst_33 : f32 to vector<16x8x8xf32>
    %60 = arith.mulf %59, %58 : vector<16x8x8xf32>
    %61 = arith.subf %60, %4 : vector<16x8x8xf32>
    %62 = arith.truncf %61 : vector<16x8x8xf32> to vector<16x8x8xbf16>
    %63 = vector.extract_strided_slice %62 {offsets = [0, 0, 0], sizes = [8, 8, 8], strides = [1, 1, 1]} : vector<16x8x8xbf16> to vector<8x8x8xbf16>
    %64 = vector.shape_cast %63 : vector<8x8x8xbf16> to vector<64x8xbf16>
    %c7 = arith.constant 7 : index
    %c0_34 = arith.constant 0 : index
    %c0_35 = arith.constant 0 : index
    %65 = vector.load %arg3[%c7, %c0_34, %c0_35] : memref<9x8x64xbf16, #tpu.memory_space<vmem>>, vector<1x8x64xbf16>
    %66 = vector.shape_cast %65 : vector<1x8x64xbf16> to vector<8x64xbf16>
    %cst_36 = arith.constant dense<0.000000e+00> : vector<64x64xf32>
    %67 = tpu.matmul %64, %66, %cst_36 {dimension_numbers = #tpu.dot_dimension_numbers<[1], [0], [0], [1], [0, 0, 1, 1], [], []>} : vector<64x8xbf16>, vector<8x64xbf16>, vector<64x64xf32> -> vector<64x64xf32>
    %68 = arith.addf %57, %67 : vector<64x64xf32>
    %69 = vector.extract_strided_slice %62 {offsets = [8, 0, 0], sizes = [8, 8, 8], strides = [1, 1, 1]} : vector<16x8x8xbf16> to vector<8x8x8xbf16>
    %70 = vector.shape_cast %69 : vector<8x8x8xbf16> to vector<64x8xbf16>
    %c8 = arith.constant 8 : index
    %c0_37 = arith.constant 0 : index
    %c0_38 = arith.constant 0 : index
    %71 = vector.load %arg3[%c8, %c0_37, %c0_38] : memref<9x8x64xbf16, #tpu.memory_space<vmem>>, vector<1x8x64xbf16>
    %72 = vector.shape_cast %71 : vector<1x8x64xbf16> to vector<8x64xbf16>
    %cst_39 = arith.constant dense<0.000000e+00> : vector<64x64xf32>
    %73 = tpu.matmul %70, %72, %cst_39 {dimension_numbers = #tpu.dot_dimension_numbers<[1], [0], [0], [1], [0, 0, 1, 1], [], []>} : vector<64x8xbf16>, vector<8x64xbf16>, vector<64x64xf32> -> vector<64x64xf32>
    %74 = arith.addf %68, %73 : vector<64x64xf32>
    %c0_40 = arith.constant 0 : index
    %c0_41 = arith.constant 0 : index
    %75 = vector.load %arg4[%c0_40, %c0_41] : memref<1x64xf32, #tpu.memory_space<vmem>>, vector<1x64xf32>
    %76 = vector.broadcast %75 : vector<1x64xf32> to vector<64x64xf32>
    %77 = arith.addf %74, %76 : vector<64x64xf32>
    %78 = vector.extract_strided_slice %77 {offsets = [0, 0], sizes = [64, 32], strides = [1, 1]} : vector<64x64xf32> to vector<64x32xf32>
    %79 = arith.negf %78 : vector<64x32xf32>
    %80 = math.exp %79 : vector<64x32xf32>
    %cst_42 = arith.constant 1.000000e+00 : f32
    %81 = vector.broadcast %cst_42 : f32 to vector<64x32xf32>
    %82 = arith.addf %81, %80 : vector<64x32xf32>
    %83 = arith.divf %81, %82 : vector<64x32xf32>
    %84 = vector.extract_strided_slice %77 {offsets = [0, 32], sizes = [64, 32], strides = [1, 1]} : vector<64x64xf32> to vector<64x32xf32>
    %85 = math.tanh %84 : vector<64x32xf32>
    %cst_43 = arith.constant 1.000000e+00 : f32
    %86 = vector.broadcast %cst_43 : f32 to vector<64x32xf32>
    %87 = arith.subf %86, %83 : vector<64x32xf32>
    %88 = arith.mulf %87, %85 : vector<64x32xf32>
    %cst_44 = arith.constant 0.000000e+00 : f32
    %89 = vector.broadcast %cst_44 : f32 to vector<64x32xf32>
    %90 = arith.maximumf %88, %89 : vector<64x32xf32>
    %91 = vector.shape_cast %90 : vector<64x32xf32> to vector<8x8x32xf32>
    %cst_45 = arith.constant dense<0.000000e+00> : vector<8x32xf32>
    %92 = vector.multi_reduction <add>, %91, %cst_45 [1] : vector<8x8x32xf32> to vector<8x32xf32>
    %cst_46 = arith.constant 8.000000e+00 : f32
    %93 = vector.broadcast %cst_46 : f32 to vector<8x32xf32>
    %94 = arith.divf %92, %93 : vector<8x32xf32>
    %95 = arith.truncf %94 : vector<8x32xf32> to vector<8x32xbf16>
    %c0_47 = arith.constant 0 : index
    %c0_48 = arith.constant 0 : index
    %96 = vector.load %arg5[%c0_47, %c0_48] : memref<32x128xbf16, #tpu.memory_space<vmem>>, vector<32x128xbf16>
    %cst_49 = arith.constant dense<0.000000e+00> : vector<8x128xf32>
    %97 = tpu.matmul %95, %96, %cst_49 {dimension_numbers = #tpu.dot_dimension_numbers<[1], [0], [0], [1], [0, 0, 1, 1], [], []>} : vector<8x32xbf16>, vector<32x128xbf16>, vector<8x128xf32> -> vector<8x128xf32>
    %c0_50 = arith.constant 0 : index
    %c0_51 = arith.constant 0 : index
    %98 = vector.load %arg6[%c0_50, %c0_51] : memref<1x128xf32, #tpu.memory_space<vmem>>, vector<1x128xf32>
    %99 = vector.broadcast %98 : vector<1x128xf32> to vector<8x128xf32>
    %100 = arith.addf %97, %99 : vector<8x128xf32>
    %c0_52 = arith.constant 0 : index
    %c0_53 = arith.constant 0 : index
    %101 = vector.load %arg7[%c0_52, %c0_53] : memref<8x128xf32, #tpu.memory_space<vmem>>, vector<8x128xf32>
    tpu.vector_store %arg7[%c0_52, %c0_53], %100 {strides = array<i32>} : memref<8x128xf32, #tpu.memory_space<vmem>>, vector<8x128xf32>,
    return
  }
  func.func @transform_0(%arg0: i32) -> (i32, i32, i32) {
    %c0_i32 = arith.constant 0 : i32
    %c0_i32_0 = arith.constant 0 : i32
    %c0_i32_1 = arith.constant 0 : i32
    return %arg0, %c0_i32, %c0_i32_0 : i32, i32, i32
  }
  func.func @transform_1(%arg0: i32) -> (i32, i32, i32, i32) {
    %c0_i32 = arith.constant 0 : i32
    %c0_i32_0 = arith.constant 0 : i32
    %c0_i32_1 = arith.constant 0 : i32
    %c0_i32_2 = arith.constant 0 : i32
    return %c0_i32, %arg0, %c0_i32_0, %c0_i32_1 : i32, i32, i32, i32
  }
  func.func @transform_2(%arg0: i32) -> (i32, i32, i32) {
    %c0_i32 = arith.constant 0 : i32
    %c0_i32_0 = arith.constant 0 : i32
    %c0_i32_1 = arith.constant 0 : i32
    %c0_i32_2 = arith.constant 0 : i32
    return %c0_i32, %c0_i32_0, %c0_i32_1 : i32, i32, i32
  }
  func.func @transform_3(%arg0: i32) -> (i32, i32) {
    %c0_i32 = arith.constant 0 : i32
    %c0_i32_0 = arith.constant 0 : i32
    %c0_i32_1 = arith.constant 0 : i32
    return %c0_i32, %c0_i32_0 : i32, i32
  }
  func.func @transform_4(%arg0: i32) -> (i32, i32) {
    %c0_i32 = arith.constant 0 : i32
    %c0_i32_0 = arith.constant 0 : i32
    %c0_i32_1 = arith.constant 0 : i32
    return %c0_i32, %c0_i32_0 : i32, i32
  }
  func.func @transform_5(%arg0: i32) -> (i32, i32) {
    %c0_i32 = arith.constant 0 : i32
    %c0_i32_0 = arith.constant 0 : i32
    %c0_i32_1 = arith.constant 0 : i32
    return %c0_i32, %c0_i32_0 : i32, i32
  }
  func.func @transform_6(%arg0: i32) -> (i32, i32) {
    %c0_i32 = arith.constant 0 : i32
    %c0_i32_0 = arith.constant 0 : i32
    return %arg0, %c0_i32 : i32, i32
  }
}

</mosaic_0001>

<llo_original>
// kernel: tpu_custom_call.1
$region0: #{tpu_custom_call.1}
  #allocation0 [shape = 'u32[]', space=smem, size = 0x4, offset = 0x4, fixed_abs, tag = 'smem constant byte address 0x4 - core index']
  #allocation1 [shape = 'u32[144,128]{1,0:T(1,128)}', space=vmem, size = 0x12000, scoped, tag = 'internal scratch']
  %s0 = inlined_call_operand.vmem [shape: f32[16,8,8], index: 0, kind: input, shape index: {}]
  %s1 = inlined_call_operand.vmem [shape: bf16[2,16,8,8], index: 1, kind: input, shape index: {}]
  %s2 = inlined_call_operand.vmem [shape: bf16[9,8,64], index: 2, kind: input, shape index: {}]
  %s3 = inlined_call_operand.vmem [shape: f32[1,64], index: 3, kind: input, shape index: {}]
  %s4 = inlined_call_operand.vmem [shape: bf16[32,128], index: 4, kind: input, shape index: {}]
  %s5 = inlined_call_operand.vmem [shape: f32[1,128], index: 5, kind: input, shape index: {}]
  %s6 = inlined_call_operand.hbm [shape: f32[16,128], index: 6, kind: output, shape index: {}]
  %s7 = sld [smem:[#allocation0]]
  $region98: #{tpu_custom_call.1} parent=0
    _
  %s9 = ssub.s32 1, %s7
  %s10 = scalar_select 0, %s9, %s7
  $region1: #{tpu_custom_call.1} parent=0
    #allocation2 [shape = 'u8[65536]{0}', space=vmem, size = 0x10000, scoped, tag = 'input window, operand 1']
    #allocation3 [shape = 'u8[8192]{0}', space=vmem, size = 0x2000, scoped, tag = 'output window, operand 0']
    #allocation4 [shape = 's32[2]{0}', space=sflag, size = 0x8, scoped, tag = 'scoped memory for tpu_custom_call.1']
    %11 = vsyncpa [#allocation4], 0
    %s12 = scalar_lea.sflag [#allocation4], 1
    %13 = vsyncpa %s12, 0
    loop: start=0, step=1, limit=4
    $region2: #{tpu_custom_call.1} parent=1 // loop_pre_header
      _
    $region3: #{tpu_custom_call.1} parent=1 // loop_header
      %s15 = sphi 0, %s19
      %p16 = scmp.ge.s32.totalorder %s15, 4
      %s25 = sphi 0, %s27
      %s28 = sphi 0, %s25
      %s29 = sphi 0, %s28
      %s45 = sphi 0, %s29
      %s51 = sphi 0, %s53
      %s54 = sphi 0, %s51
      %s55 = sphi 0, %s54
      %s71 = sphi 0, %s55
      %s75 = sphi 0, %s75
      %s77 = sphi 0, %s75
      %s78 = sphi 0, %s77
      %s92 = sphi 0, %s78
      %s96 = sphi 0, %s96
      %s98 = sphi 0, %s96
      %s99 = sphi 0, %s98
      %s113 = sphi 0, %s99
      %s117 = sphi 0, %s117
      %s119 = sphi 0, %s117
      %s120 = sphi 0, %s119
      %s134 = sphi 0, %s120
      %s138 = sphi 0, %s138
      %s140 = sphi 0, %s138
      %s141 = sphi 0, %s140
      %s155 = sphi 0, %s141
      %s161 = sphi 0, %s163
      %s164 = sphi 0, %s161
      %s165 = sphi 0, %s164
      %s181 = sphi 0, %s165
    $region4: #{tpu_custom_call.1} parent=1 // loop_header_branch
      %18 = sbr.rel (%p16) target = $region8
    $region5: #{tpu_custom_call.1} parent=1 // loop_body
      %s20 = ssub.s32 %s15, 1
      %s21 = ssub.s32 %s15, 2
      %s22 = sadd.s32 %s15, 1
      %s23 = ssub.s32 %s15, %s22
      %p24 = scmp.eq.s32.totalorder %s23, 0
      %s26 = sadd.s32 %s25, 1
      %s27 = scalar_select %p24, %s25, %s26
      %p30 = pneg %p24
      %p31 = scmp.eq.s32.totalorder %s15, 1
      %p32 = por %p30, %p31
      %p33 = scmp.ne.s32.totalorder %s25, %s28
      %p34 = scmp.eq.s32.totalorder %s15, 0
      %p35 = por %p33, %p34
      %p36 = scmp.ne.s32.totalorder %s25, %s28
      %p37 = scmp.eq.s32.totalorder %s20, 1
      %p38 = por %p36, %p37
      %p39 = scmp.ne.s32.totalorder %s28, %s29
      %p40 = scmp.eq.s32.totalorder %s20, 0
      %p41 = por %p39, %p40
      %p42 = scmp.ne.s32.totalorder %s28, %s29
      %p43 = scmp.eq.s32.totalorder %s21, 1
      %p44 = por %p42, %p43
      %p46 = scmp.ne.s32.totalorder %s29, %s45
      %p47 = scmp.eq.s32.totalorder %s21, 0
      %p48 = por %p46, %p47
      %s49 = ssub.s32 %s15, %s22
      %p50 = scmp.eq.s32.totalorder %s49, 0
      %s52 = sadd.s32 %s51, 1
      %s53 = scalar_select %p50, %s51, %s52
      %p56 = pneg %p50
      %p57 = scmp.eq.s32.totalorder %s15, 1
      %p58 = por %p56, %p57
      %p59 = scmp.ne.s32.totalorder %s51, %s54
      %p60 = scmp.eq.s32.totalorder %s15, 0
      %p61 = por %p59, %p60
      %p62 = scmp.ne.s32.totalorder %s51, %s54
      %p63 = scmp.eq.s32.totalorder %s20, 1
      %p64 = por %p62, %p63
      %p65 = scmp.ne.s32.totalorder %s54, %s55
      %p66 = scmp.eq.s32.totalorder %s20, 0
      %p67 = por %p65, %p66
      %p68 = scmp.ne.s32.totalorder %s54, %s55
      %p69 = scmp.eq.s32.totalorder %s21, 1
      %p70 = por %p68, %p69
      %p72 = scmp.ne.s32.totalorder %s55, %s71
      %p73 = scmp.eq.s32.totalorder %s21, 0
      %p74 = por %p72, %p73
      %s76 = sadd.s32 %s75, 1
      %p79 = scmp.eq.s32.totalorder %s15, 1
      %p80 = scmp.ne.s32.totalorder %s75, %s77
      %p81 = scmp.eq.s32.totalorder %s15, 0
      %p82 = por %p80, %p81
      %p83 = scmp.ne.s32.totalorder %s75, %s77
      %p84 = scmp.eq.s32.totalorder %s20, 1
      %p85 = por %p83, %p84
      %p86 = scmp.ne.s32.totalorder %s77, %s78
      %p87 = scmp.eq.s32.totalorder %s20, 0
      %p88 = por %p86, %p87
      %p89 = scmp.ne.s32.totalorder %s77, %s78
      %p90 = scmp.eq.s32.totalorder %s21, 1
      %p91 = por %p89, %p90
      %p93 = scmp.ne.s32.totalorder %s78, %s92
      %p94 = scmp.eq.s32.totalorder %s21, 0
      %p95 = por %p93, %p94
      %s97 = sadd.s32 %s96, 1
      %p100 = scmp.eq.s32.totalorder %s15, 1
      %p101 = scmp.ne.s32.totalorder %s96, %s98
      %p102 = scmp.eq.s32.totalorder %s15, 0
      %p103 = por %p101, %p102
      %p104 = scmp.ne.s32.totalorder %s96, %s98
      %p105 = scmp.eq.s32.totalorder %s20, 1
      %p106 = por %p104, %p105
      %p107 = scmp.ne.s32.totalorder %s98, %s99
      %p108 = scmp.eq.s32.totalorder %s20, 0
      %p109 = por %p107, %p108
      %p110 = scmp.ne.s32.totalorder %s98, %s99
      %p111 = scmp.eq.s32.totalorder %s21, 1
      %p112 = por %p110, %p111
      %p114 = scmp.ne.s32.totalorder %s99, %s113
      %p115 = scmp.eq.s32.totalorder %s21, 0
      %p116 = por %p114, %p115
      %s118 = sadd.s32 %s117, 1
      %p121 = scmp.eq.s32.totalorder %s15, 1
      %p122 = scmp.ne.s32.totalorder %s117, %s119
      %p123 = scmp.eq.s32.totalorder %s15, 0
      %p124 = por %p122, %p123
      %p125 = scmp.ne.s32.totalorder %s117, %s119
      %p126 = scmp.eq.s32.totalorder %s20, 1
      %p127 = por %p125, %p126
      %p128 = scmp.ne.s32.totalorder %s119, %s120
      %p129 = scmp.eq.s32.totalorder %s20, 0
      %p130 = por %p128, %p129
      %p131 = scmp.ne.s32.totalorder %s119, %s120
      %p132 = scmp.eq.s32.totalorder %s21, 1
      %p133 = por %p131, %p132
      %p135 = scmp.ne.s32.totalorder %s120, %s134
      %p136 = scmp.eq.s32.totalorder %s21, 0
      %p137 = por %p135, %p136
      %s139 = sadd.s32 %s138, 1
      %p142 = scmp.eq.s32.totalorder %s15, 1
      %p143 = scmp.ne.s32.totalorder %s138, %s140
      %p144 = scmp.eq.s32.totalorder %s15, 0
      %p145 = por %p143, %p144
      %p146 = scmp.ne.s32.totalorder %s138, %s140
      %p147 = scmp.eq.s32.totalorder %s20, 1
      %p148 = por %p146, %p147
      %p149 = scmp.ne.s32.totalorder %s140, %s141
      %p150 = scmp.eq.s32.totalorder %s20, 0
      %p151 = por %p149, %p150
      %p152 = scmp.ne.s32.totalorder %s140, %s141
      %p153 = scmp.eq.s32.totalorder %s21, 1
      %p154 = por %p152, %p153
      %p156 = scmp.ne.s32.totalorder %s141, %s155
      %p157 = scmp.eq.s32.totalorder %s21, 0
      %p158 = por %p156, %p157
      %s159 = ssub.s32 %s15, %s22
      %p160 = scmp.eq.s32.totalorder %s159, 0
      %s162 = sadd.s32 %s161, 1
      %s163 = scalar_select %p160, %s161, %s162
      %p166 = pneg %p160
      %p167 = scmp.eq.s32.totalorder %s15, 1
      %p168 = por %p166, %p167
      %p169 = scmp.ne.s32.totalorder %s161, %s164
      %p170 = scmp.eq.s32.totalorder %s15, 0
      %p171 = por %p169, %p170
      %p172 = scmp.ne.s32.totalorder %s161, %s164
      %p173 = scmp.eq.s32.totalorder %s20, 1
      %p174 = por %p172, %p173
      %p175 = scmp.ne.s32.totalorder %s164, %s165
      %p176 = scmp.eq.s32.totalorder %s20, 0
      %p177 = por %p175, %p176
      %p178 = scmp.ne.s32.totalorder %s164, %s165
      %p179 = scmp.eq.s32.totalorder %s21, 1
      %p180 = por %p178, %p179
      %p182 = scmp.ne.s32.totalorder %s165, %s181
      %p183 = scmp.eq.s32.totalorder %s21, 0
      %p184 = por %p182, %p183
      %p185 = scmp.le.s32.totalorder 1, %s15
      %p186 = scmp.lt.s32.totalorder %s15, 3
      %p187 = pnand %p185, %p186
      %p188 = pneg %p187
      // Predicated region
      $region9: #{tpu_custom_call.1} parent=5 // pred_check
        _
      $region10: #{tpu_custom_call.1} parent=5 // pred_check_branch
        %190 = sbr.rel (%p187) target = $region12
      $region11: #{tpu_custom_call.1} parent=5 // pred_region
        %s191 = ssub.s32 %s15, 1
        // Predicated region
        $region13: #{tpu_custom_call.1} parent=11 // pred_check
          %p192 = pneg %p88
        $region14: #{tpu_custom_call.1} parent=11 // pred_check_branch
          %194 = sbr.rel (%p192) target = $region16
        $region15: #{tpu_custom_call.1} parent=11 // pred_region
          _
        $region16: #{tpu_custom_call.1} parent=11 // pred_fallthru
          _
        // Predicated region
        $region17: #{tpu_custom_call.1} parent=11 // pred_check
          %p195 = pneg %p109
        $region18: #{tpu_custom_call.1} parent=11 // pred_check_branch
          %197 = sbr.rel (%p195) target = $region20
        $region19: #{tpu_custom_call.1} parent=11 // pred_region
          _
        $region20: #{tpu_custom_call.1} parent=11 // pred_fallthru
          _
        // Predicated region
        $region21: #{tpu_custom_call.1} parent=11 // pred_check
          %p198 = pneg %p130
        $region22: #{tpu_custom_call.1} parent=11 // pred_check_branch
          %200 = sbr.rel (%p198) target = $region24
        $region23: #{tpu_custom_call.1} parent=11 // pred_region
          _
        $region24: #{tpu_custom_call.1} parent=11 // pred_fallthru
          _
        // Predicated region
        $region25: #{tpu_custom_call.1} parent=11 // pred_check
          %p201 = pneg %p151
        $region26: #{tpu_custom_call.1} parent=11 // pred_check_branch
          %203 = sbr.rel (%p201) target = $region28
        $region27: #{tpu_custom_call.1} parent=11 // pred_region
          _
        $region28: #{tpu_custom_call.1} parent=11 // pred_fallthru
          _
      $region12: #{tpu_custom_call.1} parent=5 // pred_fallthru
        _
      %p204 = scmp.lt.s32.totalorder %s15, 2
      // Predicated region
      $region29: #{tpu_custom_call.1} parent=5 // pred_check
        %p205 = pneg %p204
      $region30: #{tpu_custom_call.1} parent=5 // pred_check_branch
        %207 = sbr.rel (%p205) target = $region32
      $region31: #{tpu_custom_call.1} parent=5 // pred_region
        // Predicated region
        $region33: #{tpu_custom_call.1} parent=31 // pred_check
          %p208 = pneg %p35
        $region34: #{tpu_custom_call.1} parent=31 // pred_check_branch
          %210 = sbr.rel (%p208) target = $region36
        $region35: #{tpu_custom_call.1} parent=31 // pred_region
          %s211 = smul.u32 8, %s15
          %p212 = scmp.lt.s32.totalorder %s211, 15
          %s213 = scalar_select %p212, %s211, 15
          %s214 = smul.addr %s213, 8
          %s215 = scalar_lea.vmem %s0, %s214
          %s216 = smul.u32 8, %s15
        $region36: #{tpu_custom_call.1} parent=31 // pred_fallthru
          _
        // Predicated region
        $region37: #{tpu_custom_call.1} parent=31 // pred_check
          %p217 = pneg %p61
        $region38: #{tpu_custom_call.1} parent=31 // pred_check_branch
          %219 = sbr.rel (%p217) target = $region40
        $region39: #{tpu_custom_call.1} parent=31 // pred_region
          %s220 = sand.u32 %s51, 1
          %s221 = sand.u32 %s51, 1
          %s222 = smul.addr %s221, 64
          %s223 = scalar_lea.vmem [#allocation2], %s222
          %s224 = smul.u32 8, %s15
          %s225 = smul.addr %s224, 4
          %s226 = scalar_lea.vmem %s1, %s225
          // Predicated region
          $region41: #{tpu_custom_call.1} parent=39 // pred_check
            _
          $region42: #{tpu_custom_call.1} parent=39 // pred_check_branch
            %228 = sbr.rel (0) target = $region44
          $region43: #{tpu_custom_call.1} parent=39 // pred_region
            // Predicated region
            $region45: #{tpu_custom_call.1} parent=43 // pred_check
              _
            $region46: #{tpu_custom_call.1} parent=43 // pred_check_branch
              %230 = sbr.rel target = $region48
            $region47: #{tpu_custom_call.1} parent=43 // pred_region
              // Predicated region
              $region60: #{tpu_custom_call.1} parent=47 // pred_check
                _
              $region61: #{tpu_custom_call.1} parent=47 // pred_check_branch
                %275 = sbr.rel (0) target = $region63
              $region62: #{tpu_custom_call.1} parent=47 // pred_region
                loop: start=0, step=1, limit=1
                $region64: #{tpu_custom_call.1} parent=62 // loop_pre_header
                  _
                $region65: #{tpu_custom_call.1} parent=62 // loop_header
                  %s277 = sphi 0, %s281
                  %p278 = scmp.ge.s32.totalorder %s277, 1
                  %s282 = sphi %s226, %s226
                  %s283 = sphi %s223, %s223
                $region66: #{tpu_custom_call.1} parent=62 // loop_header_branch
                  %280 = sbr.rel (%p278) target = $region70
                $region67: #{tpu_custom_call.1} parent=62 // loop_body
                  _
                $region68: #{tpu_custom_call.1} parent=62 // loop_footer
                  %s281 = sadd.s32 1, %s277
                $region69: #{tpu_custom_call.1} parent=62 // loop_footer_branch
                  %276 = sbr.rel target = $region65
                $region70: #{tpu_custom_call.1} parent=62 // loop_exit
                  _
                loop: start=0, step=1, limit=1
                $region71: #{tpu_custom_call.1} parent=62 // loop_pre_header
                  _
                $region72: #{tpu_custom_call.1} parent=62 // loop_header
                  %s286 = sphi 0, %s290
                  %p287 = scmp.ge.s32.totalorder %s286, 1
                  %s291 = sphi %s226, %s226
                  %s292 = sphi %s223, %s223
                $region73: #{tpu_custom_call.1} parent=62 // loop_header_branch
                  %289 = sbr.rel (%p287) target = $region77
                $region74: #{tpu_custom_call.1} parent=62 // loop_body
                  %v293 = vld [vmem:[%s291] sm:$0xf]
                  %294 = vst [vmem:[%s292] sm:$0xf] %v293
                  %v295 = vld [vmem:[%s291 + $0x4] sm:$0xf]
                  %296 = vst [vmem:[%s292 + $0x4] sm:$0xf] %v295
                  %v297 = vld [vmem:[%s291 + $0x8] sm:$0xf]
                  %298 = vst [vmem:[%s292 + $0x8] sm:$0xf] %v297
                  %v299 = vld [vmem:[%s291 + $0xc] sm:$0xf]
                  %300 = vst [vmem:[%s292 + $0xc] sm:$0xf] %v299
                  %v301 = vld [vmem:[%s291 + $0x10] sm:$0xf]
                  %302 = vst [vmem:[%s292 + $0x10] sm:$0xf] %v301
                  %v303 = vld [vmem:[%s291 + $0x14] sm:$0xf]
                  %304 = vst [vmem:[%s292 + $0x14] sm:$0xf] %v303
                  %v305 = vld [vmem:[%s291 + $0x18] sm:$0xf]
                  %306 = vst [vmem:[%s292 + $0x18] sm:$0xf] %v305
                  %v307 = vld [vmem:[%s291 + $0x1c] sm:$0xf]
                  %308 = vst [vmem:[%s292 + $0x1c] sm:$0xf] %v307
                  %v309 = vld [vmem:[%s291 + $0x40] sm:$0xf]
                  %310 = vst [vmem:[%s292 + $0x20] sm:$0xf] %v309
                  %v311 = vld [vmem:[%s291 + $0x44] sm:$0xf]
                  %312 = vst [vmem:[%s292 + $0x24] sm:$0xf] %v311
                  %v313 = vld [vmem:[%s291 + $0x48] sm:$0xf]
                  %314 = vst [vmem:[%s292 + $0x28] sm:$0xf] %v313
                  %v315 = vld [vmem:[%s291 + $0x4c] sm:$0xf]
                  %316 = vst [vmem:[%s292 + $0x2c] sm:$0xf] %v315
                  %v317 = vld [vmem:[%s291 + $0x50] sm:$0xf]
                  %318 = vst [vmem:[%s292 + $0x30] sm:$0xf] %v317
                  %v319 = vld [vmem:[%s291 + $0x54] sm:$0xf]
                  %320 = vst [vmem:[%s292 + $0x34] sm:$0xf] %v319
                  %v321 = vld [vmem:[%s291 + $0x58] sm:$0xf]
                  %322 = vst [vmem:[%s292 + $0x38] sm:$0xf] %v321
                  %v323 = vld [vmem:[%s291 + $0x5c] sm:$0xf]
                  %324 = vst [vmem:[%s292 + $0x3c] sm:$0xf] %v323
                $region75: #{tpu_custom_call.1} parent=62 // loop_footer
                  %s290 = sadd.s32 1, %s286
                $region76: #{tpu_custom_call.1} parent=62 // loop_footer_branch
                  %285 = sbr.rel target = $region72
                $region77: #{tpu_custom_call.1} parent=62 // loop_exit
                  _
              $region63: #{tpu_custom_call.1} parent=47 // pred_fallthru
                _
            $region48: #{tpu_custom_call.1} parent=43 // pred_fallthru
              _
            // Predicated region
            $region49: #{tpu_custom_call.1} parent=43 // pred_check
              _
            $region50: #{tpu_custom_call.1} parent=43 // pred_check_branch
              %232 = sbr.rel (0) target = $region52
            $region51: #{tpu_custom_call.1} parent=43 // pred_region
              loop: start=0, step=1, limit=1
              $region53: #{tpu_custom_call.1} parent=51 // loop_pre_header
                _
              $region54: #{tpu_custom_call.1} parent=51 // loop_header
                %s235 = sphi 0, %s239
                %p236 = scmp.ge.s32.totalorder %s235, 1
                %s240 = sphi %s226, %s226
                %s241 = sphi %s223, %s223
              $region55: #{tpu_custom_call.1} parent=51 // loop_header_branch
                %238 = sbr.rel (%p236) target = $region59
              $region56: #{tpu_custom_call.1} parent=51 // loop_body
                %v242 = vld [vmem:[%s240] sm:$0xf]
                %243 = vst [vmem:[%s241] sm:$0xf] %v242
                %v244 = vld [vmem:[%s240 + $0x4] sm:$0xf]
                %245 = vst [vmem:[%s241 + $0x4] sm:$0xf] %v244
                %v246 = vld [vmem:[%s240 + $0x8] sm:$0xf]
                %247 = vst [vmem:[%s241 + $0x8] sm:$0xf] %v246
                %v248 = vld [vmem:[%s240 + $0xc] sm:$0xf]
                %249 = vst [vmem:[%s241 + $0xc] sm:$0xf] %v248
                %v250 = vld [vmem:[%s240 + $0x10] sm:$0xf]
                %251 = vst [vmem:[%s241 + $0x10] sm:$0xf] %v250
                %v252 = vld [vmem:[%s240 + $0x14] sm:$0xf]
                %253 = vst [vmem:[%s241 + $0x14] sm:$0xf] %v252
                %v254 = vld [vmem:[%s240 + $0x18] sm:$0xf]
                %255 = vst [vmem:[%s241 + $0x18] sm:$0xf] %v254
                %v256 = vld [vmem:[%s240 + $0x1c] sm:$0xf]
                %257 = vst [vmem:[%s241 + $0x1c] sm:$0xf] %v256
                %v258 = vld [vmem:[%s240 + $0x40] sm:$0xf]
                %259 = vst [vmem:[%s241 + $0x20] sm:$0xf] %v258
                %v260 = vld [vmem:[%s240 + $0x44] sm:$0xf]
                %261 = vst [vmem:[%s241 + $0x24] sm:$0xf] %v260
                %v262 = vld [vmem:[%s240 + $0x48] sm:$0xf]
                %263 = vst [vmem:[%s241 + $0x28] sm:$0xf] %v262
                %v264 = vld [vmem:[%s240 + $0x4c] sm:$0xf]
                %265 = vst [vmem:[%s241 + $0x2c] sm:$0xf] %v264
                %v266 = vld [vmem:[%s240 + $0x50] sm:$0xf]
                %267 = vst [vmem:[%s241 + $0x30] sm:$0xf] %v266
                %v268 = vld [vmem:[%s240 + $0x54] sm:$0xf]
                %269 = vst [vmem:[%s241 + $0x34] sm:$0xf] %v268
                %v270 = vld [vmem:[%s240 + $0x58] sm:$0xf]
                %271 = vst [vmem:[%s241 + $0x38] sm:$0xf] %v270
                %v272 = vld [vmem:[%s240 + $0x5c] sm:$0xf]
                %273 = vst [vmem:[%s241 + $0x3c] sm:$0xf] %v272
              $region57: #{tpu_custom_call.1} parent=51 // loop_footer
                %s239 = sadd.s32 1, %s235
              $region58: #{tpu_custom_call.1} parent=51 // loop_footer_branch
                %234 = sbr.rel target = $region54
              $region59: #{tpu_custom_call.1} parent=51 // loop_exit
                _
            $region52: #{tpu_custom_call.1} parent=43 // pred_fallthru
              _
          $region44: #{tpu_custom_call.1} parent=39 // pred_fallthru
            _
          %325 = vnop
        $region40: #{tpu_custom_call.1} parent=31 // pred_fallthru
          _
      $region32: #{tpu_custom_call.1} parent=5 // pred_fallthru
        _
      %p326 = scmp.le.s32.totalorder 1, %s15
      %p327 = scmp.lt.s32.totalorder %s15, 3
      %p328 = pnand %p326, %p327
      %p329 = pneg %p328
      // Predicated region
      $region78: #{tpu_custom_call.1} parent=5 // pred_check
        _
      $region79: #{tpu_custom_call.1} parent=5 // pred_check_branch
        %331 = sbr.rel (%p328) target = $region81
      $region80: #{tpu_custom_call.1} parent=5 // pred_region
        %s332 = ssub.s32 %s15, 1
        %s333 = sand.u32 %s54, 1
        %s334 = sand.u32 %s54, 1
        %s335 = smul.addr %s334, 64
        %s336 = scalar_lea.vmem [#allocation2], %s335
        // Predicated region
        $region82: #{tpu_custom_call.1} parent=80 // pred_check
          %p337 = pneg %p67
        $region83: #{tpu_custom_call.1} parent=80 // pred_check_branch
          %339 = sbr.rel (%p337) target = $region85
        $region84: #{tpu_custom_call.1} parent=80 // pred_region
          _
        $region85: #{tpu_custom_call.1} parent=80 // pred_fallthru
          _
        %s340 = smul.u32 8, %s20
        %p341 = scmp.lt.s32.totalorder %s340, 15
        %s342 = scalar_select %p341, %s340, 15
        %s343 = smul.addr %s342, 8
        %s344 = scalar_lea.vmem %s0, %s343
        %p345 = pneg %p41
        %p346 = pneg %p38
        %s347 = sand.u32 %s54, 1
        %s348 = sand.u32 %s54, 1
        %s349 = smul.addr %s348, 64
        %s350 = scalar_lea.vmem [#allocation2], %s349
        %p351 = pneg %p67
        %p352 = pneg %p64
        %p353 = pneg %p88
        %p354 = pneg %p85
        %p355 = pneg %p109
        %p356 = pneg %p106
        %p357 = pneg %p130
        %p358 = pneg %p127
        %p359 = pneg %p151
        %p360 = pneg %p148
        %p361 = pneg %p177
        %p362 = pneg %p174
        %s363 = sand.u32 %s164, 1
        %s364 = scalar_lea.sflag [#allocation4], %s363
        %s365 = sand.u32 %s164, 1
        %s366 = smul.addr %s365, 8
        %s367 = scalar_lea.vmem [#allocation3], %s366
        %s368 = smul.u32 8, %s20
        %p369 = scmp.lt.s32.totalorder %s368, 15
        %s370 = scalar_select %p369, %s368, 15
        %s371 = smul.addr %s370, 8
        %s372 = scalar_lea.vmem %s0, %s371
        %s373 = smul.u32 8, %s20
        %s374 = smul.u32 8, %s20
        %v376 = vld [vmem:[%s372] sm:$0xff]
        %v377 = vld [vmem:[%s372 + $0x8] sm:$0xff]
        %v378 = vld [vmem:[%s372 + $0x10] sm:$0xff]
        %v379 = vld [vmem:[%s372 + $0x18] sm:$0xff]
        %v380 = vld [vmem:[%s372 + $0x20] sm:$0xff]
        %v381 = vld [vmem:[%s372 + $0x28] sm:$0xff]
        %v382 = vld [vmem:[%s372 + $0x30] sm:$0xff]
        %v383 = vld [vmem:[%s372 + $0x38] sm:$0xff]
        %v384 = vpack.c.bf16 %v376, %v376
        %v385 = vpack.c.bf16 %v377, %v377
        %v386 = vpack.c.bf16 %v378, %v378
        %v387 = vpack.c.bf16 %v379, %v379
        %v388 = vpack.c.bf16 %v380, %v380
        %v389 = vpack.c.bf16 %v381, %v381
        %v390 = vpack.c.bf16 %v382, %v382
        %v391 = vpack.c.bf16 %v383, %v383
        %v392 = vld [vmem:[%s336] sm:$0xf]
        %v393 = vld [vmem:[%s336 + $0x4] sm:$0xf]
        %v394 = vld [vmem:[%s336 + $0x8] sm:$0xf]
        %v395 = vld [vmem:[%s336 + $0xc] sm:$0xf]
        %v396 = vld [vmem:[%s336 + $0x10] sm:$0xf]
        %v397 = vld [vmem:[%s336 + $0x14] sm:$0xf]
        %v398 = vld [vmem:[%s336 + $0x18] sm:$0xf]
        %v399 = vld [vmem:[%s336 + $0x1c] sm:$0xf]
        %v400 = vld [vmem:[%s336 + $0x20] sm:$0xf]
        %v401 = vld [vmem:[%s336 + $0x24] sm:$0xf]
        %v402 = vld [vmem:[%s336 + $0x28] sm:$0xf]
        %v403 = vld [vmem:[%s336 + $0x2c] sm:$0xf]
        %v404 = vld [vmem:[%s336 + $0x30] sm:$0xf]
        %v405 = vld [vmem:[%s336 + $0x34] sm:$0xf]
        %v406 = vld [vmem:[%s336 + $0x38] sm:$0xf]
        %v407 = vld [vmem:[%s336 + $0x3c] sm:$0xf]
        %v408 = vld [vmem:[%s2] sm:$0xf]
        %vm409 = vcmask 64512
        %v411 = vsel %vm409, %v392, 0
        %vm413 = vcmask 1043456
        %v415 = vsel %vm413, %v384, 0
        %417 = vmatprep.subr.bf16.mxu0 0
        %418 = vmatpush1.bf16.msra.mxu0 %v415
        %419 = vmatprep.subr.bf16.mxu0 0
        %420 = vmatpush1.bf16.msra.mxu0 0
        %421 = vmatprep.subr.bf16.mxu0 0
        %422 = vmatpush1.bf16.msra.mxu0 0
        %423 = vmatprep.subr.bf16.mxu0 0
        %424 = vmatpush1.bf16.msra.mxu0 0
        %425 = vmatprep.subr.bf16.mxu0 0
        %426 = vmatpush1.bf16.msra.mxu0 0
        %427 = vmatprep.subr.bf16.mxu0 0
        %428 = vmatpush1.bf16.msra.mxu0 0
        %429 = vmatprep.subr.bf16.mxu0 0
        %430 = vmatpush1.bf16.msra.mxu0 0
        %431 = vmatprep.subr.bf16.mxu0 0
        %432 = vmatpush1.bf16.msra.mxu0 0
        %433 = vmatprep.subr.bf16.mxu0 0
        %434 = vmatpush1.bf16.msra.mxu0 0
        %435 = vmatprep.subr.bf16.mxu0 0
        %436 = vmatpush1.bf16.msra.mxu0 0
        %437 = vmatprep.subr.bf16.mxu0 0
        %438 = vmatpush1.bf16.msra.mxu0 0
        %439 = vmatprep.subr.bf16.mxu0 0
        %440 = vmatpush1.bf16.msra.mxu0 0
        %441 = vmatprep.subr.bf16.mxu0 0
        %442 = vmatpush1.bf16.msra.mxu0 0
        %443 = vmatprep.subr.bf16.mxu0 0
        %444 = vmatpush1.bf16.msra.mxu0 0
        %445 = vmatprep.subr.bf16.mxu0 0
        %446 = vmatpush1.bf16.msra.mxu0 0
        %447 = vmatprep.subr.bf16.mxu0 0
        %448 = vmatpush1.bf16.msra.mxu0 0
        %449 = vmatprep.mubr.bf16.mxu0 0
        %450 = vmatmul.mubr.bf16.gmra.mrb[0].mxu0 %v411
        %v451 = vpop.f32.mrb[0].mxu0
        %v452 = vadd.f32 0.0, %v451
        %v453 = vpop.f32.mrb[0].mxu0
        %v454 = vpop.f32.mrb[0].mxu0
        %v455 = vpop.f32.mrb[0].mxu0
        %456 = vdwg.mxu0
        %v458 = vsel %vm409, %v393, 0
        %v461 = vsel %vm413, %v385, 0
        %463 = vmatprep.subr.bf16.mxu0 0
        %464 = vmatpush1.bf16.msra.mxu0 %v461
        %465 = vmatprep.subr.bf16.mxu0 0
        %466 = vmatpush1.bf16.msra.mxu0 0
        %467 = vmatprep.subr.bf16.mxu0 0
        %468 = vmatpush1.bf16.msra.mxu0 0
        %469 = vmatprep.subr.bf16.mxu0 0
        %470 = vmatpush1.bf16.msra.mxu0 0
        %471 = vmatprep.subr.bf16.mxu0 0
        %472 = vmatpush1.bf16.msra.mxu0 0
        %473 = vmatprep.subr.bf16.mxu0 0
        %474 = vmatpush1.bf16.msra.mxu0 0
        %475 = vmatprep.subr.bf16.mxu0 0
        %476 = vmatpush1.bf16.msra.mxu0 0
        %477 = vmatprep.subr.bf16.mxu0 0
        %478 = vmatpush1.bf16.msra.mxu0 0
        %479 = vmatprep.subr.bf16.mxu0 0
        %480 = vmatpush1.bf16.msra.mxu0 0
        %481 = vmatprep.subr.bf16.mxu0 0
        %482 = vmatpush1.bf16.msra.mxu0 0
        %483 = vmatprep.subr.bf16.mxu0 0
        %484 = vmatpush1.bf16.msra.mxu0 0
        %485 = vmatprep.subr.bf16.mxu0 0
        %486 = vmatpush1.bf16.msra.mxu0 0
        %487 = vmatprep.subr.bf16.mxu0 0
        %488 = vmatpush1.bf16.msra.mxu0 0
        %489 = vmatprep.subr.bf16.mxu0 0
        %490 = vmatpush1.bf16.msra.mxu0 0
        %491 = vmatprep.subr.bf16.mxu0 0
        %492 = vmatpush1.bf16.msra.mxu0 0
        %493 = vmatprep.subr.bf16.mxu0 0
        %494 = vmatpush1.bf16.msra.mxu0 0
        %495 = vmatprep.mubr.bf16.mxu0 0
        %496 = vmatmul.mubr.bf16.gmra.mrb[0].mxu0 %v458
        %v497 = vpop.f32.mrb[0].mxu0
        %v498 = vadd.f32 0.0, %v497
        %v499 = vpop.f32.mrb[0].mxu0
        %v500 = vpop.f32.mrb[0].mxu0
        %v501 = vpop.f32.mrb[0].mxu0
        %502 = vdwg.mxu0
        %v504 = vsel %vm409, %v394, 0
        %v507 = vsel %vm413, %v386, 0
        %509 = vmatprep.subr.bf16.mxu0 0
        %510 = vmatpush1.bf16.msra.mxu0 %v507
        %511 = vmatprep.subr.bf16.mxu0 0
        %512 = vmatpush1.bf16.msra.mxu0 0
        %513 = vmatprep.subr.bf16.mxu0 0
        %514 = vmatpush1.bf16.msra.mxu0 0
        %515 = vmatprep.subr.bf16.mxu0 0
        %516 = vmatpush1.bf16.msra.mxu0 0
        %517 = vmatprep.subr.bf16.mxu0 0
        %518 = vmatpush1.bf16.msra.mxu0 0
        %519 = vmatprep.subr.bf16.mxu0 0
        %520 = vmatpush1.bf16.msra.mxu0 0
        %521 = vmatprep.subr.bf16.mxu0 0
        %522 = vmatpush1.bf16.msra.mxu0 0
        %523 = vmatprep.subr.bf16.mxu0 0
        %524 = vmatpush1.bf16.msra.mxu0 0
        %525 = vmatprep.subr.bf16.mxu0 0
        %526 = vmatpush1.bf16.msra.mxu0 0
        %527 = vmatprep.subr.bf16.mxu0 0
        %528 = vmatpush1.bf16.msra.mxu0 0
        %529 = vmatprep.subr.bf16.mxu0 0
        %530 = vmatpush1.bf16.msra.mxu0 0
        %531 = vmatprep.subr.bf16.mxu0 0
        %532 = vmatpush1.bf16.msra.mxu0 0
        %533 = vmatprep.subr.bf16.mxu0 0
        %534 = vmatpush1.bf16.msra.mxu0 0
        %535 = vmatprep.subr.bf16.mxu0 0
        %536 = vmatpush1.bf16.msra.mxu0 0
        %537 = vmatprep.subr.bf16.mxu0 0
        %538 = vmatpush1.bf16.msra.mxu0 0
        %539 = vmatprep.subr.bf16.mxu0 0
        %540 = vmatpush1.bf16.msra.mxu0 0
        %541 = vmatprep.mubr.bf16.mxu0 0
        %542 = vmatmul.mubr.bf16.gmra.mrb[0].mxu0 %v504
        %v543 = vpop.f32.mrb[0].mxu0
        %v544 = vadd.f32 0.0, %v543
        %v545 = vpop.f32.mrb[0].mxu0
        %v546 = vpop.f32.mrb[0].mxu0
        %v547 = vpop.f32.mrb[0].mxu0
        %548 = vdwg.mxu0
        %v550 = vsel %vm409, %v395, 0
        %v553 = vsel %vm413, %v387, 0
        %555 = vmatprep.subr.bf16.mxu0 0
        %556 = vmatpush1.bf16.msra.mxu0 %v553
        %557 = vmatprep.subr.bf16.mxu0 0
        %558 = vmatpush1.bf16.msra.mxu0 0
        %559 = vmatprep.subr.bf16.mxu0 0
        %560 = vmatpush1.bf16.msra.mxu0 0
        %561 = vmatprep.subr.bf16.mxu0 0
        %562 = vmatpush1.bf16.msra.mxu0 0
        %563 = vmatprep.subr.bf16.mxu0 0
        %564 = vmatpush1.bf16.msra.mxu0 0
        %565 = vmatprep.subr.bf16.mxu0 0
        %566 = vmatpush1.bf16.msra.mxu0 0
        %567 = vmatprep.subr.bf16.mxu0 0
        %568 = vmatpush1.bf16.msra.mxu0 0
        %569 = vmatprep.subr.bf16.mxu0 0
        %570 = vmatpush1.bf16.msra.mxu0 0
        %571 = vmatprep.subr.bf16.mxu0 0
        %572 = vmatpush1.bf16.msra.mxu0 0
        %573 = vmatprep.subr.bf16.mxu0 0
        %574 = vmatpush1.bf16.msra.mxu0 0
        %575 = vmatprep.subr.bf16.mxu0 0
        %576 = vmatpush1.bf16.msra.mxu0 0
        %577 = vmatprep.subr.bf16.mxu0 0
        %578 = vmatpush1.bf16.msra.mxu0 0
        %579 = vmatprep.subr.bf16.mxu0 0
        %580 = vmatpush1.bf16.msra.mxu0 0
        %581 = vmatprep.subr.bf16.mxu0 0
        %582 = vmatpush1.bf16.msra.mxu0 0
        %583 = vmatprep.subr.bf16.mxu0 0
        %584 = vmatpush1.bf16.msra.mxu0 0
        %585 = vmatprep.subr.bf16.mxu0 0
        %586 = vmatpush1.bf16.msra.mxu0 0
        %587 = vmatprep.mubr.bf16.mxu0 0
        %588 = vmatmul.mubr.bf16.gmra.mrb[0].mxu0 %v550
        %v589 = vpop.f32.mrb[0].mxu0
        %v590 = vadd.f32 0.0, %v589
        %v591 = vpop.f32.mrb[0].mxu0
        %v592 = vpop.f32.mrb[0].mxu0
        %v593 = vpop.f32.mrb[0].mxu0
        %594 = vdwg.mxu0
        %v596 = vsel %vm409, %v396, 0
        %v599 = vsel %vm413, %v388, 0
        %601 = vmatprep.subr.bf16.mxu0 0
        %602 = vmatpush1.bf16.msra.mxu0 %v599
        %603 = vmatprep.subr.bf16.mxu0 0
        %604 = vmatpush1.bf16.msra.mxu0 0
        %605 = vmatprep.subr.bf16.mxu0 0
        %606 = vmatpush1.bf16.msra.mxu0 0
        %607 = vmatprep.subr.bf16.mxu0 0
        %608 = vmatpush1.bf16.msra.mxu0 0
        %609 = vmatprep.subr.bf16.mxu0 0
        %610 = vmatpush1.bf16.msra.mxu0 0
        %611 = vmatprep.subr.bf16.mxu0 0
        %612 = vmatpush1.bf16.msra.mxu0 0
        %613 = vmatprep.subr.bf16.mxu0 0
        %614 = vmatpush1.bf16.msra.mxu0 0
        %615 = vmatprep.subr.bf16.mxu0 0
        %616 = vmatpush1.bf16.msra.mxu0 0
        %617 = vmatprep.subr.bf16.mxu0 0
        %618 = vmatpush1.bf16.msra.mxu0 0
        %619 = vmatprep.subr.bf16.mxu0 0
        %620 = vmatpush1.bf16.msra.mxu0 0
        %621 = vmatprep.subr.bf16.mxu0 0
        %622 = vmatpush1.bf16.msra.mxu0 0
        %623 = vmatprep.subr.bf16.mxu0 0
        %624 = vmatpush1.bf16.msra.mxu0 0
        %625 = vmatprep.subr.bf16.mxu0 0
        %626 = vmatpush1.bf16.msra.mxu0 0
        %627 = vmatprep.subr.bf16.mxu0 0
        %628 = vmatpush1.bf16.msra.mxu0 0
        %629 = vmatprep.subr.bf16.mxu0 0
        %630 = vmatpush1.bf16.msra.mxu0 0
        %631 = vmatprep.subr.bf16.mxu0 0
        %632 = vmatpush1.bf16.msra.mxu0 0
        %633 = vmatprep.mubr.bf16.mxu0 0
        %634 = vmatmul.mubr.bf16.gmra.mrb[0].mxu0 %v596
        %v635 = vpop.f32.mrb[0].mxu0
        %v636 = vadd.f32 0.0, %v635
        %v637 = vpop.f32.mrb[0].mxu0
        %v638 = vpop.f32.mrb[0].mxu0
        %v639 = vpop.f32.mrb[0].mxu0
        %640 = vdwg.mxu0
        %v642 = vsel %vm409, %v397, 0
        %v645 = vsel %vm413, %v389, 0
        %647 = vmatprep.subr.bf16.mxu0 0
        %648 = vmatpush1.bf16.msra.mxu0 %v645
        %649 = vmatprep.subr.bf16.mxu0 0
        %650 = vmatpush1.bf16.msra.mxu0 0
        %651 = vmatprep.subr.bf16.mxu0 0
        %652 = vmatpush1.bf16.msra.mxu0 0
        %653 = vmatprep.subr.bf16.mxu0 0
        %654 = vmatpush1.bf16.msra.mxu0 0
        %655 = vmatprep.subr.bf16.mxu0 0
        %656 = vmatpush1.bf16.msra.mxu0 0
        %657 = vmatprep.subr.bf16.mxu0 0
        %658 = vmatpush1.bf16.msra.mxu0 0
        %659 = vmatprep.subr.bf16.mxu0 0
        %660 = vmatpush1.bf16.msra.mxu0 0
        %661 = vmatprep.subr.bf16.mxu0 0
        %662 = vmatpush1.bf16.msra.mxu0 0
        %663 = vmatprep.subr.bf16.mxu0 0
        %664 = vmatpush1.bf16.msra.mxu0 0
        %665 = vmatprep.subr.bf16.mxu0 0
        %666 = vmatpush1.bf16.msra.mxu0 0
        %667 = vmatprep.subr.bf16.mxu0 0
        %668 = vmatpush1.bf16.msra.mxu0 0
        %669 = vmatprep.subr.bf16.mxu0 0
        %670 = vmatpush1.bf16.msra.mxu0 0
        %671 = vmatprep.subr.bf16.mxu0 0
        %672 = vmatpush1.bf16.msra.mxu0 0
        %673 = vmatprep.subr.bf16.mxu0 0
        %674 = vmatpush1.bf16.msra.mxu0 0
        %675 = vmatprep.subr.bf16.mxu0 0
        %676 = vmatpush1.bf16.msra.mxu0 0
        %677 = vmatprep.subr.bf16.mxu0 0
        %678 = vmatpush1.bf16.msra.mxu0 0
        %679 = vmatprep.mubr.bf16.mxu0 0
        %680 = vmatmul.mubr.bf16.gmra.mrb[0].mxu0 %v642
        %v681 = vpop.f32.mrb[0].mxu0
        %v682 = vadd.f32 0.0, %v681
        %v683 = vpop.f32.mrb[0].mxu0
        %v684 = vpop.f32.mrb[0].mxu0
        %v685 = vpop.f32.mrb[0].mxu0
        %686 = vdwg.mxu0
        %v688 = vsel %vm409, %v398, 0
        %v691 = vsel %vm413, %v390, 0
        %693 = vmatprep.subr.bf16.mxu0 0
        %694 = vmatpush1.bf16.msra.mxu0 %v691
        %695 = vmatprep.subr.bf16.mxu0 0
        %696 = vmatpush1.bf16.msra.mxu0 0
        %697 = vmatprep.subr.bf16.mxu0 0
        %698 = vmatpush1.bf16.msra.mxu0 0
        %699 = vmatprep.subr.bf16.mxu0 0
        %700 = vmatpush1.bf16.msra.mxu0 0
        %701 = vmatprep.subr.bf16.mxu0 0
        %702 = vmatpush1.bf16.msra.mxu0 0
        %703 = vmatprep.subr.bf16.mxu0 0
        %704 = vmatpush1.bf16.msra.mxu0 0
        %705 = vmatprep.subr.bf16.mxu0 0
        %706 = vmatpush1.bf16.msra.mxu0 0
        %707 = vmatprep.subr.bf16.mxu0 0
        %708 = vmatpush1.bf16.msra.mxu0 0
        %709 = vmatprep.subr.bf16.mxu0 0
        %710 = vmatpush1.bf16.msra.mxu0 0
        %711 = vmatprep.subr.bf16.mxu0 0
        %712 = vmatpush1.bf16.msra.mxu0 0
        %713 = vmatprep.subr.bf16.mxu0 0
        %714 = vmatpush1.bf16.msra.mxu0 0
        %715 = vmatprep.subr.bf16.mxu0 0
        %716 = vmatpush1.bf16.msra.mxu0 0
        %717 = vmatprep.subr.bf16.mxu0 0
        %718 = vmatpush1.bf16.msra.mxu0 0
        %719 = vmatprep.subr.bf16.mxu0 0
        %720 = vmatpush1.bf16.msra.mxu0 0
        %721 = vmatprep.subr.bf16.mxu0 0
        %722 = vmatpush1.bf16.msra.mxu0 0
        %723 = vmatprep.subr.bf16.mxu0 0
        %724 = vmatpush1.bf16.msra.mxu0 0
        %725 = vmatprep.mubr.bf16.mxu0 0
        %726 = vmatmul.mubr.bf16.gmra.mrb[0].mxu0 %v688
        %v727 = vpop.f32.mrb[0].mxu0
        %v728 = vadd.f32 0.0, %v727
        %v729 = vpop.f32.mrb[0].mxu0
        %v730 = vpop.f32.mrb[0].mxu0
        %v731 = vpop.f32.mrb[0].mxu0
        %732 = vdwg.mxu0
        %v734 = vsel %vm409, %v399, 0
        %v737 = vsel %vm413, %v391, 0
        %739 = vmatprep.subr.bf16.mxu0 0
        %740 = vmatpush1.bf16.msra.mxu0 %v737
        %741 = vmatprep.subr.bf16.mxu0 0
        %742 = vmatpush1.bf16.msra.mxu0 0
        %743 = vmatprep.subr.bf16.mxu0 0
        %744 = vmatpush1.bf16.msra.mxu0 0
        %745 = vmatprep.subr.bf16.mxu0 0
        %746 = vmatpush1.bf16.msra.mxu0 0
        %747 = vmatprep.subr.bf16.mxu0 0
        %748 = vmatpush1.bf16.msra.mxu0 0
        %749 = vmatprep.subr.bf16.mxu0 0
        %750 = vmatpush1.bf16.msra.mxu0 0
        %751 = vmatprep.subr.bf16.mxu0 0
        %752 = vmatpush1.bf16.msra.mxu0 0
        %753 = vmatprep.subr.bf16.mxu0 0
        %754 = vmatpush1.bf16.msra.mxu0 0
        %755 = vmatprep.subr.bf16.mxu0 0
        %756 = vmatpush1.bf16.msra.mxu0 0
        %757 = vmatprep.subr.bf16.mxu0 0
        %758 = vmatpush1.bf16.msra.mxu0 0
        %759 = vmatprep.subr.bf16.mxu0 0
        %760 = vmatpush1.bf16.msra.mxu0 0
        %761 = vmatprep.subr.bf16.mxu0 0
        %762 = vmatpush1.bf16.msra.mxu0 0
        %763 = vmatprep.subr.bf16.mxu0 0
        %764 = vmatpush1.bf16.msra.mxu0 0
        %765 = vmatprep.subr.bf16.mxu0 0
        %766 = vmatpush1.bf16.msra.mxu0 0
        %767 = vmatprep.subr.bf16.mxu0 0
        %768 = vmatpush1.bf16.msra.mxu0 0
        %769 = vmatprep.subr.bf16.mxu0 0
        %770 = vmatpush1.bf16.msra.mxu0 0
        %771 = vmatprep.mubr.bf16.mxu0 0
        %772 = vmatmul.mubr.bf16.gmra.mrb[0].mxu0 %v734
        %v773 = vpop.f32.mrb[0].mxu0
        %v774 = vadd.f32 0.0, %v773
        %v775 = vpop.f32.mrb[0].mxu0
        %v776 = vpop.f32.mrb[0].mxu0
        %v777 = vpop.f32.mrb[0].mxu0
        %778 = vdwg.mxu0
        %v780 = vsel %vm409, %v400, 0
        %782 = vmatprep.subr.bf16.mxu0 0
        %783 = vmatpush1.bf16.msra.mxu0 %v415
        %784 = vmatprep.subr.bf16.mxu0 0
        %785 = vmatpush1.bf16.msra.mxu0 0
        %786 = vmatprep.subr.bf16.mxu0 0
        %787 = vmatpush1.bf16.msra.mxu0 0
        %788 = vmatprep.subr.bf16.mxu0 0
        %789 = vmatpush1.bf16.msra.mxu0 0
        %790 = vmatprep.subr.bf16.mxu0 0
        %791 = vmatpush1.bf16.msra.mxu0 0
        %792 = vmatprep.subr.bf16.mxu0 0
        %793 = vmatpush1.bf16.msra.mxu0 0
        %794 = vmatprep.subr.bf16.mxu0 0
        %795 = vmatpush1.bf16.msra.mxu0 0
        %796 = vmatprep.subr.bf16.mxu0 0
        %797 = vmatpush1.bf16.msra.mxu0 0
        %798 = vmatprep.subr.bf16.mxu0 0
        %799 = vmatpush1.bf16.msra.mxu0 0
        %800 = vmatprep.subr.bf16.mxu0 0
        %801 = vmatpush1.bf16.msra.mxu0 0
        %802 = vmatprep.subr.bf16.mxu0 0
        %803 = vmatpush1.bf16.msra.mxu0 0
        %804 = vmatprep.subr.bf16.mxu0 0
        %805 = vmatpush1.bf16.msra.mxu0 0
        %806 = vmatprep.subr.bf16.mxu0 0
        %807 = vmatpush1.bf16.msra.mxu0 0
        %808 = vmatprep.subr.bf16.mxu0 0
        %809 = vmatpush1.bf16.msra.mxu0 0
        %810 = vmatprep.subr.bf16.mxu0 0
        %811 = vmatpush1.bf16.msra.mxu0 0
        %812 = vmatprep.subr.bf16.mxu0 0
        %813 = vmatpush1.bf16.msra.mxu0 0
        %814 = vmatprep.mubr.bf16.mxu0 0
        %815 = vmatmul.mubr.bf16.gmra.mrb[0].mxu0 %v780
        %v816 = vpop.f32.mrb[0].mxu0
        %v817 = vadd.f32 0.0, %v816
        %v818 = vpop.f32.mrb[0].mxu0
        %v819 = vpop.f32.mrb[0].mxu0
        %v820 = vpop.f32.mrb[0].mxu0
        %821 = vdwg.mxu0
        %v823 = vsel %vm409, %v401, 0
        %825 = vmatprep.subr.bf16.mxu0 0
        %826 = vmatpush1.bf16.msra.mxu0 %v461
        %827 = vmatprep.subr.bf16.mxu0 0
        %828 = vmatpush1.bf16.msra.mxu0 0
        %829 = vmatprep.subr.bf16.mxu0 0
        %830 = vmatpush1.bf16.msra.mxu0 0
        %831 = vmatprep.subr.bf16.mxu0 0
        %832 = vmatpush1.bf16.msra.mxu0 0
        %833 = vmatprep.subr.bf16.mxu0 0
        %834 = vmatpush1.bf16.msra.mxu0 0
        %835 = vmatprep.subr.bf16.mxu0 0
        %836 = vmatpush1.bf16.msra.mxu0 0
        %837 = vmatprep.subr.bf16.mxu0 0
        %838 = vmatpush1.bf16.msra.mxu0 0
        %839 = vmatprep.subr.bf16.mxu0 0
        %840 = vmatpush1.bf16.msra.mxu0 0
        %841 = vmatprep.subr.bf16.mxu0 0
        %842 = vmatpush1.bf16.msra.mxu0 0
        %843 = vmatprep.subr.bf16.mxu0 0
        %844 = vmatpush1.bf16.msra.mxu0 0
        %845 = vmatprep.subr.bf16.mxu0 0
        %846 = vmatpush1.bf16.msra.mxu0 0
        %847 = vmatprep.subr.bf16.mxu0 0
        %848 = vmatpush1.bf16.msra.mxu0 0
        %849 = vmatprep.subr.bf16.mxu0 0
        %850 = vmatpush1.bf16.msra.mxu0 0
        %851 = vmatprep.subr.bf16.mxu0 0
        %852 = vmatpush1.bf16.msra.mxu0 0
        %853 = vmatprep.subr.bf16.mxu0 0
        %854 = vmatpush1.bf16.msra.mxu0 0
        %855 = vmatprep.subr.bf16.mxu0 0
        %856 = vmatpush1.bf16.msra.mxu0 0
        %857 = vmatprep.mubr.bf16.mxu0 0
        %858 = vmatmul.mubr.bf16.gmra.mrb[0].mxu0 %v823
        %v859 = vpop.f32.mrb[0].mxu0
        %v860 = vadd.f32 0.0, %v859
        %v861 = vpop.f32.mrb[0].mxu0
        %v862 = vpop.f32.mrb[0].mxu0
        %v863 = vpop.f32.mrb[0].mxu0
        %864 = vdwg.mxu0
        %v866 = vsel %vm409, %v402, 0
        %868 = vmatprep.subr.bf16.mxu0 0
        %869 = vmatpush1.bf16.msra.mxu0 %v507
        %870 = vmatprep.subr.bf16.mxu0 0
        %871 = vmatpush1.bf16.msra.mxu0 0
        %872 = vmatprep.subr.bf16.mxu0 0
        %873 = vmatpush1.bf16.msra.mxu0 0
        %874 = vmatprep.subr.bf16.mxu0 0
        %875 = vmatpush1.bf16.msra.mxu0 0
        %876 = vmatprep.subr.bf16.mxu0 0
        %877 = vmatpush1.bf16.msra.mxu0 0
        %878 = vmatprep.subr.bf16.mxu0 0
        %879 = vmatpush1.bf16.msra.mxu0 0
        %880 = vmatprep.subr.bf16.mxu0 0
        %881 = vmatpush1.bf16.msra.mxu0 0
        %882 = vmatprep.subr.bf16.mxu0 0
        %883 = vmatpush1.bf16.msra.mxu0 0
        %884 = vmatprep.subr.bf16.mxu0 0
        %885 = vmatpush1.bf16.msra.mxu0 0
        %886 = vmatprep.subr.bf16.mxu0 0
        %887 = vmatpush1.bf16.msra.mxu0 0
        %888 = vmatprep.subr.bf16.mxu0 0
        %889 = vmatpush1.bf16.msra.mxu0 0
        %890 = vmatprep.subr.bf16.mxu0 0
        %891 = vmatpush1.bf16.msra.mxu0 0
        %892 = vmatprep.subr.bf16.mxu0 0
        %893 = vmatpush1.bf16.msra.mxu0 0
        %894 = vmatprep.subr.bf16.mxu0 0
        %895 = vmatpush1.bf16.msra.mxu0 0
        %896 = vmatprep.subr.bf16.mxu0 0
        %897 = vmatpush1.bf16.msra.mxu0 0
        %898 = vmatprep.subr.bf16.mxu0 0
        %899 = vmatpush1.bf16.msra.mxu0 0
        %900 = vmatprep.mubr.bf16.mxu0 0
        %901 = vmatmul.mubr.bf16.gmra.mrb[0].mxu0 %v866
        %v902 = vpop.f32.mrb[0].mxu0
        %v903 = vadd.f32 0.0, %v902
        %v904 = vpop.f32.mrb[0].mxu0
        %v905 = vpop.f32.mrb[0].mxu0
        %v906 = vpop.f32.mrb[0].mxu0
        %907 = vdwg.mxu0
        %v909 = vsel %vm409, %v403, 0
        %911 = vmatprep.subr.bf16.mxu0 0
        %912 = vmatpush1.bf16.msra.mxu0 %v553
        %913 = vmatprep.subr.bf16.mxu0 0
        %914 = vmatpush1.bf16.msra.mxu0 0
        %915 = vmatprep.subr.bf16.mxu0 0
        %916 = vmatpush1.bf16.msra.mxu0 0
        %917 = vmatprep.subr.bf16.mxu0 0
        %918 = vmatpush1.bf16.msra.mxu0 0
        %919 = vmatprep.subr.bf16.mxu0 0
        %920 = vmatpush1.bf16.msra.mxu0 0
        %921 = vmatprep.subr.bf16.mxu0 0
        %922 = vmatpush1.bf16.msra.mxu0 0
        %923 = vmatprep.subr.bf16.mxu0 0
        %924 = vmatpush1.bf16.msra.mxu0 0
        %925 = vmatprep.subr.bf16.mxu0 0
        %926 = vmatpush1.bf16.msra.mxu0 0
        %927 = vmatprep.subr.bf16.mxu0 0
        %928 = vmatpush1.bf16.msra.mxu0 0
        %929 = vmatprep.subr.bf16.mxu0 0
        %930 = vmatpush1.bf16.msra.mxu0 0
        %931 = vmatprep.subr.bf16.mxu0 0
        %932 = vmatpush1.bf16.msra.mxu0 0
        %933 = vmatprep.subr.bf16.mxu0 0
        %934 = vmatpush1.bf16.msra.mxu0 0
        %935 = vmatprep.subr.bf16.mxu0 0
        %936 = vmatpush1.bf16.msra.mxu0 0
        %937 = vmatprep.subr.bf16.mxu0 0
        %938 = vmatpush1.bf16.msra.mxu0 0
        %939 = vmatprep.subr.bf16.mxu0 0
        %940 = vmatpush1.bf16.msra.mxu0 0
        %941 = vmatprep.subr.bf16.mxu0 0
        %942 = vmatpush1.bf16.msra.mxu0 0
        %943 = vmatprep.mubr.bf16.mxu0 0
        %944 = vmatmul.mubr.bf16.gmra.mrb[0].mxu0 %v909
        %v945 = vpop.f32.mrb[0].mxu0
        %v946 = vadd.f32 0.0, %v945
        %v947 = vpop.f32.mrb[0].mxu0
        %v948 = vpop.f32.mrb[0].mxu0
        %v949 = vpop.f32.mrb[0].mxu0
        %950 = vdwg.mxu0
        %v952 = vsel %vm409, %v404, 0
        %954 = vmatprep.subr.bf16.mxu0 0
        %955 = vmatpush1.bf16.msra.mxu0 %v599
        %956 = vmatprep.subr.bf16.mxu0 0
        %957 = vmatpush1.bf16.msra.mxu0 0
        %958 = vmatprep.subr.bf16.mxu0 0
        %959 = vmatpush1.bf16.msra.mxu0 0
        %960 = vmatprep.subr.bf16.mxu0 0
        %961 = vmatpush1.bf16.msra.mxu0 0
        %962 = vmatprep.subr.bf16.mxu0 0
        %963 = vmatpush1.bf16.msra.mxu0 0
        %964 = vmatprep.subr.bf16.mxu0 0
        %965 = vmatpush1.bf16.msra.mxu0 0
        %966 = vmatprep.subr.bf16.mxu0 0
        %967 = vmatpush1.bf16.msra.mxu0 0
        %968 = vmatprep.subr.bf16.mxu0 0
        %969 = vmatpush1.bf16.msra.mxu0 0
        %970 = vmatprep.subr.bf16.mxu0 0
        %971 = vmatpush1.bf16.msra.mxu0 0
        %972 = vmatprep.subr.bf16.mxu0 0
        %973 = vmatpush1.bf16.msra.mxu0 0
        %974 = vmatprep.subr.bf16.mxu0 0
        %975 = vmatpush1.bf16.msra.mxu0 0
        %976 = vmatprep.subr.bf16.mxu0 0
        %977 = vmatpush1.bf16.msra.mxu0 0
        %978 = vmatprep.subr.bf16.mxu0 0
        %979 = vmatpush1.bf16.msra.mxu0 0
        %980 = vmatprep.subr.bf16.mxu0 0
        %981 = vmatpush1.bf16.msra.mxu0 0
        %982 = vmatprep.subr.bf16.mxu0 0
        %983 = vmatpush1.bf16.msra.mxu0 0
        %984 = vmatprep.subr.bf16.mxu0 0
        %985 = vmatpush1.bf16.msra.mxu0 0
        %986 = vmatprep.mubr.bf16.mxu0 0
        %987 = vmatmul.mubr.bf16.gmra.mrb[0].mxu0 %v952
        %v988 = vpop.f32.mrb[0].mxu0
        %v989 = vadd.f32 0.0, %v988
        %v990 = vpop.f32.mrb[0].mxu0
        %v991 = vpop.f32.mrb[0].mxu0
        %v992 = vpop.f32.mrb[0].mxu0
        %993 = vdwg.mxu0
        %v995 = vsel %vm409, %v405, 0
        %997 = vmatprep.subr.bf16.mxu0 0
        %998 = vmatpush1.bf16.msra.mxu0 %v645
        %999 = vmatprep.subr.bf16.mxu0 0
        %1000 = vmatpush1.bf16.msra.mxu0 0
        %1001 = vmatprep.subr.bf16.mxu0 0
        %1002 = vmatpush1.bf16.msra.mxu0 0
        %1003 = vmatprep.subr.bf16.mxu0 0
        %1004 = vmatpush1.bf16.msra.mxu0 0
        %1005 = vmatprep.subr.bf16.mxu0 0
        %1006 = vmatpush1.bf16.msra.mxu0 0
        %1007 = vmatprep.subr.bf16.mxu0 0
        %1008 = vmatpush1.bf16.msra.mxu0 0
        %1009 = vmatprep.subr.bf16.mxu0 0
        %1010 = vmatpush1.bf16.msra.mxu0 0
        %1011 = vmatprep.subr.bf16.mxu0 0
        %1012 = vmatpush1.bf16.msra.mxu0 0
        %1013 = vmatprep.subr.bf16.mxu0 0
        %1014 = vmatpush1.bf16.msra.mxu0 0
        %1015 = vmatprep.subr.bf16.mxu0 0
        %1016 = vmatpush1.bf16.msra.mxu0 0
        %1017 = vmatprep.subr.bf16.mxu0 0
        %1018 = vmatpush1.bf16.msra.mxu0 0
        %1019 = vmatprep.subr.bf16.mxu0 0
        %1020 = vmatpush1.bf16.msra.mxu0 0
        %1021 = vmatprep.subr.bf16.mxu0 0
        %1022 = vmatpush1.bf16.msra.mxu0 0
        %1023 = vmatprep.subr.bf16.mxu0 0
        %1024 = vmatpush1.bf16.msra.mxu0 0
        %1025 = vmatprep.subr.bf16.mxu0 0
        %1026 = vmatpush1.bf16.msra.mxu0 0
        %1027 = vmatprep.subr.bf16.mxu0 0
        %1028 = vmatpush1.bf16.msra.mxu0 0
        %1029 = vmatprep.mubr.bf16.mxu0 0
        %1030 = vmatmul.mubr.bf16.gmra.mrb[0].mxu0 %v995
        %v1031 = vpop.f32.mrb[0].mxu0
        %v1032 = vadd.f32 0.0, %v1031
        %v1033 = vpop.f32.mrb[0].mxu0
        %v1034 = vpop.f32.mrb[0].mxu0
        %v1035 = vpop.f32.mrb[0].mxu0
        %1036 = vdwg.mxu0
        %v1038 = vsel %vm409, %v406, 0
        %1040 = vmatprep.subr.bf16.mxu0 0
        %1041 = vmatpush1.bf16.msra.mxu0 %v691
        %1042 = vmatprep.subr.bf16.mxu0 0
        %1043 = vmatpush1.bf16.msra.mxu0 0
        %1044 = vmatprep.subr.bf16.mxu0 0
        %1045 = vmatpush1.bf16.msra.mxu0 0
        %1046 = vmatprep.subr.bf16.mxu0 0
        %1047 = vmatpush1.bf16.msra.mxu0 0
        %1048 = vmatprep.subr.bf16.mxu0 0
        %1049 = vmatpush1.bf16.msra.mxu0 0
        %1050 = vmatprep.subr.bf16.mxu0 0
        %1051 = vmatpush1.bf16.msra.mxu0 0
        %1052 = vmatprep.subr.bf16.mxu0 0
        %1053 = vmatpush1.bf16.msra.mxu0 0
        %1054 = vmatprep.subr.bf16.mxu0 0
        %1055 = vmatpush1.bf16.msra.mxu0 0
        %1056 = vmatprep.subr.bf16.mxu0 0
        %1057 = vmatpush1.bf16.msra.mxu0 0
        %1058 = vmatprep.subr.bf16.mxu0 0
        %1059 = vmatpush1.bf16.msra.mxu0 0
        %1060 = vmatprep.subr.bf16.mxu0 0
        %1061 = vmatpush1.bf16.msra.mxu0 0
        %1062 = vmatprep.subr.bf16.mxu0 0
        %1063 = vmatpush1.bf16.msra.mxu0 0
        %1064 = vmatprep.subr.bf16.mxu0 0
        %1065 = vmatpush1.bf16.msra.mxu0 0
        %1066 = vmatprep.subr.bf16.mxu0 0
        %1067 = vmatpush1.bf16.msra.mxu0 0
        %1068 = vmatprep.subr.bf16.mxu0 0
        %1069 = vmatpush1.bf16.msra.mxu0 0
        %1070 = vmatprep.subr.bf16.mxu0 0
        %1071 = vmatpush1.bf16.msra.mxu0 0
        %1072 = vmatprep.mubr.bf16.mxu0 0
        %1073 = vmatmul.mubr.bf16.gmra.mrb[0].mxu0 %v1038
        %v1074 = vpop.f32.mrb[0].mxu0
        %v1075 = vadd.f32 0.0, %v1074
        %v1076 = vpop.f32.mrb[0].mxu0
        %v1077 = vpop.f32.mrb[0].mxu0
        %v1078 = vpop.f32.mrb[0].mxu0
        %1079 = vdwg.mxu0
        %v1081 = vsel %vm409, %v407, 0
        %1083 = vmatprep.subr.bf16.mxu0 0
        %1084 = vmatpush1.bf16.msra.mxu0 %v737
        %1085 = vmatprep.subr.bf16.mxu0 0
        %1086 = vmatpush1.bf16.msra.mxu0 0
        %1087 = vmatprep.subr.bf16.mxu0 0
        %1088 = vmatpush1.bf16.msra.mxu0 0
        %1089 = vmatprep.subr.bf16.mxu0 0
        %1090 = vmatpush1.bf16.msra.mxu0 0
        %1091 = vmatprep.subr.bf16.mxu0 0
        %1092 = vmatpush1.bf16.msra.mxu0 0
        %1093 = vmatprep.subr.bf16.mxu0 0
        %1094 = vmatpush1.bf16.msra.mxu0 0
        %1095 = vmatprep.subr.bf16.mxu0 0
        %1096 = vmatpush1.bf16.msra.mxu0 0
        %1097 = vmatprep.subr.bf16.mxu0 0
        %1098 = vmatpush1.bf16.msra.mxu0 0
        %1099 = vmatprep.subr.bf16.mxu0 0
        %1100 = vmatpush1.bf16.msra.mxu0 0
        %1101 = vmatprep.subr.bf16.mxu0 0
        %1102 = vmatpush1.bf16.msra.mxu0 0
        %1103 = vmatprep.subr.bf16.mxu0 0
        %1104 = vmatpush1.bf16.msra.mxu0 0
        %1105 = vmatprep.subr.bf16.mxu0 0
        %1106 = vmatpush1.bf16.msra.mxu0 0
        %1107 = vmatprep.subr.bf16.mxu0 0
        %1108 = vmatpush1.bf16.msra.mxu0 0
        %1109 = vmatprep.subr.bf16.mxu0 0
        %1110 = vmatpush1.bf16.msra.mxu0 0
        %1111 = vmatprep.subr.bf16.mxu0 0
        %1112 = vmatpush1.bf16.msra.mxu0 0
        %1113 = vmatprep.subr.bf16.mxu0 0
        %1114 = vmatpush1.bf16.msra.mxu0 0
        %1115 = vmatprep.mubr.bf16.mxu0 0
        %1116 = vmatmul.mubr.bf16.gmra.mrb[0].mxu0 %v1081
        %v1117 = vpop.f32.mrb[0].mxu0
        %v1118 = vadd.f32 0.0, %v1117
        %v1119 = vpop.f32.mrb[0].mxu0
        %v1120 = vpop.f32.mrb[0].mxu0
        %v1121 = vpop.f32.mrb[0].mxu0
        %1122 = vdwg.mxu0
        %v1123 = vpack.c.bf16 %v452, %v452
        %v1124 = vpack.c.bf16 %v498, %v498
        %v1125 = vpack.c.bf16 %v544, %v544
        %v1126 = vpack.c.bf16 %v590, %v590
        %v1127 = vpack.c.bf16 %v636, %v636
        %v1128 = vpack.c.bf16 %v682, %v682
        %v1129 = vpack.c.bf16 %v728, %v728
        %v1130 = vpack.c.bf16 %v774, %v774
        %v1131 = vpack.c.bf16 %v817, %v817
        %v1132 = vpack.c.bf16 %v860, %v860
        %v1133 = vpack.c.bf16 %v903, %v903
        %v1134 = vpack.c.bf16 %v946, %v946
        %v1135 = vpack.c.bf16 %v989, %v989
        %v1136 = vpack.c.bf16 %v1032, %v1032
        %v1137 = vpack.c.bf16 %v1075, %v1075
        %v1138 = vpack.c.bf16 %v1118, %v1118
        %s1139 = scalar_lea.vmem %s2, 4
        %v1140 = vld [vmem:[%s1139] sm:$0xf]
        %v1149 = vunpack.c.l.b16 %v1123
        %v1150 = vunpack.c.l.b16 %v1124
        %v1151 = vunpack.c.l.b16 %v1125
        %v1152 = vunpack.c.l.b16 %v1126
        %v1153 = vunpack.c.l.b16 %v1127
        %v1154 = vunpack.c.l.b16 %v1128
        %v1155 = vunpack.c.l.b16 %v1129
        %v1156 = vunpack.c.l.b16 %v1130
        %v1157 = vpack.c.b16 %v1150, %v1149
        %v1158 = vpack.c.b16 %v1152, %v1151
        %v1159 = vpack.c.b16 %v1154, %v1153
        %v1160 = vpack.c.b16 %v1156, %v1155
        %v1162 = vsel %vm409, %v1157, 0
        %v1165 = vsel %vm409, %v1158, 0
        %v1168 = vsel %vm409, %v1159, 0
        %v1171 = vsel %vm409, %v1160, 0
        %v1174 = vsel %vm413, %v1140, 0
        %1176 = vmatprep.subr.bf16.mxu0 0
        %1177 = vmatpush1.bf16.msra.mxu0 %v1174
        %1178 = vmatprep.subr.bf16.mxu0 0
        %1179 = vmatpush1.bf16.msra.mxu0 0
        %1180 = vmatprep.subr.bf16.mxu0 0
        %1181 = vmatpush1.bf16.msra.mxu0 0
        %1182 = vmatprep.subr.bf16.mxu0 0
        %1183 = vmatpush1.bf16.msra.mxu0 0
        %1184 = vmatprep.subr.bf16.mxu0 0
        %1185 = vmatpush1.bf16.msra.mxu0 0
        %1186 = vmatprep.subr.bf16.mxu0 0
        %1187 = vmatpush1.bf16.msra.mxu0 0
        %1188 = vmatprep.subr.bf16.mxu0 0
        %1189 = vmatpush1.bf16.msra.mxu0 0
        %1190 = vmatprep.subr.bf16.mxu0 0
        %1191 = vmatpush1.bf16.msra.mxu0 0
        %1192 = vmatprep.subr.bf16.mxu0 0
        %1193 = vmatpush1.bf16.msra.mxu0 0
        %1194 = vmatprep.subr.bf16.mxu0 0
        %1195 = vmatpush1.bf16.msra.mxu0 0
        %1196 = vmatprep.subr.bf16.mxu0 0
        %1197 = vmatpush1.bf16.msra.mxu0 0
        %1198 = vmatprep.subr.bf16.mxu0 0
        %1199 = vmatpush1.bf16.msra.mxu0 0
        %1200 = vmatprep.subr.bf16.mxu0 0
        %1201 = vmatpush1.bf16.msra.mxu0 0
        %1202 = vmatprep.subr.bf16.mxu0 0
        %1203 = vmatpush1.bf16.msra.mxu0 0
        %1204 = vmatprep.subr.bf16.mxu0 0
        %1205 = vmatpush1.bf16.msra.mxu0 0
        %1206 = vmatprep.subr.bf16.mxu0 0
        %1207 = vmatpush1.bf16.msra.mxu0 0
        %1208 = vmatprep.mubr.bf16.mxu0 0
        %1209 = vmatmul.mubr.bf16.gmra.mrb[0].mxu0 %v1162
        %v1210 = vpop.f32.mrb[0].mxu0
        %v1211 = vadd.f32 0.0, %v1210
        %v1212 = vpop.f32.mrb[0].mxu0
        %v1213 = vpop.f32.mrb[0].mxu0
        %v1214 = vadd.f32 0.0, %v1213
        %v1215 = vpop.f32.mrb[0].mxu0
        %1216 = vmatprep.mubr.bf16.mxu0 0
        %1217 = vmatmul.mubr.bf16.gmra.mrb[0].mxu0 %v1165
        %v1218 = vpop.f32.mrb[0].mxu0
        %v1219 = vadd.f32 0.0, %v1218
        %v1220 = vpop.f32.mrb[0].mxu0
        %v1221 = vpop.f32.mrb[0].mxu0
        %v1222 = vadd.f32 0.0, %v1221
        %v1223 = vpop.f32.mrb[0].mxu0
        %1224 = vmatprep.mubr.bf16.mxu0 0
        %1225 = vmatmul.mubr.bf16.gmra.mrb[0].mxu0 %v1168
        %v1226 = vpop.f32.mrb[0].mxu0
        %v1227 = vadd.f32 0.0, %v1226
        %v1228 = vpop.f32.mrb[0].mxu0
        %v1229 = vpop.f32.mrb[0].mxu0
        %v1230 = vadd.f32 0.0, %v1229
        %v1231 = vpop.f32.mrb[0].mxu0
        %1232 = vmatprep.mubr.bf16.mxu0 0
        %1233 = vmatmul.mubr.bf16.gmra.mrb[0].mxu0 %v1171
        %v1234 = vpop.f32.mrb[0].mxu0
        %v1235 = vadd.f32 0.0, %v1234
        %v1236 = vpop.f32.mrb[0].mxu0
        %v1237 = vpop.f32.mrb[0].mxu0
        %v1238 = vadd.f32 0.0, %v1237
        %v1239 = vpop.f32.mrb[0].mxu0
        %1240 = vdwg.mxu0
        %v1249 = vunpack.c.l.b16 %v384
        %v1250 = vunpack.c.l.b16 %v385
        %v1251 = vunpack.c.l.b16 %v386
        %v1252 = vunpack.c.l.b16 %v387
        %v1253 = vunpack.c.l.b16 %v388
        %v1254 = vunpack.c.l.b16 %v389
        %v1255 = vunpack.c.l.b16 %v390
        %v1256 = vunpack.c.l.b16 %v391
        %v1257 = vpack.c.b16 %v1250, %v1249
        %v1258 = vpack.c.b16 %v1252, %v1251
        %v1259 = vpack.c.b16 %v1254, %v1253
        %v1260 = vpack.c.b16 %v1256, %v1255
        %v1262 = vsel %vm409, %v1257, 0
        %v1265 = vsel %vm409, %v1258, 0
        %v1268 = vsel %vm409, %v1259, 0
        %v1271 = vsel %vm409, %v1260, 0
        %v1274 = vsel %vm413, %v408, 0
        %1276 = vmatprep.subr.bf16.mxu0 0
        %1277 = vmatpush1.bf16.msra.mxu0 %v1274
        %1278 = vmatprep.subr.bf16.mxu0 0
        %1279 = vmatpush1.bf16.msra.mxu0 0
        %1280 = vmatprep.subr.bf16.mxu0 0
        %1281 = vmatpush1.bf16.msra.mxu0 0
        %1282 = vmatprep.subr.bf16.mxu0 0
        %1283 = vmatpush1.bf16.msra.mxu0 0
        %1284 = vmatprep.subr.bf16.mxu0 0
        %1285 = vmatpush1.bf16.msra.mxu0 0
        %1286 = vmatprep.subr.bf16.mxu0 0
        %1287 = vmatpush1.bf16.msra.mxu0 0
        %1288 = vmatprep.subr.bf16.mxu0 0
        %1289 = vmatpush1.bf16.msra.mxu0 0
        %1290 = vmatprep.subr.bf16.mxu0 0
        %1291 = vmatpush1.bf16.msra.mxu0 0
        %1292 = vmatprep.subr.bf16.mxu0 0
        %1293 = vmatpush1.bf16.msra.mxu0 0
        %1294 = vmatprep.subr.bf16.mxu0 0
        %1295 = vmatpush1.bf16.msra.mxu0 0
        %1296 = vmatprep.subr.bf16.mxu0 0
        %1297 = vmatpush1.bf16.msra.mxu0 0
        %1298 = vmatprep.subr.bf16.mxu0 0
        %1299 = vmatpush1.bf16.msra.mxu0 0
        %1300 = vmatprep.subr.bf16.mxu0 0
        %1301 = vmatpush1.bf16.msra.mxu0 0
        %1302 = vmatprep.subr.bf16.mxu0 0
        %1303 = vmatpush1.bf16.msra.mxu0 0
        %1304 = vmatprep.subr.bf16.mxu0 0
        %1305 = vmatpush1.bf16.msra.mxu0 0
        %1306 = vmatprep.subr.bf16.mxu0 0
        %1307 = vmatpush1.bf16.msra.mxu0 0
        %1308 = vmatprep.mubr.bf16.mxu0 0
        %1309 = vmatmul.mubr.bf16.gmra.mrb[0].mxu0 %v1262
        %v1310 = vpop.f32.mrb[0].mxu0
        %v1311 = vadd.f32 %v1211, %v1310
        %v1312 = vpop.f32.mrb[0].mxu0
        %v1313 = vpop.f32.mrb[0].mxu0
        %v1314 = vadd.f32 %v1214, %v1313
        %v1315 = vpop.f32.mrb[0].mxu0
        %1316 = vmatprep.mubr.bf16.mxu0 0
        %1317 = vmatmul.mubr.bf16.gmra.mrb[0].mxu0 %v1265
        %v1318 = vpop.f32.mrb[0].mxu0
        %v1319 = vadd.f32 %v1219, %v1318
        %v1320 = vpop.f32.mrb[0].mxu0
        %v1321 = vpop.f32.mrb[0].mxu0
        %v1322 = vadd.f32 %v1222, %v1321
        %v1323 = vpop.f32.mrb[0].mxu0
        %1324 = vmatprep.mubr.bf16.mxu0 0
        %1325 = vmatmul.mubr.bf16.gmra.mrb[0].mxu0 %v1268
        %v1326 = vpop.f32.mrb[0].mxu0
        %v1327 = vadd.f32 %v1227, %v1326
        %v1328 = vpop.f32.mrb[0].mxu0
        %v1329 = vpop.f32.mrb[0].mxu0
        %v1330 = vadd.f32 %v1230, %v1329
        %v1331 = vpop.f32.mrb[0].mxu0
        %1332 = vmatprep.mubr.bf16.mxu0 0
        %1333 = vmatmul.mubr.bf16.gmra.mrb[0].mxu0 %v1271
        %v1334 = vpop.f32.mrb[0].mxu0
        %v1335 = vadd.f32 %v1235, %v1334
        %v1336 = vpop.f32.mrb[0].mxu0
        %v1337 = vpop.f32.mrb[0].mxu0
        %v1338 = vadd.f32 %v1238, %v1337
        %v1339 = vpop.f32.mrb[0].mxu0
        %1340 = vdwg.mxu0
        %s1341 = scalar_lea.vmem %s2, 8
        %v1342 = vld [vmem:[%s1341] sm:$0xf]
        %v1351 = vunpack.c.l.b16 %v1131
        %v1352 = vunpack.c.l.b16 %v1132
        %v1353 = vunpack.c.l.b16 %v1133
        %v1354 = vunpack.c.l.b16 %v1134
        %v1355 = vunpack.c.l.b16 %v1135
        %v1356 = vunpack.c.l.b16 %v1136
        %v1357 = vunpack.c.l.b16 %v1137
        %v1358 = vunpack.c.l.b16 %v1138
        %v1359 = vpack.c.b16 %v1352, %v1351
        %v1360 = vpack.c.b16 %v1354, %v1353
        %v1361 = vpack.c.b16 %v1356, %v1355
        %v1362 = vpack.c.b16 %v1358, %v1357
        %v1364 = vsel %vm409, %v1359, 0
        %v1367 = vsel %vm409, %v1360, 0
        %v1370 = vsel %vm409, %v1361, 0
        %v1373 = vsel %vm409, %v1362, 0
        %v1376 = vsel %vm413, %v1342, 0
        %1378 = vmatprep.subr.bf16.mxu0 0
        %1379 = vmatpush1.bf16.msra.mxu0 %v1376
        %1380 = vmatprep.subr.bf16.mxu0 0
        %1381 = vmatpush1.bf16.msra.mxu0 0
        %1382 = vmatprep.subr.bf16.mxu0 0
        %1383 = vmatpush1.bf16.msra.mxu0 0
        %1384 = vmatprep.subr.bf16.mxu0 0
        %1385 = vmatpush1.bf16.msra.mxu0 0
        %1386 = vmatprep.subr.bf16.mxu0 0
        %1387 = vmatpush1.bf16.msra.mxu0 0
        %1388 = vmatprep.subr.bf16.mxu0 0
        %1389 = vmatpush1.bf16.msra.mxu0 0
        %1390 = vmatprep.subr.bf16.mxu0 0
        %1391 = vmatpush1.bf16.msra.mxu0 0
        %1392 = vmatprep.subr.bf16.mxu0 0
        %1393 = vmatpush1.bf16.msra.mxu0 0
        %1394 = vmatprep.subr.bf16.mxu0 0
        %1395 = vmatpush1.bf16.msra.mxu0 0
        %1396 = vmatprep.subr.bf16.mxu0 0
        %1397 = vmatpush1.bf16.msra.mxu0 0
        %1398 = vmatprep.subr.bf16.mxu0 0
        %1399 = vmatpush1.bf16.msra.mxu0 0
        %1400 = vmatprep.subr.bf16.mxu0 0
        %1401 = vmatpush1.bf16.msra.mxu0 0
        %1402 = vmatprep.subr.bf16.mxu0 0
        %1403 = vmatpush1.bf16.msra.mxu0 0
        %1404 = vmatprep.subr.bf16.mxu0 0
        %1405 = vmatpush1.bf16.msra.mxu0 0
        %1406 = vmatprep.subr.bf16.mxu0 0
        %1407 = vmatpush1.bf16.msra.mxu0 0
        %1408 = vmatprep.subr.bf16.mxu0 0
        %1409 = vmatpush1.bf16.msra.mxu0 0
        %1410 = vmatprep.mubr.bf16.mxu0 0
        %1411 = vmatmul.mubr.bf16.gmra.mrb[0].mxu0 %v1364
        %v1412 = vpop.f32.mrb[0].mxu0
        %v1413 = vadd.f32 0.0, %v1412
        %v1414 = vpop.f32.mrb[0].mxu0
        %v1415 = vpop.f32.mrb[0].mxu0
        %v1416 = vadd.f32 0.0, %v1415
        %v1417 = vpop.f32.mrb[0].mxu0
        %1418 = vmatprep.mubr.bf16.mxu0 0
        %1419 = vmatmul.mubr.bf16.gmra.mrb[0].mxu0 %v1367
        %v1420 = vpop.f32.mrb[0].mxu0
        %v1421 = vadd.f32 0.0, %v1420
        %v1422 = vpop.f32.mrb[0].mxu0
        %v1423 = vpop.f32.mrb[0].mxu0
        %v1424 = vadd.f32 0.0, %v1423
        %v1425 = vpop.f32.mrb[0].mxu0
        %1426 = vmatprep.mubr.bf16.mxu0 0
        %1427 = vmatmul.mubr.bf16.gmra.mrb[0].mxu0 %v1370
        %v1428 = vpop.f32.mrb[0].mxu0
        %v1429 = vadd.f32 0.0, %v1428
        %v1430 = vpop.f32.mrb[0].mxu0
        %v1431 = vpop.f32.mrb[0].mxu0
        %v1432 = vadd.f32 0.0, %v1431
        %v1433 = vpop.f32.mrb[0].mxu0
        %1434 = vmatprep.mubr.bf16.mxu0 0
        %1435 = vmatmul.mubr.bf16.gmra.mrb[0].mxu0 %v1373
        %v1436 = vpop.f32.mrb[0].mxu0
        %v1437 = vadd.f32 0.0, %v1436
        %v1438 = vpop.f32.mrb[0].mxu0
        %v1439 = vpop.f32.mrb[0].mxu0
        %v1440 = vadd.f32 0.0, %v1439
        %v1441 = vpop.f32.mrb[0].mxu0
        %1442 = vdwg.mxu0
        %v1443 = vadd.f32 %v1311, %v1413
        %v1444 = vadd.f32 %v1314, %v1416
        %v1445 = vadd.f32 %v1319, %v1421
        %v1446 = vadd.f32 %v1322, %v1424
        %v1447 = vadd.f32 %v1327, %v1429
        %v1448 = vadd.f32 %v1330, %v1432
        %v1449 = vadd.f32 %v1335, %v1437
        %v1450 = vadd.f32 %v1338, %v1440
        %v1452 = vsel %vm413, %v1123, 0
        %1454 = vmatprep.subr.bf16.mxu0 0
        %1455 = vmatpush1.bf16.msra.mxu0 %v1452
        %1456 = vmatprep.subr.bf16.mxu0 0
        %1457 = vmatpush1.bf16.msra.mxu0 0
        %1458 = vmatprep.subr.bf16.mxu0 0
        %1459 = vmatpush1.bf16.msra.mxu0 0
        %1460 = vmatprep.subr.bf16.mxu0 0
        %1461 = vmatpush1.bf16.msra.mxu0 0
        %1462 = vmatprep.subr.bf16.mxu0 0
        %1463 = vmatpush1.bf16.msra.mxu0 0
        %1464 = vmatprep.subr.bf16.mxu0 0
        %1465 = vmatpush1.bf16.msra.mxu0 0
        %1466 = vmatprep.subr.bf16.mxu0 0
        %1467 = vmatpush1.bf16.msra.mxu0 0
        %1468 = vmatprep.subr.bf16.mxu0 0
        %1469 = vmatpush1.bf16.msra.mxu0 0
        %1470 = vmatprep.subr.bf16.mxu0 0
        %1471 = vmatpush1.bf16.msra.mxu0 0
        %1472 = vmatprep.subr.bf16.mxu0 0
        %1473 = vmatpush1.bf16.msra.mxu0 0
        %1474 = vmatprep.subr.bf16.mxu0 0
        %1475 = vmatpush1.bf16.msra.mxu0 0
        %1476 = vmatprep.subr.bf16.mxu0 0
        %1477 = vmatpush1.bf16.msra.mxu0 0
        %1478 = vmatprep.subr.bf16.mxu0 0
        %1479 = vmatpush1.bf16.msra.mxu0 0
        %1480 = vmatprep.subr.bf16.mxu0 0
        %1481 = vmatpush1.bf16.msra.mxu0 0
        %1482 = vmatprep.subr.bf16.mxu0 0
        %1483 = vmatpush1.bf16.msra.mxu0 0
        %1484 = vmatprep.subr.bf16.mxu0 0
        %1485 = vmatpush1.bf16.msra.mxu0 0
        %1486 = vmatprep.mubr.bf16.mxu0 0
        %1487 = vmatmul.mubr.bf16.gmra.mrb[0].mxu0 %v411
        %v1488 = vpop.f32.mrb[0].mxu0
        %v1489 = vadd.f32 0.0, %v1488
        %v1490 = vpop.f32.mrb[0].mxu0
        %v1491 = vpop.f32.mrb[0].mxu0
        %v1492 = vpop.f32.mrb[0].mxu0
        %1493 = vdwg.mxu0
        %v1495 = vsel %vm413, %v1124, 0
        %1497 = vmatprep.subr.bf16.mxu0 0
        %1498 = vmatpush1.bf16.msra.mxu0 %v1495
        %1499 = vmatprep.subr.bf16.mxu0 0
        %1500 = vmatpush1.bf16.msra.mxu0 0
        %1501 = vmatprep.subr.bf16.mxu0 0
        %1502 = vmatpush1.bf16.msra.mxu0 0
        %1503 = vmatprep.subr.bf16.mxu0 0
        %1504 = vmatpush1.bf16.msra.mxu0 0
        %1505 = vmatprep.subr.bf16.mxu0 0
        %1506 = vmatpush1.bf16.msra.mxu0 0
        %1507 = vmatprep.subr.bf16.mxu0 0
        %1508 = vmatpush1.bf16.msra.mxu0 0
        %1509 = vmatprep.subr.bf16.mxu0 0
        %1510 = vmatpush1.bf16.msra.mxu0 0
        %1511 = vmatprep.subr.bf16.mxu0 0
        %1512 = vmatpush1.bf16.msra.mxu0 0
        %1513 = vmatprep.subr.bf16.mxu0 0
        %1514 = vmatpush1.bf16.msra.mxu0 0
        %1515 = vmatprep.subr.bf16.mxu0 0
        %1516 = vmatpush1.bf16.msra.mxu0 0
        %1517 = vmatprep.subr.bf16.mxu0 0
        %1518 = vmatpush1.bf16.msra.mxu0 0
        %1519 = vmatprep.subr.bf16.mxu0 0
        %1520 = vmatpush1.bf16.msra.mxu0 0
        %1521 = vmatprep.subr.bf16.mxu0 0
        %1522 = vmatpush1.bf16.msra.mxu0 0
        %1523 = vmatprep.subr.bf16.mxu0 0
        %1524 = vmatpush1.bf16.msra.mxu0 0
        %1525 = vmatprep.subr.bf16.mxu0 0
        %1526 = vmatpush1.bf16.msra.mxu0 0
        %1527 = vmatprep.subr.bf16.mxu0 0
        %1528 = vmatpush1.bf16.msra.mxu0 0
        %1529 = vmatprep.mubr.bf16.mxu0 0
        %1530 = vmatmul.mubr.bf16.gmra.mrb[0].mxu0 %v458
        %v1531 = vpop.f32.mrb[0].mxu0
        %v1532 = vadd.f32 0.0, %v1531
        %v1533 = vpop.f32.mrb[0].mxu0
        %v1534 = vpop.f32.mrb[0].mxu0
        %v1535 = vpop.f32.mrb[0].mxu0
        %1536 = vdwg.mxu0
        %v1538 = vsel %vm413, %v1125, 0
        %1540 = vmatprep.subr.bf16.mxu0 0
        %1541 = vmatpush1.bf16.msra.mxu0 %v1538
        %1542 = vmatprep.subr.bf16.mxu0 0
        %1543 = vmatpush1.bf16.msra.mxu0 0
        %1544 = vmatprep.subr.bf16.mxu0 0
        %1545 = vmatpush1.bf16.msra.mxu0 0
        %1546 = vmatprep.subr.bf16.mxu0 0
        %1547 = vmatpush1.bf16.msra.mxu0 0
        %1548 = vmatprep.subr.bf16.mxu0 0
        %1549 = vmatpush1.bf16.msra.mxu0 0
        %1550 = vmatprep.subr.bf16.mxu0 0
        %1551 = vmatpush1.bf16.msra.mxu0 0
        %1552 = vmatprep.subr.bf16.mxu0 0
        %1553 = vmatpush1.bf16.msra.mxu0 0
        %1554 = vmatprep.subr.bf16.mxu0 0
        %1555 = vmatpush1.bf16.msra.mxu0 0
        %1556 = vmatprep.subr.bf16.mxu0 0
        %1557 = vmatpush1.bf16.msra.mxu0 0
        %1558 = vmatprep.subr.bf16.mxu0 0
        %1559 = vmatpush1.bf16.msra.mxu0 0
        %1560 = vmatprep.subr.bf16.mxu0 0
        %1561 = vmatpush1.bf16.msra.mxu0 0
        %1562 = vmatprep.subr.bf16.mxu0 0
        %1563 = vmatpush1.bf16.msra.mxu0 0
        %1564 = vmatprep.subr.bf16.mxu0 0
        %1565 = vmatpush1.bf16.msra.mxu0 0
        %1566 = vmatprep.subr.bf16.mxu0 0
        %1567 = vmatpush1.bf16.msra.mxu0 0
        %1568 = vmatprep.subr.bf16.mxu0 0
        %1569 = vmatpush1.bf16.msra.mxu0 0
        %1570 = vmatprep.subr.bf16.mxu0 0
        %1571 = vmatpush1.bf16.msra.mxu0 0
        %1572 = vmatprep.mubr.bf16.mxu0 0
        %1573 = vmatmul.mubr.bf16.gmra.mrb[0].mxu0 %v504
        %v1574 = vpop.f32.mrb[0].mxu0
        %v1575 = vadd.f32 0.0, %v1574
        %v1576 = vpop.f32.mrb[0].mxu0
        %v1577 = vpop.f32.mrb[0].mxu0
        %v1578 = vpop.f32.mrb[0].mxu0
        %1579 = vdwg.mxu0
        %v1581 = vsel %vm413, %v1126, 0
        %1583 = vmatprep.subr.bf16.mxu0 0
        %1584 = vmatpush1.bf16.msra.mxu0 %v1581
        %1585 = vmatprep.subr.bf16.mxu0 0
        %1586 = vmatpush1.bf16.msra.mxu0 0
        %1587 = vmatprep.subr.bf16.mxu0 0
        %1588 = vmatpush1.bf16.msra.mxu0 0
        %1589 = vmatprep.subr.bf16.mxu0 0
        %1590 = vmatpush1.bf16.msra.mxu0 0
        %1591 = vmatprep.subr.bf16.mxu0 0
        %1592 = vmatpush1.bf16.msra.mxu0 0
        %1593 = vmatprep.subr.bf16.mxu0 0
        %1594 = vmatpush1.bf16.msra.mxu0 0
        %1595 = vmatprep.subr.bf16.mxu0 0
        %1596 = vmatpush1.bf16.msra.mxu0 0
        %1597 = vmatprep.subr.bf16.mxu0 0
        %1598 = vmatpush1.bf16.msra.mxu0 0
        %1599 = vmatprep.subr.bf16.mxu0 0
        %1600 = vmatpush1.bf16.msra.mxu0 0
        %1601 = vmatprep.subr.bf16.mxu0 0
        %1602 = vmatpush1.bf16.msra.mxu0 0
        %1603 = vmatprep.subr.bf16.mxu0 0
        %1604 = vmatpush1.bf16.msra.mxu0 0
        %1605 = vmatprep.subr.bf16.mxu0 0
        %1606 = vmatpush1.bf16.msra.mxu0 0
        %1607 = vmatprep.subr.bf16.mxu0 0
        %1608 = vmatpush1.bf16.msra.mxu0 0
        %1609 = vmatprep.subr.bf16.mxu0 0
        %1610 = vmatpush1.bf16.msra.mxu0 0
        %1611 = vmatprep.subr.bf16.mxu0 0
        %1612 = vmatpush1.bf16.msra.mxu0 0
        %1613 = vmatprep.subr.bf16.mxu0 0
        %1614 = vmatpush1.bf16.msra.mxu0 0
        %1615 = vmatprep.mubr.bf16.mxu0 0
        %1616 = vmatmul.mubr.bf16.gmra.mrb[0].mxu0 %v550
        %v1617 = vpop.f32.mrb[0].mxu0
        %v1618 = vadd.f32 0.0, %v1617
        %v1619 = vpop.f32.mrb[0].mxu0
        %v1620 = vpop.f32.mrb[0].mxu0
        %v1621 = vpop.f32.mrb[0].mxu0
        %1622 = vdwg.mxu0
        %v1624 = vsel %vm413, %v1127, 0
        %1626 = vmatprep.subr.bf16.mxu0 0
        %1627 = vmatpush1.bf16.msra.mxu0 %v1624
        %1628 = vmatprep.subr.bf16.mxu0 0
        %1629 = vmatpush1.bf16.msra.mxu0 0
        %1630 = vmatprep.subr.bf16.mxu0 0
        %1631 = vmatpush1.bf16.msra.mxu0 0
        %1632 = vmatprep.subr.bf16.mxu0 0
        %1633 = vmatpush1.bf16.msra.mxu0 0
        %1634 = vmatprep.subr.bf16.mxu0 0
        %1635 = vmatpush1.bf16.msra.mxu0 0
        %1636 = vmatprep.subr.bf16.mxu0 0
        %1637 = vmatpush1.bf16.msra.mxu0 0
        %1638 = vmatprep.subr.bf16.mxu0 0
        %1639 = vmatpush1.bf16.msra.mxu0 0
        %1640 = vmatprep.subr.bf16.mxu0 0
        %1641 = vmatpush1.bf16.msra.mxu0 0
        %1642 = vmatprep.subr.bf16.mxu0 0
        %1643 = vmatpush1.bf16.msra.mxu0 0
        %1644 = vmatprep.subr.bf16.mxu0 0
        %1645 = vmatpush1.bf16.msra.mxu0 0
        %1646 = vmatprep.subr.bf16.mxu0 0
        %1647 = vmatpush1.bf16.msra.mxu0 0
        %1648 = vmatprep.subr.bf16.mxu0 0
        %1649 = vmatpush1.bf16.msra.mxu0 0
        %1650 = vmatprep.subr.bf16.mxu0 0
        %1651 = vmatpush1.bf16.msra.mxu0 0
        %1652 = vmatprep.subr.bf16.mxu0 0
        %1653 = vmatpush1.bf16.msra.mxu0 0
        %1654 = vmatprep.subr.bf16.mxu0 0
        %1655 = vmatpush1.bf16.msra.mxu0 0
        %1656 = vmatprep.subr.bf16.mxu0 0
        %1657 = vmatpush1.bf16.msra.mxu0 0
        %1658 = vmatprep.mubr.bf16.mxu0 0
        %1659 = vmatmul.mubr.bf16.gmra.mrb[0].mxu0 %v596
        %v1660 = vpop.f32.mrb[0].mxu0
        %v1661 = vadd.f32 0.0, %v1660
        %v1662 = vpop.f32.mrb[0].mxu0
        %v1663 = vpop.f32.mrb[0].mxu0
        %v1664 = vpop.f32.mrb[0].mxu0
        %1665 = vdwg.mxu0
        %v1667 = vsel %vm413, %v1128, 0
        %1669 = vmatprep.subr.bf16.mxu0 0
        %1670 = vmatpush1.bf16.msra.mxu0 %v1667
        %1671 = vmatprep.subr.bf16.mxu0 0
        %1672 = vmatpush1.bf16.msra.mxu0 0
        %1673 = vmatprep.subr.bf16.mxu0 0
        %1674 = vmatpush1.bf16.msra.mxu0 0
        %1675 = vmatprep.subr.bf16.mxu0 0
        %1676 = vmatpush1.bf16.msra.mxu0 0
        %1677 = vmatprep.subr.bf16.mxu0 0
        %1678 = vmatpush1.bf16.msra.mxu0 0
        %1679 = vmatprep.subr.bf16.mxu0 0
        %1680 = vmatpush1.bf16.msra.mxu0 0
        %1681 = vmatprep.subr.bf16.mxu0 0
        %1682 = vmatpush1.bf16.msra.mxu0 0
        %1683 = vmatprep.subr.bf16.mxu0 0
        %1684 = vmatpush1.bf16.msra.mxu0 0
        %1685 = vmatprep.subr.bf16.mxu0 0
        %1686 = vmatpush1.bf16.msra.mxu0 0
        %1687 = vmatprep.subr.bf16.mxu0 0
        %1688 = vmatpush1.bf16.msra.mxu0 0
        %1689 = vmatprep.subr.bf16.mxu0 0
        %1690 = vmatpush1.bf16.msra.mxu0 0
        %1691 = vmatprep.subr.bf16.mxu0 0
        %1692 = vmatpush1.bf16.msra.mxu0 0
        %1693 = vmatprep.subr.bf16.mxu0 0
        %1694 = vmatpush1.bf16.msra.mxu0 0
        %1695 = vmatprep.subr.bf16.mxu0 0
        %1696 = vmatpush1.bf16.msra.mxu0 0
        %1697 = vmatprep.subr.bf16.mxu0 0
        %1698 = vmatpush1.bf16.msra.mxu0 0
        %1699 = vmatprep.subr.bf16.mxu0 0
        %1700 = vmatpush1.bf16.msra.mxu0 0
        %1701 = vmatprep.mubr.bf16.mxu0 0
        %1702 = vmatmul.mubr.bf16.gmra.mrb[0].mxu0 %v642
        %v1703 = vpop.f32.mrb[0].mxu0
        %v1704 = vadd.f32 0.0, %v1703
        %v1705 = vpop.f32.mrb[0].mxu0
        %v1706 = vpop.f32.mrb[0].mxu0
        %v1707 = vpop.f32.mrb[0].mxu0
        %1708 = vdwg.mxu0
        %v1710 = vsel %vm413, %v1129, 0
        %1712 = vmatprep.subr.bf16.mxu0 0
        %1713 = vmatpush1.bf16.msra.mxu0 %v1710
        %1714 = vmatprep.subr.bf16.mxu0 0
        %1715 = vmatpush1.bf16.msra.mxu0 0
        %1716 = vmatprep.subr.bf16.mxu0 0
        %1717 = vmatpush1.bf16.msra.mxu0 0
        %1718 = vmatprep.subr.bf16.mxu0 0
        %1719 = vmatpush1.bf16.msra.mxu0 0
        %1720 = vmatprep.subr.bf16.mxu0 0
        %1721 = vmatpush1.bf16.msra.mxu0 0
        %1722 = vmatprep.subr.bf16.mxu0 0
        %1723 = vmatpush1.bf16.msra.mxu0 0
        %1724 = vmatprep.subr.bf16.mxu0 0
        %1725 = vmatpush1.bf16.msra.mxu0 0
        %1726 = vmatprep.subr.bf16.mxu0 0
        %1727 = vmatpush1.bf16.msra.mxu0 0
        %1728 = vmatprep.subr.bf16.mxu0 0
        %1729 = vmatpush1.bf16.msra.mxu0 0
        %1730 = vmatprep.subr.bf16.mxu0 0
        %1731 = vmatpush1.bf16.msra.mxu0 0
        %1732 = vmatprep.subr.bf16.mxu0 0
        %1733 = vmatpush1.bf16.msra.mxu0 0
        %1734 = vmatprep.subr.bf16.mxu0 0
        %1735 = vmatpush1.bf16.msra.mxu0 0
        %1736 = vmatprep.subr.bf16.mxu0 0
        %1737 = vmatpush1.bf16.msra.mxu0 0
        %1738 = vmatprep.subr.bf16.mxu0 0
        %1739 = vmatpush1.bf16.msra.mxu0 0
        %1740 = vmatprep.subr.bf16.mxu0 0
        %1741 = vmatpush1.bf16.msra.mxu0 0
        %1742 = vmatprep.subr.bf16.mxu0 0
        %1743 = vmatpush1.bf16.msra.mxu0 0
        %1744 = vmatprep.mubr.bf16.mxu0 0
        %1745 = vmatmul.mubr.bf16.gmra.mrb[0].mxu0 %v688
        %v1746 = vpop.f32.mrb[0].mxu0
        %v1747 = vadd.f32 0.0, %v1746
        %v1748 = vpop.f32.mrb[0].mxu0
        %v1749 = vpop.f32.mrb[0].mxu0
        %v1750 = vpop.f32.mrb[0].mxu0
        %1751 = vdwg.mxu0
        %v1753 = vsel %vm413, %v1130, 0
        %1755 = vmatprep.subr.bf16.mxu0 0
        %1756 = vmatpush1.bf16.msra.mxu0 %v1753
        %1757 = vmatprep.subr.bf16.mxu0 0
        %1758 = vmatpush1.bf16.msra.mxu0 0
        %1759 = vmatprep.subr.bf16.mxu0 0
        %1760 = vmatpush1.bf16.msra.mxu0 0
        %1761 = vmatprep.subr.bf16.mxu0 0
        %1762 = vmatpush1.bf16.msra.mxu0 0
        %1763 = vmatprep.subr.bf16.mxu0 0
        %1764 = vmatpush1.bf16.msra.mxu0 0
        %1765 = vmatprep.subr.bf16.mxu0 0
        %1766 = vmatpush1.bf16.msra.mxu0 0
        %1767 = vmatprep.subr.bf16.mxu0 0
        %1768 = vmatpush1.bf16.msra.mxu0 0
        %1769 = vmatprep.subr.bf16.mxu0 0
        %1770 = vmatpush1.bf16.msra.mxu0 0
        %1771 = vmatprep.subr.bf16.mxu0 0
        %1772 = vmatpush1.bf16.msra.mxu0 0
        %1773 = vmatprep.subr.bf16.mxu0 0
        %1774 = vmatpush1.bf16.msra.mxu0 0
        %1775 = vmatprep.subr.bf16.mxu0 0
        %1776 = vmatpush1.bf16.msra.mxu0 0
        %1777 = vmatprep.subr.bf16.mxu0 0
        %1778 = vmatpush1.bf16.msra.mxu0 0
        %1779 = vmatprep.subr.bf16.mxu0 0
        %1780 = vmatpush1.bf16.msra.mxu0 0
        %1781 = vmatprep.subr.bf16.mxu0 0
        %1782 = vmatpush1.bf16.msra.mxu0 0
        %1783 = vmatprep.subr.bf16.mxu0 0
        %1784 = vmatpush1.bf16.msra.mxu0 0
        %1785 = vmatprep.subr.bf16.mxu0 0
        %1786 = vmatpush1.bf16.msra.mxu0 0
        %1787 = vmatprep.mubr.bf16.mxu0 0
        %1788 = vmatmul.mubr.bf16.gmra.mrb[0].mxu0 %v734
        %v1789 = vpop.f32.mrb[0].mxu0
        %v1790 = vadd.f32 0.0, %v1789
        %v1791 = vpop.f32.mrb[0].mxu0
        %v1792 = vpop.f32.mrb[0].mxu0
        %v1793 = vpop.f32.mrb[0].mxu0
        %1794 = vdwg.mxu0
        %v1796 = vsel %vm413, %v1131, 0
        %1798 = vmatprep.subr.bf16.mxu0 0
        %1799 = vmatpush1.bf16.msra.mxu0 %v1796
        %1800 = vmatprep.subr.bf16.mxu0 0
        %1801 = vmatpush1.bf16.msra.mxu0 0
        %1802 = vmatprep.subr.bf16.mxu0 0
        %1803 = vmatpush1.bf16.msra.mxu0 0
        %1804 = vmatprep.subr.bf16.mxu0 0
        %1805 = vmatpush1.bf16.msra.mxu0 0
        %1806 = vmatprep.subr.bf16.mxu0 0
        %1807 = vmatpush1.bf16.msra.mxu0 0
        %1808 = vmatprep.subr.bf16.mxu0 0
        %1809 = vmatpush1.bf16.msra.mxu0 0
        %1810 = vmatprep.subr.bf16.mxu0 0
        %1811 = vmatpush1.bf16.msra.mxu0 0
        %1812 = vmatprep.subr.bf16.mxu0 0
        %1813 = vmatpush1.bf16.msra.mxu0 0
        %1814 = vmatprep.subr.bf16.mxu0 0
        %1815 = vmatpush1.bf16.msra.mxu0 0
        %1816 = vmatprep.subr.bf16.mxu0 0
        %1817 = vmatpush1.bf16.msra.mxu0 0
        %1818 = vmatprep.subr.bf16.mxu0 0
        %1819 = vmatpush1.bf16.msra.mxu0 0
        %1820 = vmatprep.subr.bf16.mxu0 0
        %1821 = vmatpush1.bf16.msra.mxu0 0
        %1822 = vmatprep.subr.bf16.mxu0 0
        %1823 = vmatpush1.bf16.msra.mxu0 0
        %1824 = vmatprep.subr.bf16.mxu0 0
        %1825 = vmatpush1.bf16.msra.mxu0 0
        %1826 = vmatprep.subr.bf16.mxu0 0
        %1827 = vmatpush1.bf16.msra.mxu0 0
        %1828 = vmatprep.subr.bf16.mxu0 0
        %1829 = vmatpush1.bf16.msra.mxu0 0
        %1830 = vmatprep.mubr.bf16.mxu0 0
        %1831 = vmatmul.mubr.bf16.gmra.mrb[0].mxu0 %v780
        %v1832 = vpop.f32.mrb[0].mxu0
        %v1833 = vadd.f32 0.0, %v1832
        %v1834 = vpop.f32.mrb[0].mxu0
        %v1835 = vpop.f32.mrb[0].mxu0
        %v1836 = vpop.f32.mrb[0].mxu0
        %1837 = vdwg.mxu0
        %v1839 = vsel %vm413, %v1132, 0
        %1841 = vmatprep.subr.bf16.mxu0 0
        %1842 = vmatpush1.bf16.msra.mxu0 %v1839
        %1843 = vmatprep.subr.bf16.mxu0 0
        %1844 = vmatpush1.bf16.msra.mxu0 0
        %1845 = vmatprep.subr.bf16.mxu0 0
        %1846 = vmatpush1.bf16.msra.mxu0 0
        %1847 = vmatprep.subr.bf16.mxu0 0
        %1848 = vmatpush1.bf16.msra.mxu0 0
        %1849 = vmatprep.subr.bf16.mxu0 0
        %1850 = vmatpush1.bf16.msra.mxu0 0
        %1851 = vmatprep.subr.bf16.mxu0 0
        %1852 = vmatpush1.bf16.msra.mxu0 0
        %1853 = vmatprep.subr.bf16.mxu0 0
        %1854 = vmatpush1.bf16.msra.mxu0 0
        %1855 = vmatprep.subr.bf16.mxu0 0
        %1856 = vmatpush1.bf16.msra.mxu0 0
        %1857 = vmatprep.subr.bf16.mxu0 0
        %1858 = vmatpush1.bf16.msra.mxu0 0
        %1859 = vmatprep.subr.bf16.mxu0 0
        %1860 = vmatpush1.bf16.msra.mxu0 0
        %1861 = vmatprep.subr.bf16.mxu0 0
        %1862 = vmatpush1.bf16.msra.mxu0 0
        %1863 = vmatprep.subr.bf16.mxu0 0
        %1864 = vmatpush1.bf16.msra.mxu0 0
        %1865 = vmatprep.subr.bf16.mxu0 0
        %1866 = vmatpush1.bf16.msra.mxu0 0
        %1867 = vmatprep.subr.bf16.mxu0 0
        %1868 = vmatpush1.bf16.msra.mxu0 0
        %1869 = vmatprep.subr.bf16.mxu0 0
        %1870 = vmatpush1.bf16.msra.mxu0 0
        %1871 = vmatprep.subr.bf16.mxu0 0
        %1872 = vmatpush1.bf16.msra.mxu0 0
        %1873 = vmatprep.mubr.bf16.mxu0 0
        %1874 = vmatmul.mubr.bf16.gmra.mrb[0].mxu0 %v823
        %v1875 = vpop.f32.mrb[0].mxu0
        %v1876 = vadd.f32 0.0, %v1875
        %v1877 = vpop.f32.mrb[0].mxu0
        %v1878 = vpop.f32.mrb[0].mxu0
        %v1879 = vpop.f32.mrb[0].mxu0
        %1880 = vdwg.mxu0
        %v1882 = vsel %vm413, %v1133, 0
        %1884 = vmatprep.subr.bf16.mxu0 0
        %1885 = vmatpush1.bf16.msra.mxu0 %v1882
        %1886 = vmatprep.subr.bf16.mxu0 0
        %1887 = vmatpush1.bf16.msra.mxu0 0
        %1888 = vmatprep.subr.bf16.mxu0 0
        %1889 = vmatpush1.bf16.msra.mxu0 0
        %1890 = vmatprep.subr.bf16.mxu0 0
        %1891 = vmatpush1.bf16.msra.mxu0 0
        %1892 = vmatprep.subr.bf16.mxu0 0
        %1893 = vmatpush1.bf16.msra.mxu0 0
        %1894 = vmatprep.subr.bf16.mxu0 0
        %1895 = vmatpush1.bf16.msra.mxu0 0
        %1896 = vmatprep.subr.bf16.mxu0 0
        %1897 = vmatpush1.bf16.msra.mxu0 0
        %1898 = vmatprep.subr.bf16.mxu0 0
        %1899 = vmatpush1.bf16.msra.mxu0 0
        %1900 = vmatprep.subr.bf16.mxu0 0
        %1901 = vmatpush1.bf16.msra.mxu0 0
        %1902 = vmatprep.subr.bf16.mxu0 0
        %1903 = vmatpush1.bf16.msra.mxu0 0
        %1904 = vmatprep.subr.bf16.mxu0 0
        %1905 = vmatpush1.bf16.msra.mxu0 0
        %1906 = vmatprep.subr.bf16.mxu0 0
        %1907 = vmatpush1.bf16.msra.mxu0 0
        %1908 = vmatprep.subr.bf16.mxu0 0
        %1909 = vmatpush1.bf16.msra.mxu0 0
        %1910 = vmatprep.subr.bf16.mxu0 0
        %1911 = vmatpush1.bf16.msra.mxu0 0
        %1912 = vmatprep.subr.bf16.mxu0 0
        %1913 = vmatpush1.bf16.msra.mxu0 0
        %1914 = vmatprep.subr.bf16.mxu0 0
        %1915 = vmatpush1.bf16.msra.mxu0 0
        %1916 = vmatprep.mubr.bf16.mxu0 0
        %1917 = vmatmul.mubr.bf16.gmra.mrb[0].mxu0 %v866
        %v1918 = vpop.f32.mrb[0].mxu0
        %v1919 = vadd.f32 0.0, %v1918
        %v1920 = vpop.f32.mrb[0].mxu0
        %v1921 = vpop.f32.mrb[0].mxu0
        %v1922 = vpop.f32.mrb[0].mxu0
        %1923 = vdwg.mxu0
        %v1925 = vsel %vm413, %v1134, 0
        %1927 = vmatprep.subr.bf16.mxu0 0
        %1928 = vmatpush1.bf16.msra.mxu0 %v1925
        %1929 = vmatprep.subr.bf16.mxu0 0
        %1930 = vmatpush1.bf16.msra.mxu0 0
        %1931 = vmatprep.subr.bf16.mxu0 0
        %1932 = vmatpush1.bf16.msra.mxu0 0
        %1933 = vmatprep.subr.bf16.mxu0 0
        %1934 = vmatpush1.bf16.msra.mxu0 0
        %1935 = vmatprep.subr.bf16.mxu0 0
        %1936 = vmatpush1.bf16.msra.mxu0 0
        %1937 = vmatprep.subr.bf16.mxu0 0
        %1938 = vmatpush1.bf16.msra.mxu0 0
        %1939 = vmatprep.subr.bf16.mxu0 0
        %1940 = vmatpush1.bf16.msra.mxu0 0
        %1941 = vmatprep.subr.bf16.mxu0 0
        %1942 = vmatpush1.bf16.msra.mxu0 0
        %1943 = vmatprep.subr.bf16.mxu0 0
        %1944 = vmatpush1.bf16.msra.mxu0 0
        %1945 = vmatprep.subr.bf16.mxu0 0
        %1946 = vmatpush1.bf16.msra.mxu0 0
        %1947 = vmatprep.subr.bf16.mxu0 0
        %1948 = vmatpush1.bf16.msra.mxu0 0
        %1949 = vmatprep.subr.bf16.mxu0 0
        %1950 = vmatpush1.bf16.msra.mxu0 0
        %1951 = vmatprep.subr.bf16.mxu0 0
        %1952 = vmatpush1.bf16.msra.mxu0 0
        %1953 = vmatprep.subr.bf16.mxu0 0
        %1954 = vmatpush1.bf16.msra.mxu0 0
        %1955 = vmatprep.subr.bf16.mxu0 0
        %1956 = vmatpush1.bf16.msra.mxu0 0
        %1957 = vmatprep.subr.bf16.mxu0 0
        %1958 = vmatpush1.bf16.msra.mxu0 0
        %1959 = vmatprep.mubr.bf16.mxu0 0
        %1960 = vmatmul.mubr.bf16.gmra.mrb[0].mxu0 %v909
        %v1961 = vpop.f32.mrb[0].mxu0
        %v1962 = vadd.f32 0.0, %v1961
        %v1963 = vpop.f32.mrb[0].mxu0
        %v1964 = vpop.f32.mrb[0].mxu0
        %v1965 = vpop.f32.mrb[0].mxu0
        %1966 = vdwg.mxu0
        %v1968 = vsel %vm413, %v1135, 0
        %1970 = vmatprep.subr.bf16.mxu0 0
        %1971 = vmatpush1.bf16.msra.mxu0 %v1968
        %1972 = vmatprep.subr.bf16.mxu0 0
        %1973 = vmatpush1.bf16.msra.mxu0 0
        %1974 = vmatprep.subr.bf16.mxu0 0
        %1975 = vmatpush1.bf16.msra.mxu0 0
        %1976 = vmatprep.subr.bf16.mxu0 0
        %1977 = vmatpush1.bf16.msra.mxu0 0
        %1978 = vmatprep.subr.bf16.mxu0 0
        %1979 = vmatpush1.bf16.msra.mxu0 0
        %1980 = vmatprep.subr.bf16.mxu0 0
        %1981 = vmatpush1.bf16.msra.mxu0 0
        %1982 = vmatprep.subr.bf16.mxu0 0
        %1983 = vmatpush1.bf16.msra.mxu0 0
        %1984 = vmatprep.subr.bf16.mxu0 0
        %1985 = vmatpush1.bf16.msra.mxu0 0
        %1986 = vmatprep.subr.bf16.mxu0 0
        %1987 = vmatpush1.bf16.msra.mxu0 0
        %1988 = vmatprep.subr.bf16.mxu0 0
        %1989 = vmatpush1.bf16.msra.mxu0 0
        %1990 = vmatprep.subr.bf16.mxu0 0
        %1991 = vmatpush1.bf16.msra.mxu0 0
        %1992 = vmatprep.subr.bf16.mxu0 0
        %1993 = vmatpush1.bf16.msra.mxu0 0
        %1994 = vmatprep.subr.bf16.mxu0 0
        %1995 = vmatpush1.bf16.msra.mxu0 0
        %1996 = vmatprep.subr.bf16.mxu0 0
        %1997 = vmatpush1.bf16.msra.mxu0 0
        %1998 = vmatprep.subr.bf16.mxu0 0
        %1999 = vmatpush1.bf16.msra.mxu0 0
        %2000 = vmatprep.subr.bf16.mxu0 0
        %2001 = vmatpush1.bf16.msra.mxu0 0
        %2002 = vmatprep.mubr.bf16.mxu0 0
        %2003 = vmatmul.mubr.bf16.gmra.mrb[0].mxu0 %v952
        %v2004 = vpop.f32.mrb[0].mxu0
        %v2005 = vadd.f32 0.0, %v2004
        %v2006 = vpop.f32.mrb[0].mxu0
        %v2007 = vpop.f32.mrb[0].mxu0
        %v2008 = vpop.f32.mrb[0].mxu0
        %2009 = vdwg.mxu0
        %v2011 = vsel %vm413, %v1136, 0
        %2013 = vmatprep.subr.bf16.mxu0 0
        %2014 = vmatpush1.bf16.msra.mxu0 %v2011
        %2015 = vmatprep.subr.bf16.mxu0 0
        %2016 = vmatpush1.bf16.msra.mxu0 0
        %2017 = vmatprep.subr.bf16.mxu0 0
        %2018 = vmatpush1.bf16.msra.mxu0 0
        %2019 = vmatprep.subr.bf16.mxu0 0
        %2020 = vmatpush1.bf16.msra.mxu0 0
        %2021 = vmatprep.subr.bf16.mxu0 0
        %2022 = vmatpush1.bf16.msra.mxu0 0
        %2023 = vmatprep.subr.bf16.mxu0 0
        %2024 = vmatpush1.bf16.msra.mxu0 0
        %2025 = vmatprep.subr.bf16.mxu0 0
        %2026 = vmatpush1.bf16.msra.mxu0 0
        %2027 = vmatprep.subr.bf16.mxu0 0
        %2028 = vmatpush1.bf16.msra.mxu0 0
        %2029 = vmatprep.subr.bf16.mxu0 0
        %2030 = vmatpush1.bf16.msra.mxu0 0
        %2031 = vmatprep.subr.bf16.mxu0 0
        %2032 = vmatpush1.bf16.msra.mxu0 0
        %2033 = vmatprep.subr.bf16.mxu0 0
        %2034 = vmatpush1.bf16.msra.mxu0 0
        %2035 = vmatprep.subr.bf16.mxu0 0
        %2036 = vmatpush1.bf16.msra.mxu0 0
        %2037 = vmatprep.subr.bf16.mxu0 0
        %2038 = vmatpush1.bf16.msra.mxu0 0
        %2039 = vmatprep.subr.bf16.mxu0 0
        %2040 = vmatpush1.bf16.msra.mxu0 0
        %2041 = vmatprep.subr.bf16.mxu0 0
        %2042 = vmatpush1.bf16.msra.mxu0 0
        %2043 = vmatprep.subr.bf16.mxu0 0
        %2044 = vmatpush1.bf16.msra.mxu0 0
        %2045 = vmatprep.mubr.bf16.mxu0 0
        %2046 = vmatmul.mubr.bf16.gmra.mrb[0].mxu0 %v995
        %v2047 = vpop.f32.mrb[0].mxu0
        %v2048 = vadd.f32 0.0, %v2047
        %v2049 = vpop.f32.mrb[0].mxu0
        %v2050 = vpop.f32.mrb[0].mxu0
        %v2051 = vpop.f32.mrb[0].mxu0
        %2052 = vdwg.mxu0
        %v2054 = vsel %vm413, %v1137, 0
        %2056 = vmatprep.subr.bf16.mxu0 0
        %2057 = vmatpush1.bf16.msra.mxu0 %v2054
        %2058 = vmatprep.subr.bf16.mxu0 0
        %2059 = vmatpush1.bf16.msra.mxu0 0
        %2060 = vmatprep.subr.bf16.mxu0 0
        %2061 = vmatpush1.bf16.msra.mxu0 0
        %2062 = vmatprep.subr.bf16.mxu0 0
        %2063 = vmatpush1.bf16.msra.mxu0 0
        %2064 = vmatprep.subr.bf16.mxu0 0
        %2065 = vmatpush1.bf16.msra.mxu0 0
        %2066 = vmatprep.subr.bf16.mxu0 0
        %2067 = vmatpush1.bf16.msra.mxu0 0
        %2068 = vmatprep.subr.bf16.mxu0 0
        %2069 = vmatpush1.bf16.msra.mxu0 0
        %2070 = vmatprep.subr.bf16.mxu0 0
        %2071 = vmatpush1.bf16.msra.mxu0 0
        %2072 = vmatprep.subr.bf16.mxu0 0
        %2073 = vmatpush1.bf16.msra.mxu0 0
        %2074 = vmatprep.subr.bf16.mxu0 0
        %2075 = vmatpush1.bf16.msra.mxu0 0
        %2076 = vmatprep.subr.bf16.mxu0 0
        %2077 = vmatpush1.bf16.msra.mxu0 0
        %2078 = vmatprep.subr.bf16.mxu0 0
        %2079 = vmatpush1.bf16.msra.mxu0 0
        %2080 = vmatprep.subr.bf16.mxu0 0
        %2081 = vmatpush1.bf16.msra.mxu0 0
        %2082 = vmatprep.subr.bf16.mxu0 0
        %2083 = vmatpush1.bf16.msra.mxu0 0
        %2084 = vmatprep.subr.bf16.mxu0 0
        %2085 = vmatpush1.bf16.msra.mxu0 0
        %2086 = vmatprep.subr.bf16.mxu0 0
        %2087 = vmatpush1.bf16.msra.mxu0 0
        %2088 = vmatprep.mubr.bf16.mxu0 0
        %2089 = vmatmul.mubr.bf16.gmra.mrb[0].mxu0 %v1038
        %v2090 = vpop.f32.mrb[0].mxu0
        %v2091 = vadd.f32 0.0, %v2090
        %v2092 = vpop.f32.mrb[0].mxu0
        %v2093 = vpop.f32.mrb[0].mxu0
        %v2094 = vpop.f32.mrb[0].mxu0
        %2095 = vdwg.mxu0
        %v2097 = vsel %vm413, %v1138, 0
        %2099 = vmatprep.subr.bf16.mxu0 0
        %2100 = vmatpush1.bf16.msra.mxu0 %v2097
        %2101 = vmatprep.subr.bf16.mxu0 0
        %2102 = vmatpush1.bf16.msra.mxu0 0
        %2103 = vmatprep.subr.bf16.mxu0 0
        %2104 = vmatpush1.bf16.msra.mxu0 0
        %2105 = vmatprep.subr.bf16.mxu0 0
        %2106 = vmatpush1.bf16.msra.mxu0 0
        %2107 = vmatprep.subr.bf16.mxu0 0
        %2108 = vmatpush1.bf16.msra.mxu0 0
        %2109 = vmatprep.subr.bf16.mxu0 0
        %2110 = vmatpush1.bf16.msra.mxu0 0
        %2111 = vmatprep.subr.bf16.mxu0 0
        %2112 = vmatpush1.bf16.msra.mxu0 0
        %2113 = vmatprep.subr.bf16.mxu0 0
        %2114 = vmatpush1.bf16.msra.mxu0 0
        %2115 = vmatprep.subr.bf16.mxu0 0
        %2116 = vmatpush1.bf16.msra.mxu0 0
        %2117 = vmatprep.subr.bf16.mxu0 0
        %2118 = vmatpush1.bf16.msra.mxu0 0
        %2119 = vmatprep.subr.bf16.mxu0 0
        %2120 = vmatpush1.bf16.msra.mxu0 0
        %2121 = vmatprep.subr.bf16.mxu0 0
        %2122 = vmatpush1.bf16.msra.mxu0 0
        %2123 = vmatprep.subr.bf16.mxu0 0
        %2124 = vmatpush1.bf16.msra.mxu0 0
        %2125 = vmatprep.subr.bf16.mxu0 0
        %2126 = vmatpush1.bf16.msra.mxu0 0
        %2127 = vmatprep.subr.bf16.mxu0 0
        %2128 = vmatpush1.bf16.msra.mxu0 0
        %2129 = vmatprep.subr.bf16.mxu0 0
        %2130 = vmatpush1.bf16.msra.mxu0 0
        %2131 = vmatprep.mubr.bf16.mxu0 0
        %2132 = vmatmul.mubr.bf16.gmra.mrb[0].mxu0 %v1081
        %v2133 = vpop.f32.mrb[0].mxu0
        %v2134 = vadd.f32 0.0, %v2133
        %v2135 = vpop.f32.mrb[0].mxu0
        %v2136 = vpop.f32.mrb[0].mxu0
        %v2137 = vpop.f32.mrb[0].mxu0
        %2138 = vdwg.mxu0
        %v2139 = vmul.f32 %v1489, 2.0
        %v2140 = vmul.f32 %v1532, 2.0
        %v2141 = vmul.f32 %v1575, 2.0
        %v2142 = vmul.f32 %v1618, 2.0
        %v2143 = vmul.f32 %v1661, 2.0
        %v2144 = vmul.f32 %v1704, 2.0
        %v2145 = vmul.f32 %v1747, 2.0
        %v2146 = vmul.f32 %v1790, 2.0
        %v2147 = vmul.f32 %v1833, 2.0
        %v2148 = vmul.f32 %v1876, 2.0
        %v2149 = vmul.f32 %v1919, 2.0
        %v2150 = vmul.f32 %v1962, 2.0
        %v2151 = vmul.f32 %v2005, 2.0
        %v2152 = vmul.f32 %v2048, 2.0
        %v2153 = vmul.f32 %v2091, 2.0
        %v2154 = vmul.f32 %v2134, 2.0
        %v2155 = vsub.f32 %v2139, %v376
        %v2156 = vsub.f32 %v2140, %v377
        %v2157 = vsub.f32 %v2141, %v378
        %v2158 = vsub.f32 %v2142, %v379
        %v2159 = vsub.f32 %v2143, %v380
        %v2160 = vsub.f32 %v2144, %v381
        %v2161 = vsub.f32 %v2145, %v382
        %v2162 = vsub.f32 %v2146, %v383
        %v2163 = vsub.f32 %v2147, %v376
        %v2164 = vsub.f32 %v2148, %v377
        %v2165 = vsub.f32 %v2149, %v378
        %v2166 = vsub.f32 %v2150, %v379
        %v2167 = vsub.f32 %v2151, %v380
        %v2168 = vsub.f32 %v2152, %v381
        %v2169 = vsub.f32 %v2153, %v382
        %v2170 = vsub.f32 %v2154, %v383
        %v2171 = vpack.c.bf16 %v2155, %v2155
        %v2172 = vpack.c.bf16 %v2156, %v2156
        %v2173 = vpack.c.bf16 %v2157, %v2157
        %v2174 = vpack.c.bf16 %v2158, %v2158
        %v2175 = vpack.c.bf16 %v2159, %v2159
        %v2176 = vpack.c.bf16 %v2160, %v2160
        %v2177 = vpack.c.bf16 %v2161, %v2161
        %v2178 = vpack.c.bf16 %v2162, %v2162
        %v2179 = vpack.c.bf16 %v2163, %v2163
        %v2180 = vpack.c.bf16 %v2164, %v2164
        %v2181 = vpack.c.bf16 %v2165, %v2165
        %v2182 = vpack.c.bf16 %v2166, %v2166
        %v2183 = vpack.c.bf16 %v2167, %v2167
        %v2184 = vpack.c.bf16 %v2168, %v2168
        %v2185 = vpack.c.bf16 %v2169, %v2169
        %v2186 = vpack.c.bf16 %v2170, %v2170
        %s2187 = scalar_lea.vmem %s2, 12
        %v2188 = vld [vmem:[%s2187] sm:$0xf]
        %v2197 = vunpack.c.l.b16 %v2171
        %v2198 = vunpack.c.l.b16 %v2172
        %v2199 = vunpack.c.l.b16 %v2173
        %v2200 = vunpack.c.l.b16 %v2174
        %v2201 = vunpack.c.l.b16 %v2175
        %v2202 = vunpack.c.l.b16 %v2176
        %v2203 = vunpack.c.l.b16 %v2177
        %v2204 = vunpack.c.l.b16 %v2178
        %v2205 = vpack.c.b16 %v2198, %v2197
        %v2206 = vpack.c.b16 %v2200, %v2199
        %v2207 = vpack.c.b16 %v2202, %v2201
        %v2208 = vpack.c.b16 %v2204, %v2203
        %v2210 = vsel %vm409, %v2205, 0
        %v2213 = vsel %vm409, %v2206, 0
        %v2216 = vsel %vm409, %v2207, 0
        %v2219 = vsel %vm409, %v2208, 0
        %v2222 = vsel %vm413, %v2188, 0
        %2224 = vmatprep.subr.bf16.mxu0 0
        %2225 = vmatpush1.bf16.msra.mxu0 %v2222
        %2226 = vmatprep.subr.bf16.mxu0 0
        %2227 = vmatpush1.bf16.msra.mxu0 0
        %2228 = vmatprep.subr.bf16.mxu0 0
        %2229 = vmatpush1.bf16.msra.mxu0 0
        %2230 = vmatprep.subr.bf16.mxu0 0
        %2231 = vmatpush1.bf16.msra.mxu0 0
        %2232 = vmatprep.subr.bf16.mxu0 0
        %2233 = vmatpush1.bf16.msra.mxu0 0
        %2234 = vmatprep.subr.bf16.mxu0 0
        %2235 = vmatpush1.bf16.msra.mxu0 0
        %2236 = vmatprep.subr.bf16.mxu0 0
        %2237 = vmatpush1.bf16.msra.mxu0 0
        %2238 = vmatprep.subr.bf16.mxu0 0
        %2239 = vmatpush1.bf16.msra.mxu0 0
        %2240 = vmatprep.subr.bf16.mxu0 0
        %2241 = vmatpush1.bf16.msra.mxu0 0
        %2242 = vmatprep.subr.bf16.mxu0 0
        %2243 = vmatpush1.bf16.msra.mxu0 0
        %2244 = vmatprep.subr.bf16.mxu0 0
        %2245 = vmatpush1.bf16.msra.mxu0 0
        %2246 = vmatprep.subr.bf16.mxu0 0
        %2247 = vmatpush1.bf16.msra.mxu0 0
        %2248 = vmatprep.subr.bf16.mxu0 0
        %2249 = vmatpush1.bf16.msra.mxu0 0
        %2250 = vmatprep.subr.bf16.mxu0 0
        %2251 = vmatpush1.bf16.msra.mxu0 0
        %2252 = vmatprep.subr.bf16.mxu0 0
        %2253 = vmatpush1.bf16.msra.mxu0 0
        %2254 = vmatprep.subr.bf16.mxu0 0
        %2255 = vmatpush1.bf16.msra.mxu0 0
        %2256 = vmatprep.mubr.bf16.mxu0 0
        %2257 = vmatmul.mubr.bf16.gmra.mrb[0].mxu0 %v2210
        %v2258 = vpop.f32.mrb[0].mxu0
        %v2259 = vadd.f32 0.0, %v2258
        %v2260 = vpop.f32.mrb[0].mxu0
        %v2261 = vpop.f32.mrb[0].mxu0
        %v2262 = vadd.f32 0.0, %v2261
        %v2263 = vpop.f32.mrb[0].mxu0
        %2264 = vmatprep.mubr.bf16.mxu0 0
        %2265 = vmatmul.mubr.bf16.gmra.mrb[0].mxu0 %v2213
        %v2266 = vpop.f32.mrb[0].mxu0
        %v2267 = vadd.f32 0.0, %v2266
        %v2268 = vpop.f32.mrb[0].mxu0
        %v2269 = vpop.f32.mrb[0].mxu0
        %v2270 = vadd.f32 0.0, %v2269
        %v2271 = vpop.f32.mrb[0].mxu0
        %2272 = vmatprep.mubr.bf16.mxu0 0
        %2273 = vmatmul.mubr.bf16.gmra.mrb[0].mxu0 %v2216
        %v2274 = vpop.f32.mrb[0].mxu0
        %v2275 = vadd.f32 0.0, %v2274
        %v2276 = vpop.f32.mrb[0].mxu0
        %v2277 = vpop.f32.mrb[0].mxu0
        %v2278 = vadd.f32 0.0, %v2277
        %v2279 = vpop.f32.mrb[0].mxu0
        %2280 = vmatprep.mubr.bf16.mxu0 0
        %2281 = vmatmul.mubr.bf16.gmra.mrb[0].mxu0 %v2219
        %v2282 = vpop.f32.mrb[0].mxu0
        %v2283 = vadd.f32 0.0, %v2282
        %v2284 = vpop.f32.mrb[0].mxu0
        %v2285 = vpop.f32.mrb[0].mxu0
        %v2286 = vadd.f32 0.0, %v2285
        %v2287 = vpop.f32.mrb[0].mxu0
        %2288 = vdwg.mxu0
        %v2289 = vadd.f32 %v1443, %v2259
        %v2290 = vadd.f32 %v1444, %v2262
        %v2291 = vadd.f32 %v1445, %v2267
        %v2292 = vadd.f32 %v1446, %v2270
        %v2293 = vadd.f32 %v1447, %v2275
        %v2294 = vadd.f32 %v1448, %v2278
        %v2295 = vadd.f32 %v1449, %v2283
        %v2296 = vadd.f32 %v1450, %v2286
        %s2297 = scalar_lea.vmem %s2, 16
        %v2298 = vld [vmem:[%s2297] sm:$0xf]
        %v2307 = vunpack.c.l.b16 %v2179
        %v2308 = vunpack.c.l.b16 %v2180
        %v2309 = vunpack.c.l.b16 %v2181
        %v2310 = vunpack.c.l.b16 %v2182
        %v2311 = vunpack.c.l.b16 %v2183
        %v2312 = vunpack.c.l.b16 %v2184
        %v2313 = vunpack.c.l.b16 %v2185
        %v2314 = vunpack.c.l.b16 %v2186
        %v2315 = vpack.c.b16 %v2308, %v2307
        %v2316 = vpack.c.b16 %v2310, %v2309
        %v2317 = vpack.c.b16 %v2312, %v2311
        %v2318 = vpack.c.b16 %v2314, %v2313
        %v2320 = vsel %vm409, %v2315, 0
        %v2323 = vsel %vm409, %v2316, 0
        %v2326 = vsel %vm409, %v2317, 0
        %v2329 = vsel %vm409, %v2318, 0
        %v2332 = vsel %vm413, %v2298, 0
        %2334 = vmatprep.subr.bf16.mxu0 0
        %2335 = vmatpush1.bf16.msra.mxu0 %v2332
        %2336 = vmatprep.subr.bf16.mxu0 0
        %2337 = vmatpush1.bf16.msra.mxu0 0
        %2338 = vmatprep.subr.bf16.mxu0 0
        %2339 = vmatpush1.bf16.msra.mxu0 0
        %2340 = vmatprep.subr.bf16.mxu0 0
        %2341 = vmatpush1.bf16.msra.mxu0 0
        %2342 = vmatprep.subr.bf16.mxu0 0
        %2343 = vmatpush1.bf16.msra.mxu0 0
        %2344 = vmatprep.subr.bf16.mxu0 0
        %2345 = vmatpush1.bf16.msra.mxu0 0
        %2346 = vmatprep.subr.bf16.mxu0 0
        %2347 = vmatpush1.bf16.msra.mxu0 0
        %2348 = vmatprep.subr.bf16.mxu0 0
        %2349 = vmatpush1.bf16.msra.mxu0 0
        %2350 = vmatprep.subr.bf16.mxu0 0
        %2351 = vmatpush1.bf16.msra.mxu0 0
        %2352 = vmatprep.subr.bf16.mxu0 0
        %2353 = vmatpush1.bf16.msra.mxu0 0
        %2354 = vmatprep.subr.bf16.mxu0 0
        %2355 = vmatpush1.bf16.msra.mxu0 0
        %2356 = vmatprep.subr.bf16.mxu0 0
        %2357 = vmatpush1.bf16.msra.mxu0 0
        %2358 = vmatprep.subr.bf16.mxu0 0
        %2359 = vmatpush1.bf16.msra.mxu0 0
        %2360 = vmatprep.subr.bf16.mxu0 0
        %2361 = vmatpush1.bf16.msra.mxu0 0
        %2362 = vmatprep.subr.bf16.mxu0 0
        %2363 = vmatpush1.bf16.msra.mxu0 0
        %2364 = vmatprep.subr.bf16.mxu0 0
        %2365 = vmatpush1.bf16.msra.mxu0 0
        %2366 = vmatprep.mubr.bf16.mxu0 0
        %2367 = vmatmul.mubr.bf16.gmra.mrb[0].mxu0 %v2320
        %v2368 = vpop.f32.mrb[0].mxu0
        %v2369 = vadd.f32 0.0, %v2368
        %v2370 = vpop.f32.mrb[0].mxu0
        %v2371 = vpop.f32.mrb[0].mxu0
        %v2372 = vadd.f32 0.0, %v2371
        %v2373 = vpop.f32.mrb[0].mxu0
        %2374 = vmatprep.mubr.bf16.mxu0 0
        %2375 = vmatmul.mubr.bf16.gmra.mrb[0].mxu0 %v2323
        %v2376 = vpop.f32.mrb[0].mxu0
        %v2377 = vadd.f32 0.0, %v2376
        %v2378 = vpop.f32.mrb[0].mxu0
        %v2379 = vpop.f32.mrb[0].mxu0
        %v2380 = vadd.f32 0.0, %v2379
        %v2381 = vpop.f32.mrb[0].mxu0
        %2382 = vmatprep.mubr.bf16.mxu0 0
        %2383 = vmatmul.mubr.bf16.gmra.mrb[0].mxu0 %v2326
        %v2384 = vpop.f32.mrb[0].mxu0
        %v2385 = vadd.f32 0.0, %v2384
        %v2386 = vpop.f32.mrb[0].mxu0
        %v2387 = vpop.f32.mrb[0].mxu0
        %v2388 = vadd.f32 0.0, %v2387
        %v2389 = vpop.f32.mrb[0].mxu0
        %2390 = vmatprep.mubr.bf16.mxu0 0
        %2391 = vmatmul.mubr.bf16.gmra.mrb[0].mxu0 %v2329
        %v2392 = vpop.f32.mrb[0].mxu0
        %v2393 = vadd.f32 0.0, %v2392
        %v2394 = vpop.f32.mrb[0].mxu0
        %v2395 = vpop.f32.mrb[0].mxu0
        %v2396 = vadd.f32 0.0, %v2395
        %v2397 = vpop.f32.mrb[0].mxu0
        %2398 = vdwg.mxu0
        %v2399 = vadd.f32 %v2289, %v2369
        %v2400 = vadd.f32 %v2290, %v2372
        %v2401 = vadd.f32 %v2291, %v2377
        %v2402 = vadd.f32 %v2292, %v2380
        %v2403 = vadd.f32 %v2293, %v2385
        %v2404 = vadd.f32 %v2294, %v2388
        %v2405 = vadd.f32 %v2295, %v2393
        %v2406 = vadd.f32 %v2296, %v2396
        %v2408 = vsel %vm413, %v2171, 0
        %2410 = vmatprep.subr.bf16.mxu0 0
        %2411 = vmatpush1.bf16.msra.mxu0 %v2408
        %2412 = vmatprep.subr.bf16.mxu0 0
        %2413 = vmatpush1.bf16.msra.mxu0 0
        %2414 = vmatprep.subr.bf16.mxu0 0
        %2415 = vmatpush1.bf16.msra.mxu0 0
        %2416 = vmatprep.subr.bf16.mxu0 0
        %2417 = vmatpush1.bf16.msra.mxu0 0
        %2418 = vmatprep.subr.bf16.mxu0 0
        %2419 = vmatpush1.bf16.msra.mxu0 0
        %2420 = vmatprep.subr.bf16.mxu0 0
        %2421 = vmatpush1.bf16.msra.mxu0 0
        %2422 = vmatprep.subr.bf16.mxu0 0
        %2423 = vmatpush1.bf16.msra.mxu0 0
        %2424 = vmatprep.subr.bf16.mxu0 0
        %2425 = vmatpush1.bf16.msra.mxu0 0
        %2426 = vmatprep.subr.bf16.mxu0 0
        %2427 = vmatpush1.bf16.msra.mxu0 0
        %2428 = vmatprep.subr.bf16.mxu0 0
        %2429 = vmatpush1.bf16.msra.mxu0 0
        %2430 = vmatprep.subr.bf16.mxu0 0
        %2431 = vmatpush1.bf16.msra.mxu0 0
        %2432 = vmatprep.subr.bf16.mxu0 0
        %2433 = vmatpush1.bf16.msra.mxu0 0
        %2434 = vmatprep.subr.bf16.mxu0 0
        %2435 = vmatpush1.bf16.msra.mxu0 0
        %2436 = vmatprep.subr.bf16.mxu0 0
        %2437 = vmatpush1.bf16.msra.mxu0 0
        %2438 = vmatprep.subr.bf16.mxu0 0
        %2439 = vmatpush1.bf16.msra.mxu0 0
        %2440 = vmatprep.subr.bf16.mxu0 0
        %2441 = vmatpush1.bf16.msra.mxu0 0
        %2442 = vmatprep.mubr.bf16.mxu0 0
        %2443 = vmatmul.mubr.bf16.gmra.mrb[0].mxu0 %v411
        %v2444 = vpop.f32.mrb[0].mxu0
        %v2445 = vadd.f32 0.0, %v2444
        %v2446 = vpop.f32.mrb[0].mxu0
        %v2447 = vpop.f32.mrb[0].mxu0
        %v2448 = vpop.f32.mrb[0].mxu0
        %2449 = vdwg.mxu0
        %v2451 = vsel %vm413, %v2172, 0
        %2453 = vmatprep.subr.bf16.mxu0 0
        %2454 = vmatpush1.bf16.msra.mxu0 %v2451
        %2455 = vmatprep.subr.bf16.mxu0 0
        %2456 = vmatpush1.bf16.msra.mxu0 0
        %2457 = vmatprep.subr.bf16.mxu0 0
        %2458 = vmatpush1.bf16.msra.mxu0 0
        %2459 = vmatprep.subr.bf16.mxu0 0
        %2460 = vmatpush1.bf16.msra.mxu0 0
        %2461 = vmatprep.subr.bf16.mxu0 0
        %2462 = vmatpush1.bf16.msra.mxu0 0
        %2463 = vmatprep.subr.bf16.mxu0 0
        %2464 = vmatpush1.bf16.msra.mxu0 0
        %2465 = vmatprep.subr.bf16.mxu0 0
        %2466 = vmatpush1.bf16.msra.mxu0 0
        %2467 = vmatprep.subr.bf16.mxu0 0
        %2468 = vmatpush1.bf16.msra.mxu0 0
        %2469 = vmatprep.subr.bf16.mxu0 0
        %2470 = vmatpush1.bf16.msra.mxu0 0
        %2471 = vmatprep.subr.bf16.mxu0 0
        %2472 = vmatpush1.bf16.msra.mxu0 0
        %2473 = vmatprep.subr.bf16.mxu0 0
        %2474 = vmatpush1.bf16.msra.mxu0 0
        %2475 = vmatprep.subr.bf16.mxu0 0
        %2476 = vmatpush1.bf16.msra.mxu0 0
        %2477 = vmatprep.subr.bf16.mxu0 0
        %2478 = vmatpush1.bf16.msra.mxu0 0
        %2479 = vmatprep.subr.bf16.mxu0 0
        %2480 = vmatpush1.bf16.msra.mxu0 0
        %2481 = vmatprep.subr.bf16.mxu0 0
        %2482 = vmatpush1.bf16.msra.mxu0 0
        %2483 = vmatprep.subr.bf16.mxu0 0
        %2484 = vmatpush1.bf16.msra.mxu0 0
        %2485 = vmatprep.mubr.bf16.mxu0 0
        %2486 = vmatmul.mubr.bf16.gmra.mrb[0].mxu0 %v458
        %v2487 = vpop.f32.mrb[0].mxu0
        %v2488 = vadd.f32 0.0, %v2487
        %v2489 = vpop.f32.mrb[0].mxu0
        %v2490 = vpop.f32.mrb[0].mxu0
        %v2491 = vpop.f32.mrb[0].mxu0
        %2492 = vdwg.mxu0
        %v2494 = vsel %vm413, %v2173, 0
        %2496 = vmatprep.subr.bf16.mxu0 0
        %2497 = vmatpush1.bf16.msra.mxu0 %v2494
        %2498 = vmatprep.subr.bf16.mxu0 0
        %2499 = vmatpush1.bf16.msra.mxu0 0
        %2500 = vmatprep.subr.bf16.mxu0 0
        %2501 = vmatpush1.bf16.msra.mxu0 0
        %2502 = vmatprep.subr.bf16.mxu0 0
        %2503 = vmatpush1.bf16.msra.mxu0 0
        %2504 = vmatprep.subr.bf16.mxu0 0
        %2505 = vmatpush1.bf16.msra.mxu0 0
        %2506 = vmatprep.subr.bf16.mxu0 0
        %2507 = vmatpush1.bf16.msra.mxu0 0
        %2508 = vmatprep.subr.bf16.mxu0 0
        %2509 = vmatpush1.bf16.msra.mxu0 0
        %2510 = vmatprep.subr.bf16.mxu0 0
        %2511 = vmatpush1.bf16.msra.mxu0 0
        %2512 = vmatprep.subr.bf16.mxu0 0
        %2513 = vmatpush1.bf16.msra.mxu0 0
        %2514 = vmatprep.subr.bf16.mxu0 0
        %2515 = vmatpush1.bf16.msra.mxu0 0
        %2516 = vmatprep.subr.bf16.mxu0 0
        %2517 = vmatpush1.bf16.msra.mxu0 0
        %2518 = vmatprep.subr.bf16.mxu0 0
        %2519 = vmatpush1.bf16.msra.mxu0 0
        %2520 = vmatprep.subr.bf16.mxu0 0
        %2521 = vmatpush1.bf16.msra.mxu0 0
        %2522 = vmatprep.subr.bf16.mxu0 0
        %2523 = vmatpush1.bf16.msra.mxu0 0
        %2524 = vmatprep.subr.bf16.mxu0 0
        %2525 = vmatpush1.bf16.msra.mxu0 0
        %2526 = vmatprep.subr.bf16.mxu0 0
        %2527 = vmatpush1.bf16.msra.mxu0 0
        %2528 = vmatprep.mubr.bf16.mxu0 0
        %2529 = vmatmul.mubr.bf16.gmra.mrb[0].mxu0 %v504
        %v2530 = vpop.f32.mrb[0].mxu0
        %v2531 = vadd.f32 0.0, %v2530
        %v2532 = vpop.f32.mrb[0].mxu0
        %v2533 = vpop.f32.mrb[0].mxu0
        %v2534 = vpop.f32.mrb[0].mxu0
        %2535 = vdwg.mxu0
        %v2537 = vsel %vm413, %v2174, 0
        %2539 = vmatprep.subr.bf16.mxu0 0
        %2540 = vmatpush1.bf16.msra.mxu0 %v2537
        %2541 = vmatprep.subr.bf16.mxu0 0
        %2542 = vmatpush1.bf16.msra.mxu0 0
        %2543 = vmatprep.subr.bf16.mxu0 0
        %2544 = vmatpush1.bf16.msra.mxu0 0
        %2545 = vmatprep.subr.bf16.mxu0 0
        %2546 = vmatpush1.bf16.msra.mxu0 0
        %2547 = vmatprep.subr.bf16.mxu0 0
        %2548 = vmatpush1.bf16.msra.mxu0 0
        %2549 = vmatprep.subr.bf16.mxu0 0
        %2550 = vmatpush1.bf16.msra.mxu0 0
        %2551 = vmatprep.subr.bf16.mxu0 0
        %2552 = vmatpush1.bf16.msra.mxu0 0
        %2553 = vmatprep.subr.bf16.mxu0 0
        %2554 = vmatpush1.bf16.msra.mxu0 0
        %2555 = vmatprep.subr.bf16.mxu0 0
        %2556 = vmatpush1.bf16.msra.mxu0 0
        %2557 = vmatprep.subr.bf16.mxu0 0
        %2558 = vmatpush1.bf16.msra.mxu0 0
        %2559 = vmatprep.subr.bf16.mxu0 0
        %2560 = vmatpush1.bf16.msra.mxu0 0
        %2561 = vmatprep.subr.bf16.mxu0 0
        %2562 = vmatpush1.bf16.msra.mxu0 0
        %2563 = vmatprep.subr.bf16.mxu0 0
        %2564 = vmatpush1.bf16.msra.mxu0 0
        %2565 = vmatprep.subr.bf16.mxu0 0
        %2566 = vmatpush1.bf16.msra.mxu0 0
        %2567 = vmatprep.subr.bf16.mxu0 0
        %2568 = vmatpush1.bf16.msra.mxu0 0
        %2569 = vmatprep.subr.bf16.mxu0 0
        %2570 = vmatpush1.bf16.msra.mxu0 0
        %2571 = vmatprep.mubr.bf16.mxu0 0
        %2572 = vmatmul.mubr.bf16.gmra.mrb[0].mxu0 %v550
        %v2573 = vpop.f32.mrb[0].mxu0
        %v2574 = vadd.f32 0.0, %v2573
        %v2575 = vpop.f32.mrb[0].mxu0
        %v2576 = vpop.f32.mrb[0].mxu0
        %v2577 = vpop.f32.mrb[0].mxu0
        %2578 = vdwg.mxu0
        %v2580 = vsel %vm413, %v2175, 0
        %2582 = vmatprep.subr.bf16.mxu0 0
        %2583 = vmatpush1.bf16.msra.mxu0 %v2580
        %2584 = vmatprep.subr.bf16.mxu0 0
        %2585 = vmatpush1.bf16.msra.mxu0 0
        %2586 = vmatprep.subr.bf16.mxu0 0
        %2587 = vmatpush1.bf16.msra.mxu0 0
        %2588 = vmatprep.subr.bf16.mxu0 0
        %2589 = vmatpush1.bf16.msra.mxu0 0
        %2590 = vmatprep.subr.bf16.mxu0 0
        %2591 = vmatpush1.bf16.msra.mxu0 0
        %2592 = vmatprep.subr.bf16.mxu0 0
        %2593 = vmatpush1.bf16.msra.mxu0 0
        %2594 = vmatprep.subr.bf16.mxu0 0
        %2595 = vmatpush1.bf16.msra.mxu0 0
        %2596 = vmatprep.subr.bf16.mxu0 0
        %2597 = vmatpush1.bf16.msra.mxu0 0
        %2598 = vmatprep.subr.bf16.mxu0 0
        %2599 = vmatpush1.bf16.msra.mxu0 0
        %2600 = vmatprep.subr.bf16.mxu0 0
        %2601 = vmatpush1.bf16.msra.mxu0 0
        %2602 = vmatprep.subr.bf16.mxu0 0
        %2603 = vmatpush1.bf16.msra.mxu0 0
        %2604 = vmatprep.subr.bf16.mxu0 0
        %2605 = vmatpush1.bf16.msra.mxu0 0
        %2606 = vmatprep.subr.bf16.mxu0 0
        %2607 = vmatpush1.bf16.msra.mxu0 0
        %2608 = vmatprep.subr.bf16.mxu0 0
        %2609 = vmatpush1.bf16.msra.mxu0 0
        %2610 = vmatprep.subr.bf16.mxu0 0
        %2611 = vmatpush1.bf16.msra.mxu0 0
        %2612 = vmatprep.subr.bf16.mxu0 0
        %2613 = vmatpush1.bf16.msra.mxu0 0
        %2614 = vmatprep.mubr.bf16.mxu0 0
        %2615 = vmatmul.mubr.bf16.gmra.mrb[0].mxu0 %v596
        %v2616 = vpop.f32.mrb[0].mxu0
        %v2617 = vadd.f32 0.0, %v2616
        %v2618 = vpop.f32.mrb[0].mxu0
        %v2619 = vpop.f32.mrb[0].mxu0
        %v2620 = vpop.f32.mrb[0].mxu0
        %2621 = vdwg.mxu0
        %v2623 = vsel %vm413, %v2176, 0
        %2625 = vmatprep.subr.bf16.mxu0 0
        %2626 = vmatpush1.bf16.msra.mxu0 %v2623
        %2627 = vmatprep.subr.bf16.mxu0 0
        %2628 = vmatpush1.bf16.msra.mxu0 0
        %2629 = vmatprep.subr.bf16.mxu0 0
        %2630 = vmatpush1.bf16.msra.mxu0 0
        %2631 = vmatprep.subr.bf16.mxu0 0
        %2632 = vmatpush1.bf16.msra.mxu0 0
        %2633 = vmatprep.subr.bf16.mxu0 0
        %2634 = vmatpush1.bf16.msra.mxu0 0
        %2635 = vmatprep.subr.bf16.mxu0 0
        %2636 = vmatpush1.bf16.msra.mxu0 0
        %2637 = vmatprep.subr.bf16.mxu0 0
        %2638 = vmatpush1.bf16.msra.mxu0 0
        %2639 = vmatprep.subr.bf16.mxu0 0
        %2640 = vmatpush1.bf16.msra.mxu0 0
        %2641 = vmatprep.subr.bf16.mxu0 0
        %2642 = vmatpush1.bf16.msra.mxu0 0
        %2643 = vmatprep.subr.bf16.mxu0 0
        %2644 = vmatpush1.bf16.msra.mxu0 0
        %2645 = vmatprep.subr.bf16.mxu0 0
        %2646 = vmatpush1.bf16.msra.mxu0 0
        %2647 = vmatprep.subr.bf16.mxu0 0
        %2648 = vmatpush1.bf16.msra.mxu0 0
        %2649 = vmatprep.subr.bf16.mxu0 0
        %2650 = vmatpush1.bf16.msra.mxu0 0
        %2651 = vmatprep.subr.bf16.mxu0 0
        %2652 = vmatpush1.bf16.msra.mxu0 0
        %2653 = vmatprep.subr.bf16.mxu0 0
        %2654 = vmatpush1.bf16.msra.mxu0 0
        %2655 = vmatprep.subr.bf16.mxu0 0
        %2656 = vmatpush1.bf16.msra.mxu0 0
        %2657 = vmatprep.mubr.bf16.mxu0 0
        %2658 = vmatmul.mubr.bf16.gmra.mrb[0].mxu0 %v642
        %v2659 = vpop.f32.mrb[0].mxu0
        %v2660 = vadd.f32 0.0, %v2659
        %v2661 = vpop.f32.mrb[0].mxu0
        %v2662 = vpop.f32.mrb[0].mxu0
        %v2663 = vpop.f32.mrb[0].mxu0
        %2664 = vdwg.mxu0
        %v2666 = vsel %vm413, %v2177, 0
        %2668 = vmatprep.subr.bf16.mxu0 0
        %2669 = vmatpush1.bf16.msra.mxu0 %v2666
        %2670 = vmatprep.subr.bf16.mxu0 0
        %2671 = vmatpush1.bf16.msra.mxu0 0
        %2672 = vmatprep.subr.bf16.mxu0 0
        %2673 = vmatpush1.bf16.msra.mxu0 0
        %2674 = vmatprep.subr.bf16.mxu0 0
        %2675 = vmatpush1.bf16.msra.mxu0 0
        %2676 = vmatprep.subr.bf16.mxu0 0
        %2677 = vmatpush1.bf16.msra.mxu0 0
        %2678 = vmatprep.subr.bf16.mxu0 0
        %2679 = vmatpush1.bf16.msra.mxu0 0
        %2680 = vmatprep.subr.bf16.mxu0 0
        %2681 = vmatpush1.bf16.msra.mxu0 0
        %2682 = vmatprep.subr.bf16.mxu0 0
        %2683 = vmatpush1.bf16.msra.mxu0 0
        %2684 = vmatprep.subr.bf16.mxu0 0
        %2685 = vmatpush1.bf16.msra.mxu0 0
        %2686 = vmatprep.subr.bf16.mxu0 0
        %2687 = vmatpush1.bf16.msra.mxu0 0
        %2688 = vmatprep.subr.bf16.mxu0 0
        %2689 = vmatpush1.bf16.msra.mxu0 0
        %2690 = vmatprep.subr.bf16.mxu0 0
        %2691 = vmatpush1.bf16.msra.mxu0 0
        %2692 = vmatprep.subr.bf16.mxu0 0
        %2693 = vmatpush1.bf16.msra.mxu0 0
        %2694 = vmatprep.subr.bf16.mxu0 0
        %2695 = vmatpush1.bf16.msra.mxu0 0
        %2696 = vmatprep.subr.bf16.mxu0 0
        %2697 = vmatpush1.bf16.msra.mxu0 0
        %2698 = vmatprep.subr.bf16.mxu0 0
        %2699 = vmatpush1.bf16.msra.mxu0 0
        %2700 = vmatprep.mubr.bf16.mxu0 0
        %2701 = vmatmul.mubr.bf16.gmra.mrb[0].mxu0 %v688
        %v2702 = vpop.f32.mrb[0].mxu0
        %v2703 = vadd.f32 0.0, %v2702
        %v2704 = vpop.f32.mrb[0].mxu0
        %v2705 = vpop.f32.mrb[0].mxu0
        %v2706 = vpop.f32.mrb[0].mxu0
        %2707 = vdwg.mxu0
        %v2709 = vsel %vm413, %v2178, 0
        %2711 = vmatprep.subr.bf16.mxu0 0
        %2712 = vmatpush1.bf16.msra.mxu0 %v2709
        %2713 = vmatprep.subr.bf16.mxu0 0
        %2714 = vmatpush1.bf16.msra.mxu0 0
        %2715 = vmatprep.subr.bf16.mxu0 0
        %2716 = vmatpush1.bf16.msra.mxu0 0
        %2717 = vmatprep.subr.bf16.mxu0 0
        %2718 = vmatpush1.bf16.msra.mxu0 0
        %2719 = vmatprep.subr.bf16.mxu0 0
        %2720 = vmatpush1.bf16.msra.mxu0 0
        %2721 = vmatprep.subr.bf16.mxu0 0
        %2722 = vmatpush1.bf16.msra.mxu0 0
        %2723 = vmatprep.subr.bf16.mxu0 0
        %2724 = vmatpush1.bf16.msra.mxu0 0
        %2725 = vmatprep.subr.bf16.mxu0 0
        %2726 = vmatpush1.bf16.msra.mxu0 0
        %2727 = vmatprep.subr.bf16.mxu0 0
        %2728 = vmatpush1.bf16.msra.mxu0 0
        %2729 = vmatprep.subr.bf16.mxu0 0
        %2730 = vmatpush1.bf16.msra.mxu0 0
        %2731 = vmatprep.subr.bf16.mxu0 0
        %2732 = vmatpush1.bf16.msra.mxu0 0
        %2733 = vmatprep.subr.bf16.mxu0 0
        %2734 = vmatpush1.bf16.msra.mxu0 0
        %2735 = vmatprep.subr.bf16.mxu0 0
        %2736 = vmatpush1.bf16.msra.mxu0 0
        %2737 = vmatprep.subr.bf16.mxu0 0
        %2738 = vmatpush1.bf16.msra.mxu0 0
        %2739 = vmatprep.subr.bf16.mxu0 0
        %2740 = vmatpush1.bf16.msra.mxu0 0
        %2741 = vmatprep.subr.bf16.mxu0 0
        %2742 = vmatpush1.bf16.msra.mxu0 0
        %2743 = vmatprep.mubr.bf16.mxu0 0
        %2744 = vmatmul.mubr.bf16.gmra.mrb[0].mxu0 %v734
        %v2745 = vpop.f32.mrb[0].mxu0
        %v2746 = vadd.f32 0.0, %v2745
        %v2747 = vpop.f32.mrb[0].mxu0
        %v2748 = vpop.f32.mrb[0].mxu0
        %v2749 = vpop.f32.mrb[0].mxu0
        %2750 = vdwg.mxu0
        %v2752 = vsel %vm413, %v2179, 0
        %2754 = vmatprep.subr.bf16.mxu0 0
        %2755 = vmatpush1.bf16.msra.mxu0 %v2752
        %2756 = vmatprep.subr.bf16.mxu0 0
        %2757 = vmatpush1.bf16.msra.mxu0 0
        %2758 = vmatprep.subr.bf16.mxu0 0
        %2759 = vmatpush1.bf16.msra.mxu0 0
        %2760 = vmatprep.subr.bf16.mxu0 0
        %2761 = vmatpush1.bf16.msra.mxu0 0
        %2762 = vmatprep.subr.bf16.mxu0 0
        %2763 = vmatpush1.bf16.msra.mxu0 0
        %2764 = vmatprep.subr.bf16.mxu0 0
        %2765 = vmatpush1.bf16.msra.mxu0 0
        %2766 = vmatprep.subr.bf16.mxu0 0
        %2767 = vmatpush1.bf16.msra.mxu0 0
        %2768 = vmatprep.subr.bf16.mxu0 0
        %2769 = vmatpush1.bf16.msra.mxu0 0
        %2770 = vmatprep.subr.bf16.mxu0 0
        %2771 = vmatpush1.bf16.msra.mxu0 0
        %2772 = vmatprep.subr.bf16.mxu0 0
        %2773 = vmatpush1.bf16.msra.mxu0 0
        %2774 = vmatprep.subr.bf16.mxu0 0
        %2775 = vmatpush1.bf16.msra.mxu0 0
        %2776 = vmatprep.subr.bf16.mxu0 0
        %2777 = vmatpush1.bf16.msra.mxu0 0
        %2778 = vmatprep.subr.bf16.mxu0 0
        %2779 = vmatpush1.bf16.msra.mxu0 0
        %2780 = vmatprep.subr.bf16.mxu0 0
        %2781 = vmatpush1.bf16.msra.mxu0 0
        %2782 = vmatprep.subr.bf16.mxu0 0
        %2783 = vmatpush1.bf16.msra.mxu0 0
        %2784 = vmatprep.subr.bf16.mxu0 0
        %2785 = vmatpush1.bf16.msra.mxu0 0
        %2786 = vmatprep.mubr.bf16.mxu0 0
        %2787 = vmatmul.mubr.bf16.gmra.mrb[0].mxu0 %v780
        %v2788 = vpop.f32.mrb[0].mxu0
        %v2789 = vadd.f32 0.0, %v2788
        %v2790 = vpop.f32.mrb[0].mxu0
        %v2791 = vpop.f32.mrb[0].mxu0
        %v2792 = vpop.f32.mrb[0].mxu0
        %2793 = vdwg.mxu0
        %v2795 = vsel %vm413, %v2180, 0
        %2797 = vmatprep.subr.bf16.mxu0 0
        %2798 = vmatpush1.bf16.msra.mxu0 %v2795
        %2799 = vmatprep.subr.bf16.mxu0 0
        %2800 = vmatpush1.bf16.msra.mxu0 0
        %2801 = vmatprep.subr.bf16.mxu0 0
        %2802 = vmatpush1.bf16.msra.mxu0 0
        %2803 = vmatprep.subr.bf16.mxu0 0
        %2804 = vmatpush1.bf16.msra.mxu0 0
        %2805 = vmatprep.subr.bf16.mxu0 0
        %2806 = vmatpush1.bf16.msra.mxu0 0
        %2807 = vmatprep.subr.bf16.mxu0 0
        %2808 = vmatpush1.bf16.msra.mxu0 0
        %2809 = vmatprep.subr.bf16.mxu0 0
        %2810 = vmatpush1.bf16.msra.mxu0 0
        %2811 = vmatprep.subr.bf16.mxu0 0
        %2812 = vmatpush1.bf16.msra.mxu0 0
        %2813 = vmatprep.subr.bf16.mxu0 0
        %2814 = vmatpush1.bf16.msra.mxu0 0
        %2815 = vmatprep.subr.bf16.mxu0 0
        %2816 = vmatpush1.bf16.msra.mxu0 0
        %2817 = vmatprep.subr.bf16.mxu0 0
        %2818 = vmatpush1.bf16.msra.mxu0 0
        %2819 = vmatprep.subr.bf16.mxu0 0
        %2820 = vmatpush1.bf16.msra.mxu0 0
        %2821 = vmatprep.subr.bf16.mxu0 0
        %2822 = vmatpush1.bf16.msra.mxu0 0
        %2823 = vmatprep.subr.bf16.mxu0 0
        %2824 = vmatpush1.bf16.msra.mxu0 0
        %2825 = vmatprep.subr.bf16.mxu0 0
        %2826 = vmatpush1.bf16.msra.mxu0 0
        %2827 = vmatprep.subr.bf16.mxu0 0
        %2828 = vmatpush1.bf16.msra.mxu0 0
        %2829 = vmatprep.mubr.bf16.mxu0 0
        %2830 = vmatmul.mubr.bf16.gmra.mrb[0].mxu0 %v823
        %v2831 = vpop.f32.mrb[0].mxu0
        %v2832 = vadd.f32 0.0, %v2831
        %v2833 = vpop.f32.mrb[0].mxu0
        %v2834 = vpop.f32.mrb[0].mxu0
        %v2835 = vpop.f32.mrb[0].mxu0
        %2836 = vdwg.mxu0
        %v2838 = vsel %vm413, %v2181, 0
        %2840 = vmatprep.subr.bf16.mxu0 0
        %2841 = vmatpush1.bf16.msra.mxu0 %v2838
        %2842 = vmatprep.subr.bf16.mxu0 0
        %2843 = vmatpush1.bf16.msra.mxu0 0
        %2844 = vmatprep.subr.bf16.mxu0 0
        %2845 = vmatpush1.bf16.msra.mxu0 0
        %2846 = vmatprep.subr.bf16.mxu0 0
        %2847 = vmatpush1.bf16.msra.mxu0 0
        %2848 = vmatprep.subr.bf16.mxu0 0
        %2849 = vmatpush1.bf16.msra.mxu0 0
        %2850 = vmatprep.subr.bf16.mxu0 0
        %2851 = vmatpush1.bf16.msra.mxu0 0
        %2852 = vmatprep.subr.bf16.mxu0 0
        %2853 = vmatpush1.bf16.msra.mxu0 0
        %2854 = vmatprep.subr.bf16.mxu0 0
        %2855 = vmatpush1.bf16.msra.mxu0 0
        %2856 = vmatprep.subr.bf16.mxu0 0
        %2857 = vmatpush1.bf16.msra.mxu0 0
        %2858 = vmatprep.subr.bf16.mxu0 0
        %2859 = vmatpush1.bf16.msra.mxu0 0
        %2860 = vmatprep.subr.bf16.mxu0 0
        %2861 = vmatpush1.bf16.msra.mxu0 0
        %2862 = vmatprep.subr.bf16.mxu0 0
        %2863 = vmatpush1.bf16.msra.mxu0 0
        %2864 = vmatprep.subr.bf16.mxu0 0
        %2865 = vmatpush1.bf16.msra.mxu0 0
        %2866 = vmatprep.subr.bf16.mxu0 0
        %2867 = vmatpush1.bf16.msra.mxu0 0
        %2868 = vmatprep.subr.bf16.mxu0 0
        %2869 = vmatpush1.bf16.msra.mxu0 0
        %2870 = vmatprep.subr.bf16.mxu0 0
        %2871 = vmatpush1.bf16.msra.mxu0 0
        %2872 = vmatprep.mubr.bf16.mxu0 0
        %2873 = vmatmul.mubr.bf16.gmra.mrb[0].mxu0 %v866
        %v2874 = vpop.f32.mrb[0].mxu0
        %v2875 = vadd.f32 0.0, %v2874
        %v2876 = vpop.f32.mrb[0].mxu0
        %v2877 = vpop.f32.mrb[0].mxu0
        %v2878 = vpop.f32.mrb[0].mxu0
        %2879 = vdwg.mxu0
        %v2881 = vsel %vm413, %v2182, 0
        %2883 = vmatprep.subr.bf16.mxu0 0
        %2884 = vmatpush1.bf16.msra.mxu0 %v2881
        %2885 = vmatprep.subr.bf16.mxu0 0
        %2886 = vmatpush1.bf16.msra.mxu0 0
        %2887 = vmatprep.subr.bf16.mxu0 0
        %2888 = vmatpush1.bf16.msra.mxu0 0
        %2889 = vmatprep.subr.bf16.mxu0 0
        %2890 = vmatpush1.bf16.msra.mxu0 0
        %2891 = vmatprep.subr.bf16.mxu0 0
        %2892 = vmatpush1.bf16.msra.mxu0 0
        %2893 = vmatprep.subr.bf16.mxu0 0
        %2894 = vmatpush1.bf16.msra.mxu0 0
        %2895 = vmatprep.subr.bf16.mxu0 0
        %2896 = vmatpush1.bf16.msra.mxu0 0
        %2897 = vmatprep.subr.bf16.mxu0 0
        %2898 = vmatpush1.bf16.msra.mxu0 0
        %2899 = vmatprep.subr.bf16.mxu0 0
        %2900 = vmatpush1.bf16.msra.mxu0 0
        %2901 = vmatprep.subr.bf16.mxu0 0
        %2902 = vmatpush1.bf16.msra.mxu0 0
        %2903 = vmatprep.subr.bf16.mxu0 0
        %2904 = vmatpush1.bf16.msra.mxu0 0
        %2905 = vmatprep.subr.bf16.mxu0 0
        %2906 = vmatpush1.bf16.msra.mxu0 0
        %2907 = vmatprep.subr.bf16.mxu0 0
        %2908 = vmatpush1.bf16.msra.mxu0 0
        %2909 = vmatprep.subr.bf16.mxu0 0
        %2910 = vmatpush1.bf16.msra.mxu0 0
        %2911 = vmatprep.subr.bf16.mxu0 0
        %2912 = vmatpush1.bf16.msra.mxu0 0
        %2913 = vmatprep.subr.bf16.mxu0 0
        %2914 = vmatpush1.bf16.msra.mxu0 0
        %2915 = vmatprep.mubr.bf16.mxu0 0
        %2916 = vmatmul.mubr.bf16.gmra.mrb[0].mxu0 %v909
        %v2917 = vpop.f32.mrb[0].mxu0
        %v2918 = vadd.f32 0.0, %v2917
        %v2919 = vpop.f32.mrb[0].mxu0
        %v2920 = vpop.f32.mrb[0].mxu0
        %v2921 = vpop.f32.mrb[0].mxu0
        %2922 = vdwg.mxu0
        %v2924 = vsel %vm413, %v2183, 0
        %2926 = vmatprep.subr.bf16.mxu0 0
        %2927 = vmatpush1.bf16.msra.mxu0 %v2924
        %2928 = vmatprep.subr.bf16.mxu0 0
        %2929 = vmatpush1.bf16.msra.mxu0 0
        %2930 = vmatprep.subr.bf16.mxu0 0
        %2931 = vmatpush1.bf16.msra.mxu0 0
        %2932 = vmatprep.subr.bf16.mxu0 0
        %2933 = vmatpush1.bf16.msra.mxu0 0
        %2934 = vmatprep.subr.bf16.mxu0 0
        %2935 = vmatpush1.bf16.msra.mxu0 0
        %2936 = vmatprep.subr.bf16.mxu0 0
        %2937 = vmatpush1.bf16.msra.mxu0 0
        %2938 = vmatprep.subr.bf16.mxu0 0
        %2939 = vmatpush1.bf16.msra.mxu0 0
        %2940 = vmatprep.subr.bf16.mxu0 0
        %2941 = vmatpush1.bf16.msra.mxu0 0
        %2942 = vmatprep.subr.bf16.mxu0 0
        %2943 = vmatpush1.bf16.msra.mxu0 0
        %2944 = vmatprep.subr.bf16.mxu0 0
        %2945 = vmatpush1.bf16.msra.mxu0 0
        %2946 = vmatprep.subr.bf16.mxu0 0
        %2947 = vmatpush1.bf16.msra.mxu0 0
        %2948 = vmatprep.subr.bf16.mxu0 0
        %2949 = vmatpush1.bf16.msra.mxu0 0
        %2950 = vmatprep.subr.bf16.mxu0 0
        %2951 = vmatpush1.bf16.msra.mxu0 0
        %2952 = vmatprep.subr.bf16.mxu0 0
        %2953 = vmatpush1.bf16.msra.mxu0 0
        %2954 = vmatprep.subr.bf16.mxu0 0
        %2955 = vmatpush1.bf16.msra.mxu0 0
        %2956 = vmatprep.subr.bf16.mxu0 0
        %2957 = vmatpush1.bf16.msra.mxu0 0
        %2958 = vmatprep.mubr.bf16.mxu0 0
        %2959 = vmatmul.mubr.bf16.gmra.mrb[0].mxu0 %v952
        %v2960 = vpop.f32.mrb[0].mxu0
        %v2961 = vadd.f32 0.0, %v2960
        %v2962 = vpop.f32.mrb[0].mxu0
        %v2963 = vpop.f32.mrb[0].mxu0
        %v2964 = vpop.f32.mrb[0].mxu0
        %2965 = vdwg.mxu0
        %v2967 = vsel %vm413, %v2184, 0
        %2969 = vmatprep.subr.bf16.mxu0 0
        %2970 = vmatpush1.bf16.msra.mxu0 %v2967
        %2971 = vmatprep.subr.bf16.mxu0 0
        %2972 = vmatpush1.bf16.msra.mxu0 0
        %2973 = vmatprep.subr.bf16.mxu0 0
        %2974 = vmatpush1.bf16.msra.mxu0 0
        %2975 = vmatprep.subr.bf16.mxu0 0
        %2976 = vmatpush1.bf16.msra.mxu0 0
        %2977 = vmatprep.subr.bf16.mxu0 0
        %2978 = vmatpush1.bf16.msra.mxu0 0
        %2979 = vmatprep.subr.bf16.mxu0 0
        %2980 = vmatpush1.bf16.msra.mxu0 0
        %2981 = vmatprep.subr.bf16.mxu0 0
        %2982 = vmatpush1.bf16.msra.mxu0 0
        %2983 = vmatprep.subr.bf16.mxu0 0
        %2984 = vmatpush1.bf16.msra.mxu0 0
        %2985 = vmatprep.subr.bf16.mxu0 0
        %2986 = vmatpush1.bf16.msra.mxu0 0
        %2987 = vmatprep.subr.bf16.mxu0 0
        %2988 = vmatpush1.bf16.msra.mxu0 0
        %2989 = vmatprep.subr.bf16.mxu0 0
        %2990 = vmatpush1.bf16.msra.mxu0 0
        %2991 = vmatprep.subr.bf16.mxu0 0
        %2992 = vmatpush1.bf16.msra.mxu0 0
        %2993 = vmatprep.subr.bf16.mxu0 0
        %2994 = vmatpush1.bf16.msra.mxu0 0
        %2995 = vmatprep.subr.bf16.mxu0 0
        %2996 = vmatpush1.bf16.msra.mxu0 0
        %2997 = vmatprep.subr.bf16.mxu0 0
        %2998 = vmatpush1.bf16.msra.mxu0 0
        %2999 = vmatprep.subr.bf16.mxu0 0
        %3000 = vmatpush1.bf16.msra.mxu0 0
        %3001 = vmatprep.mubr.bf16.mxu0 0
        %3002 = vmatmul.mubr.bf16.gmra.mrb[0].mxu0 %v995
        %v3003 = vpop.f32.mrb[0].mxu0
        %v3004 = vadd.f32 0.0, %v3003
        %v3005 = vpop.f32.mrb[0].mxu0
        %v3006 = vpop.f32.mrb[0].mxu0
        %v3007 = vpop.f32.mrb[0].mxu0
        %3008 = vdwg.mxu0
        %v3010 = vsel %vm413, %v2185, 0
        %3012 = vmatprep.subr.bf16.mxu0 0
        %3013 = vmatpush1.bf16.msra.mxu0 %v3010
        %3014 = vmatprep.subr.bf16.mxu0 0
        %3015 = vmatpush1.bf16.msra.mxu0 0
        %3016 = vmatprep.subr.bf16.mxu0 0
        %3017 = vmatpush1.bf16.msra.mxu0 0
        %3018 = vmatprep.subr.bf16.mxu0 0
        %3019 = vmatpush1.bf16.msra.mxu0 0
        %3020 = vmatprep.subr.bf16.mxu0 0
        %3021 = vmatpush1.bf16.msra.mxu0 0
        %3022 = vmatprep.subr.bf16.mxu0 0
        %3023 = vmatpush1.bf16.msra.mxu0 0
        %3024 = vmatprep.subr.bf16.mxu0 0
        %3025 = vmatpush1.bf16.msra.mxu0 0
        %3026 = vmatprep.subr.bf16.mxu0 0
        %3027 = vmatpush1.bf16.msra.mxu0 0
        %3028 = vmatprep.subr.bf16.mxu0 0
        %3029 = vmatpush1.bf16.msra.mxu0 0
        %3030 = vmatprep.subr.bf16.mxu0 0
        %3031 = vmatpush1.bf16.msra.mxu0 0
        %3032 = vmatprep.subr.bf16.mxu0 0
        %3033 = vmatpush1.bf16.msra.mxu0 0
        %3034 = vmatprep.subr.bf16.mxu0 0
        %3035 = vmatpush1.bf16.msra.mxu0 0
        %3036 = vmatprep.subr.bf16.mxu0 0
        %3037 = vmatpush1.bf16.msra.mxu0 0
        %3038 = vmatprep.subr.bf16.mxu0 0
        %3039 = vmatpush1.bf16.msra.mxu0 0
        %3040 = vmatprep.subr.bf16.mxu0 0
        %3041 = vmatpush1.bf16.msra.mxu0 0
        %3042 = vmatprep.subr.bf16.mxu0 0
        %3043 = vmatpush1.bf16.msra.mxu0 0
        %3044 = vmatprep.mubr.bf16.mxu0 0
        %3045 = vmatmul.mubr.bf16.gmra.mrb[0].mxu0 %v1038
        %v3046 = vpop.f32.mrb[0].mxu0
        %v3047 = vadd.f32 0.0, %v3046
        %v3048 = vpop.f32.mrb[0].mxu0
        %v3049 = vpop.f32.mrb[0].mxu0
        %v3050 = vpop.f32.mrb[0].mxu0
        %3051 = vdwg.mxu0
        %v3053 = vsel %vm413, %v2186, 0
        %3055 = vmatprep.subr.bf16.mxu0 0
        %3056 = vmatpush1.bf16.msra.mxu0 %v3053
        %3057 = vmatprep.subr.bf16.mxu0 0
        %3058 = vmatpush1.bf16.msra.mxu0 0
        %3059 = vmatprep.subr.bf16.mxu0 0
        %3060 = vmatpush1.bf16.msra.mxu0 0
        %3061 = vmatprep.subr.bf16.mxu0 0
        %3062 = vmatpush1.bf16.msra.mxu0 0
        %3063 = vmatprep.subr.bf16.mxu0 0
        %3064 = vmatpush1.bf16.msra.mxu0 0
        %3065 = vmatprep.subr.bf16.mxu0 0
        %3066 = vmatpush1.bf16.msra.mxu0 0
        %3067 = vmatprep.subr.bf16.mxu0 0
        %3068 = vmatpush1.bf16.msra.mxu0 0
        %3069 = vmatprep.subr.bf16.mxu0 0
        %3070 = vmatpush1.bf16.msra.mxu0 0
        %3071 = vmatprep.subr.bf16.mxu0 0
        %3072 = vmatpush1.bf16.msra.mxu0 0
        %3073 = vmatprep.subr.bf16.mxu0 0
        %3074 = vmatpush1.bf16.msra.mxu0 0
        %3075 = vmatprep.subr.bf16.mxu0 0
        %3076 = vmatpush1.bf16.msra.mxu0 0
        %3077 = vmatprep.subr.bf16.mxu0 0
        %3078 = vmatpush1.bf16.msra.mxu0 0
        %3079 = vmatprep.subr.bf16.mxu0 0
        %3080 = vmatpush1.bf16.msra.mxu0 0
        %3081 = vmatprep.subr.bf16.mxu0 0
        %3082 = vmatpush1.bf16.msra.mxu0 0
        %3083 = vmatprep.subr.bf16.mxu0 0
        %3084 = vmatpush1.bf16.msra.mxu0 0
        %3085 = vmatprep.subr.bf16.mxu0 0
        %3086 = vmatpush1.bf16.msra.mxu0 0
        %3087 = vmatprep.mubr.bf16.mxu0 0
        %3088 = vmatmul.mubr.bf16.gmra.mrb[0].mxu0 %v1081
        %v3089 = vpop.f32.mrb[0].mxu0
        %v3090 = vadd.f32 0.0, %v3089
        %v3091 = vpop.f32.mrb[0].mxu0
        %v3092 = vpop.f32.mrb[0].mxu0
        %v3093 = vpop.f32.mrb[0].mxu0
        %3094 = vdwg.mxu0
        %v3095 = vmul.f32 %v2445, 2.0
        %v3096 = vmul.f32 %v2488, 2.0
        %v3097 = vmul.f32 %v2531, 2.0
        %v3098 = vmul.f32 %v2574, 2.0
        %v3099 = vmul.f32 %v2617, 2.0
        %v3100 = vmul.f32 %v2660, 2.0
        %v3101 = vmul.f32 %v2703, 2.0
        %v3102 = vmul.f32 %v2746, 2.0
        %v3103 = vmul.f32 %v2789, 2.0
        %v3104 = vmul.f32 %v2832, 2.0
        %v3105 = vmul.f32 %v2875, 2.0
        %v3106 = vmul.f32 %v2918, 2.0
        %v3107 = vmul.f32 %v2961, 2.0
        %v3108 = vmul.f32 %v3004, 2.0
        %v3109 = vmul.f32 %v3047, 2.0
        %v3110 = vmul.f32 %v3090, 2.0
        %v3111 = vsub.f32 %v3095, %v376
        %v3112 = vsub.f32 %v3096, %v377
        %v3113 = vsub.f32 %v3097, %v378
        %v3114 = vsub.f32 %v3098, %v379
        %v3115 = vsub.f32 %v3099, %v380
        %v3116 = vsub.f32 %v3100, %v381
        %v3117 = vsub.f32 %v3101, %v382
        %v3118 = vsub.f32 %v3102, %v383
        %v3119 = vsub.f32 %v3103, %v376
        %v3120 = vsub.f32 %v3104, %v377
        %v3121 = vsub.f32 %v3105, %v378
        %v3122 = vsub.f32 %v3106, %v379
        %v3123 = vsub.f32 %v3107, %v380
        %v3124 = vsub.f32 %v3108, %v381
        %v3125 = vsub.f32 %v3109, %v382
        %v3126 = vsub.f32 %v3110, %v383
        %v3127 = vpack.c.bf16 %v3111, %v3111
        %v3128 = vpack.c.bf16 %v3112, %v3112
        %v3129 = vpack.c.bf16 %v3113, %v3113
        %v3130 = vpack.c.bf16 %v3114, %v3114
        %v3131 = vpack.c.bf16 %v3115, %v3115
        %v3132 = vpack.c.bf16 %v3116, %v3116
        %v3133 = vpack.c.bf16 %v3117, %v3117
        %v3134 = vpack.c.bf16 %v3118, %v3118
        %v3135 = vpack.c.bf16 %v3119, %v3119
        %v3136 = vpack.c.bf16 %v3120, %v3120
        %v3137 = vpack.c.bf16 %v3121, %v3121
        %v3138 = vpack.c.bf16 %v3122, %v3122
        %v3139 = vpack.c.bf16 %v3123, %v3123
        %v3140 = vpack.c.bf16 %v3124, %v3124
        %v3141 = vpack.c.bf16 %v3125, %v3125
        %v3142 = vpack.c.bf16 %v3126, %v3126
        %s3143 = scalar_lea.vmem %s2, 20
        %v3144 = vld [vmem:[%s3143] sm:$0xf]
        %v3153 = vunpack.c.l.b16 %v3127
        %v3154 = vunpack.c.l.b16 %v3128
        %v3155 = vunpack.c.l.b16 %v3129
        %v3156 = vunpack.c.l.b16 %v3130
        %v3157 = vunpack.c.l.b16 %v3131
        %v3158 = vunpack.c.l.b16 %v3132
        %v3159 = vunpack.c.l.b16 %v3133
        %v3160 = vunpack.c.l.b16 %v3134
        %v3161 = vpack.c.b16 %v3154, %v3153
        %v3162 = vpack.c.b16 %v3156, %v3155
        %v3163 = vpack.c.b16 %v3158, %v3157
        %v3164 = vpack.c.b16 %v3160, %v3159
        %v3166 = vsel %vm409, %v3161, 0
        %v3169 = vsel %vm409, %v3162, 0
        %v3172 = vsel %vm409, %v3163, 0
        %v3175 = vsel %vm409, %v3164, 0
        %v3178 = vsel %vm413, %v3144, 0
        %3180 = vmatprep.subr.bf16.mxu0 0
        %3181 = vmatpush1.bf16.msra.mxu0 %v3178
        %3182 = vmatprep.subr.bf16.mxu0 0
        %3183 = vmatpush1.bf16.msra.mxu0 0
        %3184 = vmatprep.subr.bf16.mxu0 0
        %3185 = vmatpush1.bf16.msra.mxu0 0
        %3186 = vmatprep.subr.bf16.mxu0 0
        %3187 = vmatpush1.bf16.msra.mxu0 0
        %3188 = vmatprep.subr.bf16.mxu0 0
        %3189 = vmatpush1.bf16.msra.mxu0 0
        %3190 = vmatprep.subr.bf16.mxu0 0
        %3191 = vmatpush1.bf16.msra.mxu0 0
        %3192 = vmatprep.subr.bf16.mxu0 0
        %3193 = vmatpush1.bf16.msra.mxu0 0
        %3194 = vmatprep.subr.bf16.mxu0 0
        %3195 = vmatpush1.bf16.msra.mxu0 0
        %3196 = vmatprep.subr.bf16.mxu0 0
        %3197 = vmatpush1.bf16.msra.mxu0 0
        %3198 = vmatprep.subr.bf16.mxu0 0
        %3199 = vmatpush1.bf16.msra.mxu0 0
        %3200 = vmatprep.subr.bf16.mxu0 0
        %3201 = vmatpush1.bf16.msra.mxu0 0
        %3202 = vmatprep.subr.bf16.mxu0 0
        %3203 = vmatpush1.bf16.msra.mxu0 0
        %3204 = vmatprep.subr.bf16.mxu0 0
        %3205 = vmatpush1.bf16.msra.mxu0 0
        %3206 = vmatprep.subr.bf16.mxu0 0
        %3207 = vmatpush1.bf16.msra.mxu0 0
        %3208 = vmatprep.subr.bf16.mxu0 0
        %3209 = vmatpush1.bf16.msra.mxu0 0
        %3210 = vmatprep.subr.bf16.mxu0 0
        %3211 = vmatpush1.bf16.msra.mxu0 0
        %3212 = vmatprep.mubr.bf16.mxu0 0
        %3213 = vmatmul.mubr.bf16.gmra.mrb[0].mxu0 %v3166
        %v3214 = vpop.f32.mrb[0].mxu0
        %v3215 = vadd.f32 0.0, %v3214
        %v3216 = vpop.f32.mrb[0].mxu0
        %v3217 = vpop.f32.mrb[0].mxu0
        %v3218 = vadd.f32 0.0, %v3217
        %v3219 = vpop.f32.mrb[0].mxu0
        %3220 = vmatprep.mubr.bf16.mxu0 0
        %3221 = vmatmul.mubr.bf16.gmra.mrb[0].mxu0 %v3169
        %v3222 = vpop.f32.mrb[0].mxu0
        %v3223 = vadd.f32 0.0, %v3222
        %v3224 = vpop.f32.mrb[0].mxu0
        %v3225 = vpop.f32.mrb[0].mxu0
        %v3226 = vadd.f32 0.0, %v3225
        %v3227 = vpop.f32.mrb[0].mxu0
        %3228 = vmatprep.mubr.bf16.mxu0 0
        %3229 = vmatmul.mubr.bf16.gmra.mrb[0].mxu0 %v3172
        %v3230 = vpop.f32.mrb[0].mxu0
        %v3231 = vadd.f32 0.0, %v3230
        %v3232 = vpop.f32.mrb[0].mxu0
        %v3233 = vpop.f32.mrb[0].mxu0
        %v3234 = vadd.f32 0.0, %v3233
        %v3235 = vpop.f32.mrb[0].mxu0
        %3236 = vmatprep.mubr.bf16.mxu0 0
        %3237 = vmatmul.mubr.bf16.gmra.mrb[0].mxu0 %v3175
        %v3238 = vpop.f32.mrb[0].mxu0
        %v3239 = vadd.f32 0.0, %v3238
        %v3240 = vpop.f32.mrb[0].mxu0
        %v3241 = vpop.f32.mrb[0].mxu0
        %v3242 = vadd.f32 0.0, %v3241
        %v3243 = vpop.f32.mrb[0].mxu0
        %3244 = vdwg.mxu0
        %v3245 = vadd.f32 %v2399, %v3215
        %v3246 = vadd.f32 %v2400, %v3218
        %v3247 = vadd.f32 %v2401, %v3223
        %v3248 = vadd.f32 %v2402, %v3226
        %v3249 = vadd.f32 %v2403, %v3231
        %v3250 = vadd.f32 %v2404, %v3234
        %v3251 = vadd.f32 %v2405, %v3239
        %v3252 = vadd.f32 %v2406, %v3242
        %s3253 = scalar_lea.vmem %s2, 24
        %v3254 = vld [vmem:[%s3253] sm:$0xf]
        %v3263 = vunpack.c.l.b16 %v3135
        %v3264 = vunpack.c.l.b16 %v3136
        %v3265 = vunpack.c.l.b16 %v3137
        %v3266 = vunpack.c.l.b16 %v3138
        %v3267 = vunpack.c.l.b16 %v3139
        %v3268 = vunpack.c.l.b16 %v3140
        %v3269 = vunpack.c.l.b16 %v3141
        %v3270 = vunpack.c.l.b16 %v3142
        %v3271 = vpack.c.b16 %v3264, %v3263
        %v3272 = vpack.c.b16 %v3266, %v3265
        %v3273 = vpack.c.b16 %v3268, %v3267
        %v3274 = vpack.c.b16 %v3270, %v3269
        %v3276 = vsel %vm409, %v3271, 0
        %v3279 = vsel %vm409, %v3272, 0
        %v3282 = vsel %vm409, %v3273, 0
        %v3285 = vsel %vm409, %v3274, 0
        %v3288 = vsel %vm413, %v3254, 0
        %3290 = vmatprep.subr.bf16.mxu0 0
        %3291 = vmatpush1.bf16.msra.mxu0 %v3288
        %3292 = vmatprep.subr.bf16.mxu0 0
        %3293 = vmatpush1.bf16.msra.mxu0 0
        %3294 = vmatprep.subr.bf16.mxu0 0
        %3295 = vmatpush1.bf16.msra.mxu0 0
        %3296 = vmatprep.subr.bf16.mxu0 0
        %3297 = vmatpush1.bf16.msra.mxu0 0
        %3298 = vmatprep.subr.bf16.mxu0 0
        %3299 = vmatpush1.bf16.msra.mxu0 0
        %3300 = vmatprep.subr.bf16.mxu0 0
        %3301 = vmatpush1.bf16.msra.mxu0 0
        %3302 = vmatprep.subr.bf16.mxu0 0
        %3303 = vmatpush1.bf16.msra.mxu0 0
        %3304 = vmatprep.subr.bf16.mxu0 0
        %3305 = vmatpush1.bf16.msra.mxu0 0
        %3306 = vmatprep.subr.bf16.mxu0 0
        %3307 = vmatpush1.bf16.msra.mxu0 0
        %3308 = vmatprep.subr.bf16.mxu0 0
        %3309 = vmatpush1.bf16.msra.mxu0 0
        %3310 = vmatprep.subr.bf16.mxu0 0
        %3311 = vmatpush1.bf16.msra.mxu0 0
        %3312 = vmatprep.subr.bf16.mxu0 0
        %3313 = vmatpush1.bf16.msra.mxu0 0
        %3314 = vmatprep.subr.bf16.mxu0 0
        %3315 = vmatpush1.bf16.msra.mxu0 0
        %3316 = vmatprep.subr.bf16.mxu0 0
        %3317 = vmatpush1.bf16.msra.mxu0 0
        %3318 = vmatprep.subr.bf16.mxu0 0
        %3319 = vmatpush1.bf16.msra.mxu0 0
        %3320 = vmatprep.subr.bf16.mxu0 0
        %3321 = vmatpush1.bf16.msra.mxu0 0
        %3322 = vmatprep.mubr.bf16.mxu0 0
        %3323 = vmatmul.mubr.bf16.gmra.mrb[0].mxu0 %v3276
        %v3324 = vpop.f32.mrb[0].mxu0
        %v3325 = vadd.f32 0.0, %v3324
        %v3326 = vpop.f32.mrb[0].mxu0
        %v3327 = vpop.f32.mrb[0].mxu0
        %v3328 = vadd.f32 0.0, %v3327
        %v3329 = vpop.f32.mrb[0].mxu0
        %3330 = vmatprep.mubr.bf16.mxu0 0
        %3331 = vmatmul.mubr.bf16.gmra.mrb[0].mxu0 %v3279
        %v3332 = vpop.f32.mrb[0].mxu0
        %v3333 = vadd.f32 0.0, %v3332
        %v3334 = vpop.f32.mrb[0].mxu0
        %v3335 = vpop.f32.mrb[0].mxu0
        %v3336 = vadd.f32 0.0, %v3335
        %v3337 = vpop.f32.mrb[0].mxu0
        %3338 = vmatprep.mubr.bf16.mxu0 0
        %3339 = vmatmul.mubr.bf16.gmra.mrb[0].mxu0 %v3282
        %v3340 = vpop.f32.mrb[0].mxu0
        %v3341 = vadd.f32 0.0, %v3340
        %v3342 = vpop.f32.mrb[0].mxu0
        %v3343 = vpop.f32.mrb[0].mxu0
        %v3344 = vadd.f32 0.0, %v3343
        %v3345 = vpop.f32.mrb[0].mxu0
        %3346 = vmatprep.mubr.bf16.mxu0 0
        %3347 = vmatmul.mubr.bf16.gmra.mrb[0].mxu0 %v3285
        %v3348 = vpop.f32.mrb[0].mxu0
        %v3349 = vadd.f32 0.0, %v3348
        %v3350 = vpop.f32.mrb[0].mxu0
        %v3351 = vpop.f32.mrb[0].mxu0
        %v3352 = vadd.f32 0.0, %v3351
        %v3353 = vpop.f32.mrb[0].mxu0
        %3354 = vdwg.mxu0
        %v3355 = vadd.f32 %v3245, %v3325
        %v3356 = vadd.f32 %v3246, %v3328
        %v3357 = vadd.f32 %v3247, %v3333
        %v3358 = vadd.f32 %v3248, %v3336
        %v3359 = vadd.f32 %v3249, %v3341
        %v3360 = vadd.f32 %v3250, %v3344
        %v3361 = vadd.f32 %v3251, %v3349
        %v3362 = vadd.f32 %v3252, %v3352
        %v3364 = vsel %vm413, %v3127, 0
        %3366 = vmatprep.subr.bf16.mxu0 0
        %3367 = vmatpush1.bf16.msra.mxu0 %v3364
        %3368 = vmatprep.subr.bf16.mxu0 0
        %3369 = vmatpush1.bf16.msra.mxu0 0
        %3370 = vmatprep.subr.bf16.mxu0 0
        %3371 = vmatpush1.bf16.msra.mxu0 0
        %3372 = vmatprep.subr.bf16.mxu0 0
        %3373 = vmatpush1.bf16.msra.mxu0 0
        %3374 = vmatprep.subr.bf16.mxu0 0
        %3375 = vmatpush1.bf16.msra.mxu0 0
        %3376 = vmatprep.subr.bf16.mxu0 0
        %3377 = vmatpush1.bf16.msra.mxu0 0
        %3378 = vmatprep.subr.bf16.mxu0 0
        %3379 = vmatpush1.bf16.msra.mxu0 0
        %3380 = vmatprep.subr.bf16.mxu0 0
        %3381 = vmatpush1.bf16.msra.mxu0 0
        %3382 = vmatprep.subr.bf16.mxu0 0
        %3383 = vmatpush1.bf16.msra.mxu0 0
        %3384 = vmatprep.subr.bf16.mxu0 0
        %3385 = vmatpush1.bf16.msra.mxu0 0
        %3386 = vmatprep.subr.bf16.mxu0 0
        %3387 = vmatpush1.bf16.msra.mxu0 0
        %3388 = vmatprep.subr.bf16.mxu0 0
        %3389 = vmatpush1.bf16.msra.mxu0 0
        %3390 = vmatprep.subr.bf16.mxu0 0
        %3391 = vmatpush1.bf16.msra.mxu0 0
        %3392 = vmatprep.subr.bf16.mxu0 0
        %3393 = vmatpush1.bf16.msra.mxu0 0
        %3394 = vmatprep.subr.bf16.mxu0 0
        %3395 = vmatpush1.bf16.msra.mxu0 0
        %3396 = vmatprep.subr.bf16.mxu0 0
        %3397 = vmatpush1.bf16.msra.mxu0 0
        %3398 = vmatprep.mubr.bf16.mxu0 0
        %3399 = vmatmul.mubr.bf16.gmra.mrb[0].mxu0 %v411
        %v3400 = vpop.f32.mrb[0].mxu0
        %v3401 = vadd.f32 0.0, %v3400
        %v3402 = vpop.f32.mrb[0].mxu0
        %v3403 = vpop.f32.mrb[0].mxu0
        %v3404 = vpop.f32.mrb[0].mxu0
        %3405 = vdwg.mxu0
        %v3407 = vsel %vm413, %v3128, 0
        %3409 = vmatprep.subr.bf16.mxu0 0
        %3410 = vmatpush1.bf16.msra.mxu0 %v3407
        %3411 = vmatprep.subr.bf16.mxu0 0
        %3412 = vmatpush1.bf16.msra.mxu0 0
        %3413 = vmatprep.subr.bf16.mxu0 0
        %3414 = vmatpush1.bf16.msra.mxu0 0
        %3415 = vmatprep.subr.bf16.mxu0 0
        %3416 = vmatpush1.bf16.msra.mxu0 0
        %3417 = vmatprep.subr.bf16.mxu0 0
        %3418 = vmatpush1.bf16.msra.mxu0 0
        %3419 = vmatprep.subr.bf16.mxu0 0
        %3420 = vmatpush1.bf16.msra.mxu0 0
        %3421 = vmatprep.subr.bf16.mxu0 0
        %3422 = vmatpush1.bf16.msra.mxu0 0
        %3423 = vmatprep.subr.bf16.mxu0 0
        %3424 = vmatpush1.bf16.msra.mxu0 0
        %3425 = vmatprep.subr.bf16.mxu0 0
        %3426 = vmatpush1.bf16.msra.mxu0 0
        %3427 = vmatprep.subr.bf16.mxu0 0
        %3428 = vmatpush1.bf16.msra.mxu0 0
        %3429 = vmatprep.subr.bf16.mxu0 0
        %3430 = vmatpush1.bf16.msra.mxu0 0
        %3431 = vmatprep.subr.bf16.mxu0 0
        %3432 = vmatpush1.bf16.msra.mxu0 0
        %3433 = vmatprep.subr.bf16.mxu0 0
        %3434 = vmatpush1.bf16.msra.mxu0 0
        %3435 = vmatprep.subr.bf16.mxu0 0
        %3436 = vmatpush1.bf16.msra.mxu0 0
        %3437 = vmatprep.subr.bf16.mxu0 0
        %3438 = vmatpush1.bf16.msra.mxu0 0
        %3439 = vmatprep.subr.bf16.mxu0 0
        %3440 = vmatpush1.bf16.msra.mxu0 0
        %3441 = vmatprep.mubr.bf16.mxu0 0
        %3442 = vmatmul.mubr.bf16.gmra.mrb[0].mxu0 %v458
        %v3443 = vpop.f32.mrb[0].mxu0
        %v3444 = vadd.f32 0.0, %v3443
        %v3445 = vpop.f32.mrb[0].mxu0
        %v3446 = vpop.f32.mrb[0].mxu0
        %v3447 = vpop.f32.mrb[0].mxu0
        %3448 = vdwg.mxu0
        %v3450 = vsel %vm413, %v3129, 0
        %3452 = vmatprep.subr.bf16.mxu0 0
        %3453 = vmatpush1.bf16.msra.mxu0 %v3450
        %3454 = vmatprep.subr.bf16.mxu0 0
        %3455 = vmatpush1.bf16.msra.mxu0 0
        %3456 = vmatprep.subr.bf16.mxu0 0
        %3457 = vmatpush1.bf16.msra.mxu0 0
        %3458 = vmatprep.subr.bf16.mxu0 0
        %3459 = vmatpush1.bf16.msra.mxu0 0
        %3460 = vmatprep.subr.bf16.mxu0 0
        %3461 = vmatpush1.bf16.msra.mxu0 0
        %3462 = vmatprep.subr.bf16.mxu0 0
        %3463 = vmatpush1.bf16.msra.mxu0 0
        %3464 = vmatprep.subr.bf16.mxu0 0
        %3465 = vmatpush1.bf16.msra.mxu0 0
        %3466 = vmatprep.subr.bf16.mxu0 0
        %3467 = vmatpush1.bf16.msra.mxu0 0
        %3468 = vmatprep.subr.bf16.mxu0 0
        %3469 = vmatpush1.bf16.msra.mxu0 0
        %3470 = vmatprep.subr.bf16.mxu0 0
        %3471 = vmatpush1.bf16.msra.mxu0 0
        %3472 = vmatprep.subr.bf16.mxu0 0
        %3473 = vmatpush1.bf16.msra.mxu0 0
        %3474 = vmatprep.subr.bf16.mxu0 0
        %3475 = vmatpush1.bf16.msra.mxu0 0
        %3476 = vmatprep.subr.bf16.mxu0 0
        %3477 = vmatpush1.bf16.msra.mxu0 0
        %3478 = vmatprep.subr.bf16.mxu0 0
        %3479 = vmatpush1.bf16.msra.mxu0 0
        %3480 = vmatprep.subr.bf16.mxu0 0
        %3481 = vmatpush1.bf16.msra.mxu0 0
        %3482 = vmatprep.subr.bf16.mxu0 0
        %3483 = vmatpush1.bf16.msra.mxu0 0
        %3484 = vmatprep.mubr.bf16.mxu0 0
        %3485 = vmatmul.mubr.bf16.gmra.mrb[0].mxu0 %v504
        %v3486 = vpop.f32.mrb[0].mxu0
        %v3487 = vadd.f32 0.0, %v3486
        %v3488 = vpop.f32.mrb[0].mxu0
        %v3489 = vpop.f32.mrb[0].mxu0
        %v3490 = vpop.f32.mrb[0].mxu0
        %3491 = vdwg.mxu0
        %v3493 = vsel %vm413, %v3130, 0
        %3495 = vmatprep.subr.bf16.mxu0 0
        %3496 = vmatpush1.bf16.msra.mxu0 %v3493
        %3497 = vmatprep.subr.bf16.mxu0 0
        %3498 = vmatpush1.bf16.msra.mxu0 0
        %3499 = vmatprep.subr.bf16.mxu0 0
        %3500 = vmatpush1.bf16.msra.mxu0 0
        %3501 = vmatprep.subr.bf16.mxu0 0
        %3502 = vmatpush1.bf16.msra.mxu0 0
        %3503 = vmatprep.subr.bf16.mxu0 0
        %3504 = vmatpush1.bf16.msra.mxu0 0
        %3505 = vmatprep.subr.bf16.mxu0 0
        %3506 = vmatpush1.bf16.msra.mxu0 0
        %3507 = vmatprep.subr.bf16.mxu0 0
        %3508 = vmatpush1.bf16.msra.mxu0 0
        %3509 = vmatprep.subr.bf16.mxu0 0
        %3510 = vmatpush1.bf16.msra.mxu0 0
        %3511 = vmatprep.subr.bf16.mxu0 0
        %3512 = vmatpush1.bf16.msra.mxu0 0
        %3513 = vmatprep.subr.bf16.mxu0 0
        %3514 = vmatpush1.bf16.msra.mxu0 0
        %3515 = vmatprep.subr.bf16.mxu0 0
        %3516 = vmatpush1.bf16.msra.mxu0 0
        %3517 = vmatprep.subr.bf16.mxu0 0
        %3518 = vmatpush1.bf16.msra.mxu0 0
        %3519 = vmatprep.subr.bf16.mxu0 0
        %3520 = vmatpush1.bf16.msra.mxu0 0
        %3521 = vmatprep.subr.bf16.mxu0 0
        %3522 = vmatpush1.bf16.msra.mxu0 0
        %3523 = vmatprep.subr.bf16.mxu0 0
        %3524 = vmatpush1.bf16.msra.mxu0 0
        %3525 = vmatprep.subr.bf16.mxu0 0
        %3526 = vmatpush1.bf16.msra.mxu0 0
        %3527 = vmatprep.mubr.bf16.mxu0 0
        %3528 = vmatmul.mubr.bf16.gmra.mrb[0].mxu0 %v550
        %v3529 = vpop.f32.mrb[0].mxu0
        %v3530 = vadd.f32 0.0, %v3529
        %v3531 = vpop.f32.mrb[0].mxu0
        %v3532 = vpop.f32.mrb[0].mxu0
        %v3533 = vpop.f32.mrb[0].mxu0
        %3534 = vdwg.mxu0
        %v3536 = vsel %vm413, %v3131, 0
        %3538 = vmatprep.subr.bf16.mxu0 0
        %3539 = vmatpush1.bf16.msra.mxu0 %v3536
        %3540 = vmatprep.subr.bf16.mxu0 0
        %3541 = vmatpush1.bf16.msra.mxu0 0
        %3542 = vmatprep.subr.bf16.mxu0 0
        %3543 = vmatpush1.bf16.msra.mxu0 0
        %3544 = vmatprep.subr.bf16.mxu0 0
        %3545 = vmatpush1.bf16.msra.mxu0 0
        %3546 = vmatprep.subr.bf16.mxu0 0
        %3547 = vmatpush1.bf16.msra.mxu0 0
        %3548 = vmatprep.subr.bf16.mxu0 0
        %3549 = vmatpush1.bf16.msra.mxu0 0
        %3550 = vmatprep.subr.bf16.mxu0 0
        %3551 = vmatpush1.bf16.msra.mxu0 0
        %3552 = vmatprep.subr.bf16.mxu0 0
        %3553 = vmatpush1.bf16.msra.mxu0 0
        %3554 = vmatprep.subr.bf16.mxu0 0
        %3555 = vmatpush1.bf16.msra.mxu0 0
        %3556 = vmatprep.subr.bf16.mxu0 0
        %3557 = vmatpush1.bf16.msra.mxu0 0
        %3558 = vmatprep.subr.bf16.mxu0 0
        %3559 = vmatpush1.bf16.msra.mxu0 0
        %3560 = vmatprep.subr.bf16.mxu0 0
        %3561 = vmatpush1.bf16.msra.mxu0 0
        %3562 = vmatprep.subr.bf16.mxu0 0
        %3563 = vmatpush1.bf16.msra.mxu0 0
        %3564 = vmatprep.subr.bf16.mxu0 0
        %3565 = vmatpush1.bf16.msra.mxu0 0
        %3566 = vmatprep.subr.bf16.mxu0 0
        %3567 = vmatpush1.bf16.msra.mxu0 0
        %3568 = vmatprep.subr.bf16.mxu0 0
        %3569 = vmatpush1.bf16.msra.mxu0 0
        %3570 = vmatprep.mubr.bf16.mxu0 0
        %3571 = vmatmul.mubr.bf16.gmra.mrb[0].mxu0 %v596
        %v3572 = vpop.f32.mrb[0].mxu0
        %v3573 = vadd.f32 0.0, %v3572
        %v3574 = vpop.f32.mrb[0].mxu0
        %v3575 = vpop.f32.mrb[0].mxu0
        %v3576 = vpop.f32.mrb[0].mxu0
        %3577 = vdwg.mxu0
        %v3579 = vsel %vm413, %v3132, 0
        %3581 = vmatprep.subr.bf16.mxu0 0
        %3582 = vmatpush1.bf16.msra.mxu0 %v3579
        %3583 = vmatprep.subr.bf16.mxu0 0
        %3584 = vmatpush1.bf16.msra.mxu0 0
        %3585 = vmatprep.subr.bf16.mxu0 0
        %3586 = vmatpush1.bf16.msra.mxu0 0
        %3587 = vmatprep.subr.bf16.mxu0 0
        %3588 = vmatpush1.bf16.msra.mxu0 0
        %3589 = vmatprep.subr.bf16.mxu0 0
        %3590 = vmatpush1.bf16.msra.mxu0 0
        %3591 = vmatprep.subr.bf16.mxu0 0
        %3592 = vmatpush1.bf16.msra.mxu0 0
        %3593 = vmatprep.subr.bf16.mxu0 0
        %3594 = vmatpush1.bf16.msra.mxu0 0
        %3595 = vmatprep.subr.bf16.mxu0 0
        %3596 = vmatpush1.bf16.msra.mxu0 0
        %3597 = vmatprep.subr.bf16.mxu0 0
        %3598 = vmatpush1.bf16.msra.mxu0 0
        %3599 = vmatprep.subr.bf16.mxu0 0
        %3600 = vmatpush1.bf16.msra.mxu0 0
        %3601 = vmatprep.subr.bf16.mxu0 0
        %3602 = vmatpush1.bf16.msra.mxu0 0
        %3603 = vmatprep.subr.bf16.mxu0 0
        %3604 = vmatpush1.bf16.msra.mxu0 0
        %3605 = vmatprep.subr.bf16.mxu0 0
        %3606 = vmatpush1.bf16.msra.mxu0 0
        %3607 = vmatprep.subr.bf16.mxu0 0
        %3608 = vmatpush1.bf16.msra.mxu0 0
        %3609 = vmatprep.subr.bf16.mxu0 0
        %3610 = vmatpush1.bf16.msra.mxu0 0
        %3611 = vmatprep.subr.bf16.mxu0 0
        %3612 = vmatpush1.bf16.msra.mxu0 0
        %3613 = vmatprep.mubr.bf16.mxu0 0
        %3614 = vmatmul.mubr.bf16.gmra.mrb[0].mxu0 %v642
        %v3615 = vpop.f32.mrb[0].mxu0
        %v3616 = vadd.f32 0.0, %v3615
        %v3617 = vpop.f32.mrb[0].mxu0
        %v3618 = vpop.f32.mrb[0].mxu0
        %v3619 = vpop.f32.mrb[0].mxu0
        %3620 = vdwg.mxu0
        %v3622 = vsel %vm413, %v3133, 0
        %3624 = vmatprep.subr.bf16.mxu0 0
        %3625 = vmatpush1.bf16.msra.mxu0 %v3622
        %3626 = vmatprep.subr.bf16.mxu0 0
        %3627 = vmatpush1.bf16.msra.mxu0 0
        %3628 = vmatprep.subr.bf16.mxu0 0
        %3629 = vmatpush1.bf16.msra.mxu0 0
        %3630 = vmatprep.subr.bf16.mxu0 0
        %3631 = vmatpush1.bf16.msra.mxu0 0
        %3632 = vmatprep.subr.bf16.mxu0 0
        %3633 = vmatpush1.bf16.msra.mxu0 0
        %3634 = vmatprep.subr.bf16.mxu0 0
        %3635 = vmatpush1.bf16.msra.mxu0 0
        %3636 = vmatprep.subr.bf16.mxu0 0
        %3637 = vmatpush1.bf16.msra.mxu0 0
        %3638 = vmatprep.subr.bf16.mxu0 0
        %3639 = vmatpush1.bf16.msra.mxu0 0
        %3640 = vmatprep.subr.bf16.mxu0 0
        %3641 = vmatpush1.bf16.msra.mxu0 0
        %3642 = vmatprep.subr.bf16.mxu0 0
        %3643 = vmatpush1.bf16.msra.mxu0 0
        %3644 = vmatprep.subr.bf16.mxu0 0
        %3645 = vmatpush1.bf16.msra.mxu0 0
        %3646 = vmatprep.subr.bf16.mxu0 0
        %3647 = vmatpush1.bf16.msra.mxu0 0
        %3648 = vmatprep.subr.bf16.mxu0 0
        %3649 = vmatpush1.bf16.msra.mxu0 0
        %3650 = vmatprep.subr.bf16.mxu0 0
        %3651 = vmatpush1.bf16.msra.mxu0 0
        %3652 = vmatprep.subr.bf16.mxu0 0
        %3653 = vmatpush1.bf16.msra.mxu0 0
        %3654 = vmatprep.subr.bf16.mxu0 0
        %3655 = vmatpush1.bf16.msra.mxu0 0
        %3656 = vmatprep.mubr.bf16.mxu0 0
        %3657 = vmatmul.mubr.bf16.gmra.mrb[0].mxu0 %v688
        %v3658 = vpop.f32.mrb[0].mxu0
        %v3659 = vadd.f32 0.0, %v3658
        %v3660 = vpop.f32.mrb[0].mxu0
        %v3661 = vpop.f32.mrb[0].mxu0
        %v3662 = vpop.f32.mrb[0].mxu0
        %3663 = vdwg.mxu0
        %v3665 = vsel %vm413, %v3134, 0
        %3667 = vmatprep.subr.bf16.mxu0 0
        %3668 = vmatpush1.bf16.msra.mxu0 %v3665
        %3669 = vmatprep.subr.bf16.mxu0 0
        %3670 = vmatpush1.bf16.msra.mxu0 0
        %3671 = vmatprep.subr.bf16.mxu0 0
        %3672 = vmatpush1.bf16.msra.mxu0 0
        %3673 = vmatprep.subr.bf16.mxu0 0
        %3674 = vmatpush1.bf16.msra.mxu0 0
        %3675 = vmatprep.subr.bf16.mxu0 0
        %3676 = vmatpush1.bf16.msra.mxu0 0
        %3677 = vmatprep.subr.bf16.mxu0 0
        %3678 = vmatpush1.bf16.msra.mxu0 0
        %3679 = vmatprep.subr.bf16.mxu0 0
        %3680 = vmatpush1.bf16.msra.mxu0 0
        %3681 = vmatprep.subr.bf16.mxu0 0
        %3682 = vmatpush1.bf16.msra.mxu0 0
        %3683 = vmatprep.subr.bf16.mxu0 0
        %3684 = vmatpush1.bf16.msra.mxu0 0
        %3685 = vmatprep.subr.bf16.mxu0 0
        %3686 = vmatpush1.bf16.msra.mxu0 0
        %3687 = vmatprep.subr.bf16.mxu0 0
        %3688 = vmatpush1.bf16.msra.mxu0 0
        %3689 = vmatprep.subr.bf16.mxu0 0
        %3690 = vmatpush1.bf16.msra.mxu0 0
        %3691 = vmatprep.subr.bf16.mxu0 0
        %3692 = vmatpush1.bf16.msra.mxu0 0
        %3693 = vmatprep.subr.bf16.mxu0 0
        %3694 = vmatpush1.bf16.msra.mxu0 0
        %3695 = vmatprep.subr.bf16.mxu0 0
        %3696 = vmatpush1.bf16.msra.mxu0 0
        %3697 = vmatprep.subr.bf16.mxu0 0
        %3698 = vmatpush1.bf16.msra.mxu0 0
        %3699 = vmatprep.mubr.bf16.mxu0 0
        %3700 = vmatmul.mubr.bf16.gmra.mrb[0].mxu0 %v734
        %v3701 = vpop.f32.mrb[0].mxu0
        %v3702 = vadd.f32 0.0, %v3701
        %v3703 = vpop.f32.mrb[0].mxu0
        %v3704 = vpop.f32.mrb[0].mxu0
        %v3705 = vpop.f32.mrb[0].mxu0
        %3706 = vdwg.mxu0
        %v3708 = vsel %vm413, %v3135, 0
        %3710 = vmatprep.subr.bf16.mxu0 0
        %3711 = vmatpush1.bf16.msra.mxu0 %v3708
        %3712 = vmatprep.subr.bf16.mxu0 0
        %3713 = vmatpush1.bf16.msra.mxu0 0
        %3714 = vmatprep.subr.bf16.mxu0 0
        %3715 = vmatpush1.bf16.msra.mxu0 0
        %3716 = vmatprep.subr.bf16.mxu0 0
        %3717 = vmatpush1.bf16.msra.mxu0 0
        %3718 = vmatprep.subr.bf16.mxu0 0
        %3719 = vmatpush1.bf16.msra.mxu0 0
        %3720 = vmatprep.subr.bf16.mxu0 0
        %3721 = vmatpush1.bf16.msra.mxu0 0
        %3722 = vmatprep.subr.bf16.mxu0 0
        %3723 = vmatpush1.bf16.msra.mxu0 0
        %3724 = vmatprep.subr.bf16.mxu0 0
        %3725 = vmatpush1.bf16.msra.mxu0 0
        %3726 = vmatprep.subr.bf16.mxu0 0
        %3727 = vmatpush1.bf16.msra.mxu0 0
        %3728 = vmatprep.subr.bf16.mxu0 0
        %3729 = vmatpush1.bf16.msra.mxu0 0
        %3730 = vmatprep.subr.bf16.mxu0 0
        %3731 = vmatpush1.bf16.msra.mxu0 0
        %3732 = vmatprep.subr.bf16.mxu0 0
        %3733 = vmatpush1.bf16.msra.mxu0 0
        %3734 = vmatprep.subr.bf16.mxu0 0
        %3735 = vmatpush1.bf16.msra.mxu0 0
        %3736 = vmatprep.subr.bf16.mxu0 0
        %3737 = vmatpush1.bf16.msra.mxu0 0
        %3738 = vmatprep.subr.bf16.mxu0 0
        %3739 = vmatpush1.bf16.msra.mxu0 0
        %3740 = vmatprep.subr.bf16.mxu0 0
        %3741 = vmatpush1.bf16.msra.mxu0 0
        %3742 = vmatprep.mubr.bf16.mxu0 0
        %3743 = vmatmul.mubr.bf16.gmra.mrb[0].mxu0 %v780
        %v3744 = vpop.f32.mrb[0].mxu0
        %v3745 = vadd.f32 0.0, %v3744
        %v3746 = vpop.f32.mrb[0].mxu0
        %v3747 = vpop.f32.mrb[0].mxu0
        %v3748 = vpop.f32.mrb[0].mxu0
        %3749 = vdwg.mxu0
        %v3751 = vsel %vm413, %v3136, 0
        %3753 = vmatprep.subr.bf16.mxu0 0
        %3754 = vmatpush1.bf16.msra.mxu0 %v3751
        %3755 = vmatprep.subr.bf16.mxu0 0
        %3756 = vmatpush1.bf16.msra.mxu0 0
        %3757 = vmatprep.subr.bf16.mxu0 0
        %3758 = vmatpush1.bf16.msra.mxu0 0
        %3759 = vmatprep.subr.bf16.mxu0 0
        %3760 = vmatpush1.bf16.msra.mxu0 0
        %3761 = vmatprep.subr.bf16.mxu0 0
        %3762 = vmatpush1.bf16.msra.mxu0 0
        %3763 = vmatprep.subr.bf16.mxu0 0
        %3764 = vmatpush1.bf16.msra.mxu0 0
        %3765 = vmatprep.subr.bf16.mxu0 0
        %3766 = vmatpush1.bf16.msra.mxu0 0
        %3767 = vmatprep.subr.bf16.mxu0 0
        %3768 = vmatpush1.bf16.msra.mxu0 0
        %3769 = vmatprep.subr.bf16.mxu0 0
        %3770 = vmatpush1.bf16.msra.mxu0 0
        %3771 = vmatprep.subr.bf16.mxu0 0
        %3772 = vmatpush1.bf16.msra.mxu0 0
        %3773 = vmatprep.subr.bf16.mxu0 0
        %3774 = vmatpush1.bf16.msra.mxu0 0
        %3775 = vmatprep.subr.bf16.mxu0 0
        %3776 = vmatpush1.bf16.msra.mxu0 0
        %3777 = vmatprep.subr.bf16.mxu0 0
        %3778 = vmatpush1.bf16.msra.mxu0 0
        %3779 = vmatprep.subr.bf16.mxu0 0
        %3780 = vmatpush1.bf16.msra.mxu0 0
        %3781 = vmatprep.subr.bf16.mxu0 0
        %3782 = vmatpush1.bf16.msra.mxu0 0
        %3783 = vmatprep.subr.bf16.mxu0 0
        %3784 = vmatpush1.bf16.msra.mxu0 0
        %3785 = vmatprep.mubr.bf16.mxu0 0
        %3786 = vmatmul.mubr.bf16.gmra.mrb[0].mxu0 %v823
        %v3787 = vpop.f32.mrb[0].mxu0
        %v3788 = vadd.f32 0.0, %v3787
        %v3789 = vpop.f32.mrb[0].mxu0
        %v3790 = vpop.f32.mrb[0].mxu0
        %v3791 = vpop.f32.mrb[0].mxu0
        %3792 = vdwg.mxu0
        %v3794 = vsel %vm413, %v3137, 0
        %3796 = vmatprep.subr.bf16.mxu0 0
        %3797 = vmatpush1.bf16.msra.mxu0 %v3794
        %3798 = vmatprep.subr.bf16.mxu0 0
        %3799 = vmatpush1.bf16.msra.mxu0 0
        %3800 = vmatprep.subr.bf16.mxu0 0
        %3801 = vmatpush1.bf16.msra.mxu0 0
        %3802 = vmatprep.subr.bf16.mxu0 0
        %3803 = vmatpush1.bf16.msra.mxu0 0
        %3804 = vmatprep.subr.bf16.mxu0 0
        %3805 = vmatpush1.bf16.msra.mxu0 0
        %3806 = vmatprep.subr.bf16.mxu0 0
        %3807 = vmatpush1.bf16.msra.mxu0 0
        %3808 = vmatprep.subr.bf16.mxu0 0
        %3809 = vmatpush1.bf16.msra.mxu0 0
        %3810 = vmatprep.subr.bf16.mxu0 0
        %3811 = vmatpush1.bf16.msra.mxu0 0
        %3812 = vmatprep.subr.bf16.mxu0 0
        %3813 = vmatpush1.bf16.msra.mxu0 0
        %3814 = vmatprep.subr.bf16.mxu0 0
        %3815 = vmatpush1.bf16.msra.mxu0 0
        %3816 = vmatprep.subr.bf16.mxu0 0
        %3817 = vmatpush1.bf16.msra.mxu0 0
        %3818 = vmatprep.subr.bf16.mxu0 0
        %3819 = vmatpush1.bf16.msra.mxu0 0
        %3820 = vmatprep.subr.bf16.mxu0 0
        %3821 = vmatpush1.bf16.msra.mxu0 0
        %3822 = vmatprep.subr.bf16.mxu0 0
        %3823 = vmatpush1.bf16.msra.mxu0 0
        %3824 = vmatprep.subr.bf16.mxu0 0
        %3825 = vmatpush1.bf16.msra.mxu0 0
        %3826 = vmatprep.subr.bf16.mxu0 0
        %3827 = vmatpush1.bf16.msra.mxu0 0
        %3828 = vmatprep.mubr.bf16.mxu0 0
        %3829 = vmatmul.mubr.bf16.gmra.mrb[0].mxu0 %v866
        %v3830 = vpop.f32.mrb[0].mxu0
        %v3831 = vadd.f32 0.0, %v3830
        %v3832 = vpop.f32.mrb[0].mxu0
        %v3833 = vpop.f32.mrb[0].mxu0
        %v3834 = vpop.f32.mrb[0].mxu0
        %3835 = vdwg.mxu0
        %v3837 = vsel %vm413, %v3138, 0
        %3839 = vmatprep.subr.bf16.mxu0 0
        %3840 = vmatpush1.bf16.msra.mxu0 %v3837
        %3841 = vmatprep.subr.bf16.mxu0 0
        %3842 = vmatpush1.bf16.msra.mxu0 0
        %3843 = vmatprep.subr.bf16.mxu0 0
        %3844 = vmatpush1.bf16.msra.mxu0 0
        %3845 = vmatprep.subr.bf16.mxu0 0
        %3846 = vmatpush1.bf16.msra.mxu0 0
        %3847 = vmatprep.subr.bf16.mxu0 0
        %3848 = vmatpush1.bf16.msra.mxu0 0
        %3849 = vmatprep.subr.bf16.mxu0 0
        %3850 = vmatpush1.bf16.msra.mxu0 0
        %3851 = vmatprep.subr.bf16.mxu0 0
        %3852 = vmatpush1.bf16.msra.mxu0 0
        %3853 = vmatprep.subr.bf16.mxu0 0
        %3854 = vmatpush1.bf16.msra.mxu0 0
        %3855 = vmatprep.subr.bf16.mxu0 0
        %3856 = vmatpush1.bf16.msra.mxu0 0
        %3857 = vmatprep.subr.bf16.mxu0 0
        %3858 = vmatpush1.bf16.msra.mxu0 0
        %3859 = vmatprep.subr.bf16.mxu0 0
        %3860 = vmatpush1.bf16.msra.mxu0 0
        %3861 = vmatprep.subr.bf16.mxu0 0
        %3862 = vmatpush1.bf16.msra.mxu0 0
        %3863 = vmatprep.subr.bf16.mxu0 0
        %3864 = vmatpush1.bf16.msra.mxu0 0
        %3865 = vmatprep.subr.bf16.mxu0 0
        %3866 = vmatpush1.bf16.msra.mxu0 0
        %3867 = vmatprep.subr.bf16.mxu0 0
        %3868 = vmatpush1.bf16.msra.mxu0 0
        %3869 = vmatprep.subr.bf16.mxu0 0
        %3870 = vmatpush1.bf16.msra.mxu0 0
        %3871 = vmatprep.mubr.bf16.mxu0 0
        %3872 = vmatmul.mubr.bf16.gmra.mrb[0].mxu0 %v909
        %v3873 = vpop.f32.mrb[0].mxu0
        %v3874 = vadd.f32 0.0, %v3873
        %v3875 = vpop.f32.mrb[0].mxu0
        %v3876 = vpop.f32.mrb[0].mxu0
        %v3877 = vpop.f32.mrb[0].mxu0
        %3878 = vdwg.mxu0
        %v3880 = vsel %vm413, %v3139, 0
        %3882 = vmatprep.subr.bf16.mxu0 0
        %3883 = vmatpush1.bf16.msra.mxu0 %v3880
        %3884 = vmatprep.subr.bf16.mxu0 0
        %3885 = vmatpush1.bf16.msra.mxu0 0
        %3886 = vmatprep.subr.bf16.mxu0 0
        %3887 = vmatpush1.bf16.msra.mxu0 0
        %3888 = vmatprep.subr.bf16.mxu0 0
        %3889 = vmatpush1.bf16.msra.mxu0 0
        %3890 = vmatprep.subr.bf16.mxu0 0
        %3891 = vmatpush1.bf16.msra.mxu0 0
        %3892 = vmatprep.subr.bf16.mxu0 0
        %3893 = vmatpush1.bf16.msra.mxu0 0
        %3894 = vmatprep.subr.bf16.mxu0 0
        %3895 = vmatpush1.bf16.msra.mxu0 0
        %3896 = vmatprep.subr.bf16.mxu0 0
        %3897 = vmatpush1.bf16.msra.mxu0 0
        %3898 = vmatprep.subr.bf16.mxu0 0
        %3899 = vmatpush1.bf16.msra.mxu0 0
        %3900 = vmatprep.subr.bf16.mxu0 0
        %3901 = vmatpush1.bf16.msra.mxu0 0
        %3902 = vmatprep.subr.bf16.mxu0 0
        %3903 = vmatpush1.bf16.msra.mxu0 0
        %3904 = vmatprep.subr.bf16.mxu0 0
        %3905 = vmatpush1.bf16.msra.mxu0 0
        %3906 = vmatprep.subr.bf16.mxu0 0
        %3907 = vmatpush1.bf16.msra.mxu0 0
        %3908 = vmatprep.subr.bf16.mxu0 0
        %3909 = vmatpush1.bf16.msra.mxu0 0
        %3910 = vmatprep.subr.bf16.mxu0 0
        %3911 = vmatpush1.bf16.msra.mxu0 0
        %3912 = vmatprep.subr.bf16.mxu0 0
        %3913 = vmatpush1.bf16.msra.mxu0 0
        %3914 = vmatprep.mubr.bf16.mxu0 0
        %3915 = vmatmul.mubr.bf16.gmra.mrb[0].mxu0 %v952
        %v3916 = vpop.f32.mrb[0].mxu0
        %v3917 = vadd.f32 0.0, %v3916
        %v3918 = vpop.f32.mrb[0].mxu0
        %v3919 = vpop.f32.mrb[0].mxu0
        %v3920 = vpop.f32.mrb[0].mxu0
        %3921 = vdwg.mxu0
        %v3923 = vsel %vm413, %v3140, 0
        %3925 = vmatprep.subr.bf16.mxu0 0
        %3926 = vmatpush1.bf16.msra.mxu0 %v3923
        %3927 = vmatprep.subr.bf16.mxu0 0
        %3928 = vmatpush1.bf16.msra.mxu0 0
        %3929 = vmatprep.subr.bf16.mxu0 0
        %3930 = vmatpush1.bf16.msra.mxu0 0
        %3931 = vmatprep.subr.bf16.mxu0 0
        %3932 = vmatpush1.bf16.msra.mxu0 0
        %3933 = vmatprep.subr.bf16.mxu0 0
        %3934 = vmatpush1.bf16.msra.mxu0 0
        %3935 = vmatprep.subr.bf16.mxu0 0
        %3936 = vmatpush1.bf16.msra.mxu0 0
        %3937 = vmatprep.subr.bf16.mxu0 0
        %3938 = vmatpush1.bf16.msra.mxu0 0
        %3939 = vmatprep.subr.bf16.mxu0 0
        %3940 = vmatpush1.bf16.msra.mxu0 0
        %3941 = vmatprep.subr.bf16.mxu0 0
        %3942 = vmatpush1.bf16.msra.mxu0 0
        %3943 = vmatprep.subr.bf16.mxu0 0
        %3944 = vmatpush1.bf16.msra.mxu0 0
        %3945 = vmatprep.subr.bf16.mxu0 0
        %3946 = vmatpush1.bf16.msra.mxu0 0
        %3947 = vmatprep.subr.bf16.mxu0 0
        %3948 = vmatpush1.bf16.msra.mxu0 0
        %3949 = vmatprep.subr.bf16.mxu0 0
        %3950 = vmatpush1.bf16.msra.mxu0 0
        %3951 = vmatprep.subr.bf16.mxu0 0
        %3952 = vmatpush1.bf16.msra.mxu0 0
        %3953 = vmatprep.subr.bf16.mxu0 0
        %3954 = vmatpush1.bf16.msra.mxu0 0
        %3955 = vmatprep.subr.bf16.mxu0 0
        %3956 = vmatpush1.bf16.msra.mxu0 0
        %3957 = vmatprep.mubr.bf16.mxu0 0
        %3958 = vmatmul.mubr.bf16.gmra.mrb[0].mxu0 %v995
        %v3959 = vpop.f32.mrb[0].mxu0
        %v3960 = vadd.f32 0.0, %v3959
        %v3961 = vpop.f32.mrb[0].mxu0
        %v3962 = vpop.f32.mrb[0].mxu0
        %v3963 = vpop.f32.mrb[0].mxu0
        %3964 = vdwg.mxu0
        %v3966 = vsel %vm413, %v3141, 0
        %3968 = vmatprep.subr.bf16.mxu0 0
        %3969 = vmatpush1.bf16.msra.mxu0 %v3966
        %3970 = vmatprep.subr.bf16.mxu0 0
        %3971 = vmatpush1.bf16.msra.mxu0 0
        %3972 = vmatprep.subr.bf16.mxu0 0
        %3973 = vmatpush1.bf16.msra.mxu0 0
        %3974 = vmatprep.subr.bf16.mxu0 0
        %3975 = vmatpush1.bf16.msra.mxu0 0
        %3976 = vmatprep.subr.bf16.mxu0 0
        %3977 = vmatpush1.bf16.msra.mxu0 0
        %3978 = vmatprep.subr.bf16.mxu0 0
        %3979 = vmatpush1.bf16.msra.mxu0 0
        %3980 = vmatprep.subr.bf16.mxu0 0
        %3981 = vmatpush1.bf16.msra.mxu0 0
        %3982 = vmatprep.subr.bf16.mxu0 0
        %3983 = vmatpush1.bf16.msra.mxu0 0
        %3984 = vmatprep.subr.bf16.mxu0 0
        %3985 = vmatpush1.bf16.msra.mxu0 0
        %3986 = vmatprep.subr.bf16.mxu0 0
        %3987 = vmatpush1.bf16.msra.mxu0 0
        %3988 = vmatprep.subr.bf16.mxu0 0
        %3989 = vmatpush1.bf16.msra.mxu0 0
        %3990 = vmatprep.subr.bf16.mxu0 0
        %3991 = vmatpush1.bf16.msra.mxu0 0
        %3992 = vmatprep.subr.bf16.mxu0 0
        %3993 = vmatpush1.bf16.msra.mxu0 0
        %3994 = vmatprep.subr.bf16.mxu0 0
        %3995 = vmatpush1.bf16.msra.mxu0 0
        %3996 = vmatprep.subr.bf16.mxu0 0
        %3997 = vmatpush1.bf16.msra.mxu0 0
        %3998 = vmatprep.subr.bf16.mxu0 0
        %3999 = vmatpush1.bf16.msra.mxu0 0
        %4000 = vmatprep.mubr.bf16.mxu0 0
        %4001 = vmatmul.mubr.bf16.gmra.mrb[0].mxu0 %v1038
        %v4002 = vpop.f32.mrb[0].mxu0
        %v4003 = vadd.f32 0.0, %v4002
        %v4004 = vpop.f32.mrb[0].mxu0
        %v4005 = vpop.f32.mrb[0].mxu0
        %v4006 = vpop.f32.mrb[0].mxu0
        %4007 = vdwg.mxu0
        %v4009 = vsel %vm413, %v3142, 0
        %4011 = vmatprep.subr.bf16.mxu0 0
        %4012 = vmatpush1.bf16.msra.mxu0 %v4009
        %4013 = vmatprep.subr.bf16.mxu0 0
        %4014 = vmatpush1.bf16.msra.mxu0 0
        %4015 = vmatprep.subr.bf16.mxu0 0
        %4016 = vmatpush1.bf16.msra.mxu0 0
        %4017 = vmatprep.subr.bf16.mxu0 0
        %4018 = vmatpush1.bf16.msra.mxu0 0
        %4019 = vmatprep.subr.bf16.mxu0 0
        %4020 = vmatpush1.bf16.msra.mxu0 0
        %4021 = vmatprep.subr.bf16.mxu0 0
        %4022 = vmatpush1.bf16.msra.mxu0 0
        %4023 = vmatprep.subr.bf16.mxu0 0
        %4024 = vmatpush1.bf16.msra.mxu0 0
        %4025 = vmatprep.subr.bf16.mxu0 0
        %4026 = vmatpush1.bf16.msra.mxu0 0
        %4027 = vmatprep.subr.bf16.mxu0 0
        %4028 = vmatpush1.bf16.msra.mxu0 0
        %4029 = vmatprep.subr.bf16.mxu0 0
        %4030 = vmatpush1.bf16.msra.mxu0 0
        %4031 = vmatprep.subr.bf16.mxu0 0
        %4032 = vmatpush1.bf16.msra.mxu0 0
        %4033 = vmatprep.subr.bf16.mxu0 0
        %4034 = vmatpush1.bf16.msra.mxu0 0
        %4035 = vmatprep.subr.bf16.mxu0 0
        %4036 = vmatpush1.bf16.msra.mxu0 0
        %4037 = vmatprep.subr.bf16.mxu0 0
        %4038 = vmatpush1.bf16.msra.mxu0 0
        %4039 = vmatprep.subr.bf16.mxu0 0
        %4040 = vmatpush1.bf16.msra.mxu0 0
        %4041 = vmatprep.subr.bf16.mxu0 0
        %4042 = vmatpush1.bf16.msra.mxu0 0
        %4043 = vmatprep.mubr.bf16.mxu0 0
        %4044 = vmatmul.mubr.bf16.gmra.mrb[0].mxu0 %v1081
        %v4045 = vpop.f32.mrb[0].mxu0
        %v4046 = vadd.f32 0.0, %v4045
        %v4047 = vpop.f32.mrb[0].mxu0
        %v4048 = vpop.f32.mrb[0].mxu0
        %v4049 = vpop.f32.mrb[0].mxu0
        %4050 = vdwg.mxu0
        %v4051 = vmul.f32 %v3401, 2.0
        %v4052 = vmul.f32 %v3444, 2.0
        %v4053 = vmul.f32 %v3487, 2.0
        %v4054 = vmul.f32 %v3530, 2.0
        %v4055 = vmul.f32 %v3573, 2.0
        %v4056 = vmul.f32 %v3616, 2.0
        %v4057 = vmul.f32 %v3659, 2.0
        %v4058 = vmul.f32 %v3702, 2.0
        %v4059 = vmul.f32 %v3745, 2.0
        %v4060 = vmul.f32 %v3788, 2.0
        %v4061 = vmul.f32 %v3831, 2.0
        %v4062 = vmul.f32 %v3874, 2.0
        %v4063 = vmul.f32 %v3917, 2.0
        %v4064 = vmul.f32 %v3960, 2.0
        %v4065 = vmul.f32 %v4003, 2.0
        %v4066 = vmul.f32 %v4046, 2.0
        %v4067 = vsub.f32 %v4051, %v376
        %v4068 = vsub.f32 %v4052, %v377
        %v4069 = vsub.f32 %v4053, %v378
        %v4070 = vsub.f32 %v4054, %v379
        %v4071 = vsub.f32 %v4055, %v380
        %v4072 = vsub.f32 %v4056, %v381
        %v4073 = vsub.f32 %v4057, %v382
        %v4074 = vsub.f32 %v4058, %v383
        %v4075 = vsub.f32 %v4059, %v376
        %v4076 = vsub.f32 %v4060, %v377
        %v4077 = vsub.f32 %v4061, %v378
        %v4078 = vsub.f32 %v4062, %v379
        %v4079 = vsub.f32 %v4063, %v380
        %v4080 = vsub.f32 %v4064, %v381
        %v4081 = vsub.f32 %v4065, %v382
        %v4082 = vsub.f32 %v4066, %v383
        %v4083 = vpack.c.bf16 %v4067, %v4067
        %v4084 = vpack.c.bf16 %v4068, %v4068
        %v4085 = vpack.c.bf16 %v4069, %v4069
        %v4086 = vpack.c.bf16 %v4070, %v4070
        %v4087 = vpack.c.bf16 %v4071, %v4071
        %v4088 = vpack.c.bf16 %v4072, %v4072
        %v4089 = vpack.c.bf16 %v4073, %v4073
        %v4090 = vpack.c.bf16 %v4074, %v4074
        %v4091 = vpack.c.bf16 %v4075, %v4075
        %v4092 = vpack.c.bf16 %v4076, %v4076
        %v4093 = vpack.c.bf16 %v4077, %v4077
        %v4094 = vpack.c.bf16 %v4078, %v4078
        %v4095 = vpack.c.bf16 %v4079, %v4079
        %v4096 = vpack.c.bf16 %v4080, %v4080
        %v4097 = vpack.c.bf16 %v4081, %v4081
        %v4098 = vpack.c.bf16 %v4082, %v4082
        %s4099 = scalar_lea.vmem %s2, 28
        %v4100 = vld [vmem:[%s4099] sm:$0xf]
        %v4109 = vunpack.c.l.b16 %v4083
        %v4110 = vunpack.c.l.b16 %v4084
        %v4111 = vunpack.c.l.b16 %v4085
        %v4112 = vunpack.c.l.b16 %v4086
        %v4113 = vunpack.c.l.b16 %v4087
        %v4114 = vunpack.c.l.b16 %v4088
        %v4115 = vunpack.c.l.b16 %v4089
        %v4116 = vunpack.c.l.b16 %v4090
        %v4117 = vpack.c.b16 %v4110, %v4109
        %v4118 = vpack.c.b16 %v4112, %v4111
        %v4119 = vpack.c.b16 %v4114, %v4113
        %v4120 = vpack.c.b16 %v4116, %v4115
        %v4122 = vsel %vm409, %v4117, 0
        %v4125 = vsel %vm409, %v4118, 0
        %v4128 = vsel %vm409, %v4119, 0
        %v4131 = vsel %vm409, %v4120, 0
        %v4134 = vsel %vm413, %v4100, 0
        %4136 = vmatprep.subr.bf16.mxu0 0
        %4137 = vmatpush1.bf16.msra.mxu0 %v4134
        %4138 = vmatprep.subr.bf16.mxu0 0
        %4139 = vmatpush1.bf16.msra.mxu0 0
        %4140 = vmatprep.subr.bf16.mxu0 0
        %4141 = vmatpush1.bf16.msra.mxu0 0
        %4142 = vmatprep.subr.bf16.mxu0 0
        %4143 = vmatpush1.bf16.msra.mxu0 0
        %4144 = vmatprep.subr.bf16.mxu0 0
        %4145 = vmatpush1.bf16.msra.mxu0 0
        %4146 = vmatprep.subr.bf16.mxu0 0
        %4147 = vmatpush1.bf16.msra.mxu0 0
        %4148 = vmatprep.subr.bf16.mxu0 0
        %4149 = vmatpush1.bf16.msra.mxu0 0
        %4150 = vmatprep.subr.bf16.mxu0 0
        %4151 = vmatpush1.bf16.msra.mxu0 0
        %4152 = vmatprep.subr.bf16.mxu0 0
        %4153 = vmatpush1.bf16.msra.mxu0 0
        %4154 = vmatprep.subr.bf16.mxu0 0
        %4155 = vmatpush1.bf16.msra.mxu0 0
        %4156 = vmatprep.subr.bf16.mxu0 0
        %4157 = vmatpush1.bf16.msra.mxu0 0
        %4158 = vmatprep.subr.bf16.mxu0 0
        %4159 = vmatpush1.bf16.msra.mxu0 0
        %4160 = vmatprep.subr.bf16.mxu0 0
        %4161 = vmatpush1.bf16.msra.mxu0 0
        %4162 = vmatprep.subr.bf16.mxu0 0
        %4163 = vmatpush1.bf16.msra.mxu0 0
        %4164 = vmatprep.subr.bf16.mxu0 0
        %4165 = vmatpush1.bf16.msra.mxu0 0
        %4166 = vmatprep.subr.bf16.mxu0 0
        %4167 = vmatpush1.bf16.msra.mxu0 0
        %4168 = vmatprep.mubr.bf16.mxu0 0
        %4169 = vmatmul.mubr.bf16.gmra.mrb[0].mxu0 %v4122
        %v4170 = vpop.f32.mrb[0].mxu0
        %v4171 = vadd.f32 0.0, %v4170
        %v4172 = vpop.f32.mrb[0].mxu0
        %v4173 = vpop.f32.mrb[0].mxu0
        %v4174 = vadd.f32 0.0, %v4173
        %v4175 = vpop.f32.mrb[0].mxu0
        %4176 = vmatprep.mubr.bf16.mxu0 0
        %4177 = vmatmul.mubr.bf16.gmra.mrb[0].mxu0 %v4125
        %v4178 = vpop.f32.mrb[0].mxu0
        %v4179 = vadd.f32 0.0, %v4178
        %v4180 = vpop.f32.mrb[0].mxu0
        %v4181 = vpop.f32.mrb[0].mxu0
        %v4182 = vadd.f32 0.0, %v4181
        %v4183 = vpop.f32.mrb[0].mxu0
        %4184 = vmatprep.mubr.bf16.mxu0 0
        %4185 = vmatmul.mubr.bf16.gmra.mrb[0].mxu0 %v4128
        %v4186 = vpop.f32.mrb[0].mxu0
        %v4187 = vadd.f32 0.0, %v4186
        %v4188 = vpop.f32.mrb[0].mxu0
        %v4189 = vpop.f32.mrb[0].mxu0
        %v4190 = vadd.f32 0.0, %v4189
        %v4191 = vpop.f32.mrb[0].mxu0
        %4192 = vmatprep.mubr.bf16.mxu0 0
        %4193 = vmatmul.mubr.bf16.gmra.mrb[0].mxu0 %v4131
        %v4194 = vpop.f32.mrb[0].mxu0
        %v4195 = vadd.f32 0.0, %v4194
        %v4196 = vpop.f32.mrb[0].mxu0
        %v4197 = vpop.f32.mrb[0].mxu0
        %v4198 = vadd.f32 0.0, %v4197
        %v4199 = vpop.f32.mrb[0].mxu0
        %4200 = vdwg.mxu0
        %v4201 = vadd.f32 %v3355, %v4171
        %v4202 = vadd.f32 %v3356, %v4174
        %v4203 = vadd.f32 %v3357, %v4179
        %v4204 = vadd.f32 %v3358, %v4182
        %v4205 = vadd.f32 %v3359, %v4187
        %v4206 = vadd.f32 %v3360, %v4190
        %v4207 = vadd.f32 %v3361, %v4195
        %v4208 = vadd.f32 %v3362, %v4198
        %s4209 = scalar_lea.vmem %s2, 32
        %v4210 = vld [vmem:[%s4209] sm:$0xf]
        %v4219 = vunpack.c.l.b16 %v4091
        %v4220 = vunpack.c.l.b16 %v4092
        %v4221 = vunpack.c.l.b16 %v4093
        %v4222 = vunpack.c.l.b16 %v4094
        %v4223 = vunpack.c.l.b16 %v4095
        %v4224 = vunpack.c.l.b16 %v4096
        %v4225 = vunpack.c.l.b16 %v4097
        %v4226 = vunpack.c.l.b16 %v4098
        %v4227 = vpack.c.b16 %v4220, %v4219
        %v4228 = vpack.c.b16 %v4222, %v4221
        %v4229 = vpack.c.b16 %v4224, %v4223
        %v4230 = vpack.c.b16 %v4226, %v4225
        %v4232 = vsel %vm409, %v4227, 0
        %v4235 = vsel %vm409, %v4228, 0
        %v4238 = vsel %vm409, %v4229, 0
        %v4241 = vsel %vm409, %v4230, 0
        %v4244 = vsel %vm413, %v4210, 0
        %4246 = vmatprep.subr.bf16.mxu0 0
        %4247 = vmatpush1.bf16.msra.mxu0 %v4244
        %4248 = vmatprep.subr.bf16.mxu0 0
        %4249 = vmatpush1.bf16.msra.mxu0 0
        %4250 = vmatprep.subr.bf16.mxu0 0
        %4251 = vmatpush1.bf16.msra.mxu0 0
        %4252 = vmatprep.subr.bf16.mxu0 0
        %4253 = vmatpush1.bf16.msra.mxu0 0
        %4254 = vmatprep.subr.bf16.mxu0 0
        %4255 = vmatpush1.bf16.msra.mxu0 0
        %4256 = vmatprep.subr.bf16.mxu0 0
        %4257 = vmatpush1.bf16.msra.mxu0 0
        %4258 = vmatprep.subr.bf16.mxu0 0
        %4259 = vmatpush1.bf16.msra.mxu0 0
        %4260 = vmatprep.subr.bf16.mxu0 0
        %4261 = vmatpush1.bf16.msra.mxu0 0
        %4262 = vmatprep.subr.bf16.mxu0 0
        %4263 = vmatpush1.bf16.msra.mxu0 0
        %4264 = vmatprep.subr.bf16.mxu0 0
        %4265 = vmatpush1.bf16.msra.mxu0 0
        %4266 = vmatprep.subr.bf16.mxu0 0
        %4267 = vmatpush1.bf16.msra.mxu0 0
        %4268 = vmatprep.subr.bf16.mxu0 0
        %4269 = vmatpush1.bf16.msra.mxu0 0
        %4270 = vmatprep.subr.bf16.mxu0 0
        %4271 = vmatpush1.bf16.msra.mxu0 0
        %4272 = vmatprep.subr.bf16.mxu0 0
        %4273 = vmatpush1.bf16.msra.mxu0 0
        %4274 = vmatprep.subr.bf16.mxu0 0
        %4275 = vmatpush1.bf16.msra.mxu0 0
        %4276 = vmatprep.subr.bf16.mxu0 0
        %4277 = vmatpush1.bf16.msra.mxu0 0
        %4278 = vmatprep.mubr.bf16.mxu0 0
        %4279 = vmatmul.mubr.bf16.gmra.mrb[0].mxu0 %v4232
        %v4280 = vpop.f32.mrb[0].mxu0
        %v4281 = vadd.f32 0.0, %v4280
        %v4282 = vpop.f32.mrb[0].mxu0
        %v4283 = vpop.f32.mrb[0].mxu0
        %v4284 = vadd.f32 0.0, %v4283
        %v4285 = vpop.f32.mrb[0].mxu0
        %4286 = vmatprep.mubr.bf16.mxu0 0
        %4287 = vmatmul.mubr.bf16.gmra.mrb[0].mxu0 %v4235
        %v4288 = vpop.f32.mrb[0].mxu0
        %v4289 = vadd.f32 0.0, %v4288
        %v4290 = vpop.f32.mrb[0].mxu0
        %v4291 = vpop.f32.mrb[0].mxu0
        %v4292 = vadd.f32 0.0, %v4291
        %v4293 = vpop.f32.mrb[0].mxu0
        %4294 = vmatprep.mubr.bf16.mxu0 0
        %4295 = vmatmul.mubr.bf16.gmra.mrb[0].mxu0 %v4238
        %v4296 = vpop.f32.mrb[0].mxu0
        %v4297 = vadd.f32 0.0, %v4296
        %v4298 = vpop.f32.mrb[0].mxu0
        %v4299 = vpop.f32.mrb[0].mxu0
        %v4300 = vadd.f32 0.0, %v4299
        %v4301 = vpop.f32.mrb[0].mxu0
        %4302 = vmatprep.mubr.bf16.mxu0 0
        %4303 = vmatmul.mubr.bf16.gmra.mrb[0].mxu0 %v4241
        %v4304 = vpop.f32.mrb[0].mxu0
        %v4305 = vadd.f32 0.0, %v4304
        %v4306 = vpop.f32.mrb[0].mxu0
        %v4307 = vpop.f32.mrb[0].mxu0
        %v4308 = vadd.f32 0.0, %v4307
        %v4309 = vpop.f32.mrb[0].mxu0
        %4310 = vdwg.mxu0
        %v4311 = vadd.f32 %v4201, %v4281
        %v4312 = vadd.f32 %v4202, %v4284
        %v4313 = vadd.f32 %v4203, %v4289
        %v4314 = vadd.f32 %v4204, %v4292
        %v4315 = vadd.f32 %v4205, %v4297
        %v4316 = vadd.f32 %v4206, %v4300
        %v4317 = vadd.f32 %v4207, %v4305
        %v4318 = vadd.f32 %v4208, %v4308
        %v4319 = vld [vmem:[%s3] sm:$0x1]
        %v4321 = vlaneseq
        %v4322 = vshrl.u32 %v4321, 7
        %v4323 = vsub.s32 0, %v4322
        %v4324 = vrot.slane %v4319, %v4323
        %v4326 = vadd.f32 %v4311, %v4324
        %v4327 = vadd.f32 %v4312, %v4324
        %v4328 = vadd.f32 %v4313, %v4324
        %v4329 = vadd.f32 %v4314, %v4324
        %v4330 = vadd.f32 %v4315, %v4324
        %v4331 = vadd.f32 %v4316, %v4324
        %v4332 = vadd.f32 %v4317, %v4324
        %v4333 = vadd.f32 %v4318, %v4324
        %v4334 = vxor.u32 %v4326, 2147483648
        %v4335 = vxor.u32 %v4327, 2147483648
        %v4336 = vxor.u32 %v4328, 2147483648
        %v4337 = vxor.u32 %v4329, 2147483648
        %v4338 = vxor.u32 %v4330, 2147483648
        %v4339 = vxor.u32 %v4331, 2147483648
        %v4340 = vxor.u32 %v4332, 2147483648
        %v4341 = vxor.u32 %v4333, 2147483648
        %v4342 = vmul.f32 %v4334, 1.442695
        %v4343 = vpow.pop %v4342
        %v4344 = vmul.f32 %v4335, 1.442695
        %v4345 = vpow.pop %v4344
        %v4346 = vmul.f32 %v4336, 1.442695
        %v4347 = vpow.pop %v4346
        %v4348 = vmul.f32 %v4337, 1.442695
        %v4349 = vpow.pop %v4348
        %v4350 = vmul.f32 %v4338, 1.442695
        %v4351 = vpow.pop %v4350
        %v4352 = vmul.f32 %v4339, 1.442695
        %v4353 = vpow.pop %v4352
        %v4354 = vmul.f32 %v4340, 1.442695
        %v4355 = vpow.pop %v4354
        %v4356 = vmul.f32 %v4341, 1.442695
        %v4357 = vpow.pop %v4356
        %v4358 = vadd.f32 %v4343, 1.0
        %v4359 = vadd.f32 %v4345, 1.0
        %v4360 = vadd.f32 %v4347, 1.0
        %v4361 = vadd.f32 %v4349, 1.0
        %v4362 = vadd.f32 %v4351, 1.0
        %v4363 = vadd.f32 %v4353, 1.0
        %v4364 = vadd.f32 %v4355, 1.0
        %v4365 = vadd.f32 %v4357, 1.0
        %v4366 = vrcp.pop %v4358
        %v4367 = vmul.f32 1.0, %v4366
        %v4368 = vrcp.pop %v4359
        %v4369 = vmul.f32 1.0, %v4368
        %v4370 = vrcp.pop %v4360
        %v4371 = vmul.f32 1.0, %v4370
        %v4372 = vrcp.pop %v4361
        %v4373 = vmul.f32 1.0, %v4372
        %v4374 = vrcp.pop %v4362
        %v4375 = vmul.f32 1.0, %v4374
        %v4376 = vrcp.pop %v4363
        %v4377 = vmul.f32 1.0, %v4376
        %v4378 = vrcp.pop %v4364
        %v4379 = vmul.f32 1.0, %v4378
        %v4380 = vrcp.pop %v4365
        %v4381 = vmul.f32 1.0, %v4380
        %v4382 = vtanh.pop %v4326
        %v4383 = vtanh.pop %v4327
        %v4384 = vtanh.pop %v4328
        %v4385 = vtanh.pop %v4329
        %v4386 = vtanh.pop %v4330
        %v4387 = vtanh.pop %v4331
        %v4388 = vtanh.pop %v4332
        %v4389 = vtanh.pop %v4333
        %v4390 = vsub.f32 1.0, %v4367
        %v4391 = vsub.f32 1.0, %v4369
        %v4392 = vsub.f32 1.0, %v4371
        %v4393 = vsub.f32 1.0, %v4373
        %v4394 = vsub.f32 1.0, %v4375
        %v4395 = vsub.f32 1.0, %v4377
        %v4396 = vsub.f32 1.0, %v4379
        %v4397 = vsub.f32 1.0, %v4381
        %4406 = vrot.lane.b32.xlu0 %v4382, 96
        %v4407 = vpop.permute.xlu0 %4406
        %4408 = vrot.lane.b32.xlu0 %v4383, 96
        %v4409 = vpop.permute.xlu0 %4408
        %4410 = vrot.lane.b32.xlu0 %v4384, 96
        %v4411 = vpop.permute.xlu0 %4410
        %4412 = vrot.lane.b32.xlu0 %v4385, 96
        %v4413 = vpop.permute.xlu0 %4412
        %4414 = vrot.lane.b32.xlu0 %v4386, 96
        %v4415 = vpop.permute.xlu0 %4414
        %4416 = vrot.lane.b32.xlu0 %v4387, 96
        %v4417 = vpop.permute.xlu0 %4416
        %4418 = vrot.lane.b32.xlu0 %v4388, 96
        %v4419 = vpop.permute.xlu0 %4418
        %4420 = vrot.lane.b32.xlu0 %v4389, 96
        %v4421 = vpop.permute.xlu0 %4420
        %v4430 = vmul.f32 %v4390, %v4407
        %v4431 = vmul.f32 %v4391, %v4409
        %v4432 = vmul.f32 %v4392, %v4411
        %v4433 = vmul.f32 %v4393, %v4413
        %v4434 = vmul.f32 %v4394, %v4415
        %v4435 = vmul.f32 %v4395, %v4417
        %v4436 = vmul.f32 %v4396, %v4419
        %v4437 = vmul.f32 %v4397, %v4421
        %v4438 = vmax.f32 %v4430, 0.0
        %v4439 = vmax.f32 %v4431, 0.0
        %v4440 = vmax.f32 %v4432, 0.0
        %v4441 = vmax.f32 %v4433, 0.0
        %v4442 = vmax.f32 %v4434, 0.0
        %v4443 = vmax.f32 %v4435, 0.0
        %v4444 = vmax.f32 %v4436, 0.0
        %v4445 = vmax.f32 %v4437, 0.0
        %vm4446 = vcmask 261120
        %v4447 = vsel %vm4446, %v4438, 0.0
        %v4448 = vrot.slane %v4447, 4
        %v4449 = vadd.f32 %v4447, %v4448
        %v4450 = vrot.slane %v4449, 2
        %v4451 = vadd.f32 %v4449, %v4450
        %v4452 = vrot.slane %v4451, 1
        %v4453 = vadd.f32 %v4451, %v4452
        %v4454 = vsel %vm4446, %v4439, 0.0
        %v4455 = vrot.slane %v4454, 4
        %v4456 = vadd.f32 %v4454, %v4455
        %v4457 = vrot.slane %v4456, 2
        %v4458 = vadd.f32 %v4456, %v4457
        %v4459 = vrot.slane %v4458, 1
        %v4460 = vadd.f32 %v4458, %v4459
        %v4461 = vsel %vm4446, %v4440, 0.0
        %v4462 = vrot.slane %v4461, 4
        %v4463 = vadd.f32 %v4461, %v4462
        %v4464 = vrot.slane %v4463, 2
        %v4465 = vadd.f32 %v4463, %v4464
        %v4466 = vrot.slane %v4465, 1
        %v4467 = vadd.f32 %v4465, %v4466
        %v4468 = vsel %vm4446, %v4441, 0.0
        %v4469 = vrot.slane %v4468, 4
        %v4470 = vadd.f32 %v4468, %v4469
        %v4471 = vrot.slane %v4470, 2
        %v4472 = vadd.f32 %v4470, %v4471
        %v4473 = vrot.slane %v4472, 1
        %v4474 = vadd.f32 %v4472, %v4473
        %v4475 = vsel %vm4446, %v4442, 0.0
        %v4476 = vrot.slane %v4475, 4
        %v4477 = vadd.f32 %v4475, %v4476
        %v4478 = vrot.slane %v4477, 2
        %v4479 = vadd.f32 %v4477, %v4478
        %v4480 = vrot.slane %v4479, 1
        %v4481 = vadd.f32 %v4479, %v4480
        %v4482 = vsel %vm4446, %v4443, 0.0
        %v4483 = vrot.slane %v4482, 4
        %v4484 = vadd.f32 %v4482, %v4483
        %v4485 = vrot.slane %v4484, 2
        %v4486 = vadd.f32 %v4484, %v4485
        %v4487 = vrot.slane %v4486, 1
        %v4488 = vadd.f32 %v4486, %v4487
        %v4489 = vsel %vm4446, %v4444, 0.0
        %v4490 = vrot.slane %v4489, 4
        %v4491 = vadd.f32 %v4489, %v4490
        %v4492 = vrot.slane %v4491, 2
        %v4493 = vadd.f32 %v4491, %v4492
        %v4494 = vrot.slane %v4493, 1
        %v4495 = vadd.f32 %v4493, %v4494
        %v4496 = vsel %vm4446, %v4445, 0.0
        %v4497 = vrot.slane %v4496, 4
        %v4498 = vadd.f32 %v4496, %v4497
        %v4499 = vrot.slane %v4498, 2
        %v4500 = vadd.f32 %v4498, %v4499
        %v4501 = vrot.slane %v4500, 1
        %v4502 = vadd.f32 %v4500, %v4501
        %v4503 = vrcp.pop 8.0
        %v4504 = vmul.f32 %v4453, %v4503
        %v4505 = vmul.f32 %v4460, %v4503
        %v4506 = vmul.f32 %v4467, %v4503
        %v4507 = vmul.f32 %v4474, %v4503
        %v4508 = vmul.f32 %v4481, %v4503
        %v4509 = vmul.f32 %v4488, %v4503
        %v4510 = vmul.f32 %v4495, %v4503
        %v4511 = vmul.f32 %v4502, %v4503
        %v4512 = vpack.c.bf16 %v4504, %v4504
        %v4513 = vpack.c.bf16 %v4505, %v4505
        %v4514 = vpack.c.bf16 %v4506, %v4506
        %v4515 = vpack.c.bf16 %v4507, %v4507
        %v4516 = vpack.c.bf16 %v4508, %v4508
        %v4517 = vpack.c.bf16 %v4509, %v4509
        %v4518 = vpack.c.bf16 %v4510, %v4510
        %v4519 = vpack.c.bf16 %v4511, %v4511
        %v4520 = vld [vmem:[%s4] sm:$0xf]
        %v4521 = vld [vmem:[%s4 + $0x4] sm:$0xf]
        %v4522 = vld [vmem:[%s4 + $0x8] sm:$0xf]
        %v4523 = vld [vmem:[%s4 + $0xc] sm:$0xf]
        %v4524 = vld [vmem:[%s5] sm:$0x1]
        %v4526 = vlaneseq
        %v4527 = vshrl.u32 %v4526, 7
        %v4528 = vsub.s32 0, %v4527
        %v4529 = vrot.slane %v4524, %v4528
        %v4539 = vunpack.c.l.b16 %v4512
        %v4540 = vunpack.c.l.b16 %v4513
        %v4541 = vunpack.c.l.b16 %v4514
        %v4542 = vunpack.c.l.b16 %v4515
        %v4543 = vunpack.c.l.b16 %v4516
        %v4544 = vunpack.c.l.b16 %v4517
        %v4545 = vunpack.c.l.b16 %v4518
        %v4546 = vunpack.c.l.b16 %v4519
        %vm4547 = vcmask 1041409
        %v4548 = vsel %vm4547, %v4540, %v4539
        %vm4549 = vcmask 1042434
        %v4550 = vsel %vm4549, %v4541, %v4548
        %vm4551 = vcmask 1043459
        %v4552 = vsel %vm4551, %v4542, %v4550
        %vm4553 = vcmask 1044484
        %v4554 = vsel %vm4553, %v4543, %v4552
        %vm4555 = vcmask 1045509
        %v4556 = vsel %vm4555, %v4544, %v4554
        %vm4557 = vcmask 1046534
        %v4558 = vsel %vm4557, %v4545, %v4556
        %vm4559 = vcmask 1047559
        %v4560 = vsel %vm4559, %v4546, %v4558
        %v4561 = vpack.c.b16 %v4560, %v4560
        %v4566 = vunpack.c.l.b16 %v4520
        %v4567 = vunpack.c.l.b16 %v4521
        %v4568 = vunpack.c.l.b16 %v4522
        %v4569 = vunpack.c.l.b16 %v4523
        %v4570 = vpack.c.b16 %v4567, %v4566
        %v4571 = vpack.c.b16 %v4569, %v4568
        %v4575 = vsel %vm4446, %v4561, 0
        %4577 = vmatprep.subr.bf16.mxu0 0
        %4578 = vmatpush1.bf16.msra.mxu0 %v4570
        %4579 = vmatprep.subr.bf16.mxu0 0
        %4580 = vmatpush1.bf16.msra.mxu0 %v4571
        %4581 = vmatprep.subr.bf16.mxu0 0
        %4582 = vmatpush1.bf16.msra.mxu0 0
        %4583 = vmatprep.subr.bf16.mxu0 0
        %4584 = vmatpush1.bf16.msra.mxu0 0
        %4585 = vmatprep.subr.bf16.mxu0 0
        %4586 = vmatpush1.bf16.msra.mxu0 0
        %4587 = vmatprep.subr.bf16.mxu0 0
        %4588 = vmatpush1.bf16.msra.mxu0 0
        %4589 = vmatprep.subr.bf16.mxu0 0
        %4590 = vmatpush1.bf16.msra.mxu0 0
        %4591 = vmatprep.subr.bf16.mxu0 0
        %4592 = vmatpush1.bf16.msra.mxu0 0
        %4593 = vmatprep.subr.bf16.mxu0 0
        %4594 = vmatpush1.bf16.msra.mxu0 0
        %4595 = vmatprep.subr.bf16.mxu0 0
        %4596 = vmatpush1.bf16.msra.mxu0 0
        %4597 = vmatprep.subr.bf16.mxu0 0
        %4598 = vmatpush1.bf16.msra.mxu0 0
        %4599 = vmatprep.subr.bf16.mxu0 0
        %4600 = vmatpush1.bf16.msra.mxu0 0
        %4601 = vmatprep.subr.bf16.mxu0 0
        %4602 = vmatpush1.bf16.msra.mxu0 0
        %4603 = vmatprep.subr.bf16.mxu0 0
        %4604 = vmatpush1.bf16.msra.mxu0 0
        %4605 = vmatprep.subr.bf16.mxu0 0
        %4606 = vmatpush1.bf16.msra.mxu0 0
        %4607 = vmatprep.subr.bf16.mxu0 0
        %4608 = vmatpush1.bf16.msra.mxu0 0
        %4609 = vmatprep.mubr.bf16.mxu0 0
        %4610 = vmatmul.mubr.bf16.gmra.mrb[0].mxu0 %v4575
        %v4611 = vpop.f32.mrb[0].mxu0
        %v4612 = vadd.f32 %v4529, %v4611
        %v4613 = vpop.f32.mrb[0].mxu0
        %v4614 = vpop.f32.mrb[0].mxu0
        %v4615 = vpop.f32.mrb[0].mxu0
        %4616 = vdwg.mxu0
        %4617 = vst [vmem:[%s367] sm:$0xff] %v4612
        %s4618 = sand.u32 %s164, 1
        %s4619 = scalar_lea.sflag [#allocation4], %s4618
        %s4620 = sand.u32 %s164, 1
        %s4621 = smul.addr %s4620, 8
        %s4622 = scalar_lea.vmem [#allocation3], %s4621
        // Predicated region
        $region86: #{tpu_custom_call.1} parent=80 // pred_check
          %p4623 = pneg %p174
        $region87: #{tpu_custom_call.1} parent=80 // pred_check_branch
          %4625 = sbr.rel (%p4623) target = $region89
        $region88: #{tpu_custom_call.1} parent=80 // pred_region
          %s4627 = ssub.s32 128, 128
          %4628 = vsyncadd %s4619, %s4627
          %s4629 = smul.addr %s20, 128
          %s4630 = scalar_lea.hbm %s6, %s4629
          %s4632 = sshll.u32 %s4622, 4
          %s4633 = int_to_ptr.vmem [resolvable:$true] %s4632
          %4635 = dma.vmem_to_hbm [thread:$0]  %s4633, 128, %s4630, %s4619
        $region89: #{tpu_custom_call.1} parent=80 // pred_fallthru
          _
      $region81: #{tpu_custom_call.1} parent=5 // pred_fallthru
        _
      %p4636 = scmp.le.s32.totalorder 2, %s15
      // Predicated region
      $region90: #{tpu_custom_call.1} parent=5 // pred_check
        %p4637 = pneg %p4636
      $region91: #{tpu_custom_call.1} parent=5 // pred_check_branch
        %4639 = sbr.rel (%p4637) target = $region93
      $region92: #{tpu_custom_call.1} parent=5 // pred_region
        %s4640 = ssub.s32 %s15, 2
        // Predicated region
        $region94: #{tpu_custom_call.1} parent=92 // pred_check
          %p4641 = pneg %p180
        $region95: #{tpu_custom_call.1} parent=92 // pred_check_branch
          %4643 = sbr.rel (%p4641) target = $region97
        $region96: #{tpu_custom_call.1} parent=92 // pred_region
          %s4644 = sand.u32 %s165, 1
          %s4645 = scalar_lea.sflag [#allocation4], %s4644
          %s4646 = sand.u32 %s165, 1
          %s4647 = smul.addr %s4646, 8
          %s4648 = scalar_lea.vmem [#allocation3], %s4647
          %4649 = dma.done %s4645, 128
        $region97: #{tpu_custom_call.1} parent=92 // pred_fallthru
          _
      $region93: #{tpu_custom_call.1} parent=5 // pred_fallthru
        _
    $region6: #{tpu_custom_call.1} parent=1 // loop_footer
      %s19 = sadd.s32 1, %s15
    $region7: #{tpu_custom_call.1} parent=1 // loop_footer_branch
      %14 = sbr.rel target = $region3
    $region8: #{tpu_custom_call.1} parent=1 // loop_exit
      _
    %4650 = vsyncpa [#allocation4], 1
    %s4651 = scalar_lea.sflag [#allocation4], 1
    %4652 = vsyncpa %s4651, 1

</llo_original>
